<compile_context>
chip_gen: v5e
topology: v5e:2x2
jax: 0.10.0
libtpu: 0.0.40
codegen_flags: <defaults>
</compile_context>

<pallas_src>
import jax
import jax.numpy as jnp
from jax.experimental import pallas as pl
from jax.experimental.pallas import tpu as pltpu

IN1 = 1024          # features of x1
IN2 = 1024          # features of x2  (IN1 + IN2 == 2048, Linear in_features)
HIDDEN = 1024
NUM_CLASSES = 4
C_PAD = 128         # logits padded to a full lane group inside the kernel


def _round_up(x, m):
    return ((x + m - 1) // m) * m


def _make_kernel(k_half, k_total):
    def kernel(x1_ref, x2_ref, w1_ref, b1_ref, w2_ref, b2_ref, out_ref, acc_ref):
        k = pl.program_id(1)

        @pl.when(k == 0)
        def _():
            acc_ref[...] = jnp.zeros_like(acc_ref)

        # First linear on the concatenated input: K steps [0, k_half) consume
        # x1 against W1 rows [0, IN1), steps [k_half, k_total) consume x2
        # against W1 rows [IN1, IN1+IN2).  (== cat([x1, x2], dim=1) @ W1)
        @pl.when(k < k_half)
        def _():
            acc_ref[...] += jnp.dot(x1_ref[...], w1_ref[...],
                                    preferred_element_type=jnp.float32)

        @pl.when(k >= k_half)
        def _():
            acc_ref[...] += jnp.dot(x2_ref[...], w1_ref[...],
                                    preferred_element_type=jnp.float32)

        @pl.when(k == k_total - 1)
        def _():
            h = jnp.maximum(acc_ref[...] + b1_ref[...], 0.0)   # bias + ReLU (f32)
            # TODO(synk): Dropout(0.2) is identity at inference; training-mode
            # dropout would use pltpu.prng_seed / pltpu.prng_random_bits.
            h = h.astype(w2_ref.dtype)                          # bf16 for the MXU
            logits = jnp.dot(h, w2_ref[...], preferred_element_type=jnp.float32)
            out_ref[...] = (logits + b2_ref[...]).astype(out_ref.dtype)

    return kernel


def output_layer_forward(x1, x2, w1, b1, w2, b2, *, bm=None, tk=512):
    """x1: (B, IN1), x2: (B, IN2); w1: (IN1+IN2, HIDDEN); w2: (HIDDEN, C)."""
    B = x1.shape[0]
    num_classes = w2.shape[1]
    assert x1.shape == (B, IN1) and x2.shape == (B, IN2)
    assert w1.shape == (IN1 + IN2, HIDDEN) and w2.shape[0] == HIDDEN
    assert IN1 % tk == 0 and IN2 % tk == 0
    assert num_classes <= C_PAD

    # bf16 transfer of the big operands, f32 biases / accumulation.
    x1 = x1.astype(jnp.bfloat16)
    x2 = x2.astype(jnp.bfloat16)
    w1 = w1.astype(jnp.bfloat16)
    b1_2d = b1.reshape(1, HIDDEN).astype(jnp.float32)

    # Pad the tiny second layer to 128 output lanes (lane-dense stores).
    w2p = jnp.zeros((HIDDEN, C_PAD), jnp.bfloat16).at[:, :num_classes].set(
        w2.astype(jnp.bfloat16))
    b2p = jnp.zeros((1, C_PAD), jnp.float32).at[0, :num_classes].set(
        b2.astype(jnp.float32))

    # Batch tiling ("parallel" axis; also feeds v7x's second TensorCore).
    if bm is None:
        bm = 128 if B > 128 else _round_up(max(B, 1), 16)
    Bp = _round_up(B, bm)
    if Bp != B:
        pad = Bp - B
        x1 = jnp.pad(x1, ((0, pad), (0, 0)))
        x2 = jnp.pad(x2, ((0, pad), (0, 0)))

    k_half = IN1 // tk
    k_total = (IN1 + IN2) // tk
    nb = Bp // bm

    out = pl.pallas_call(
        _make_kernel(k_half, k_total),
        out_shape=jax.ShapeDtypeStruct((Bp, C_PAD), jnp.float32),
        grid_spec=pltpu.PrefetchScalarGridSpec(
            num_scalar_prefetch=0,
            grid=(nb, k_total),
            in_specs=[
                # x1 chunk: used for k < k_half; afterwards the block index is
                # clamped (unchanged) so Pallas skips the redundant DMA.
                pl.BlockSpec((bm, tk),
                             lambda i, k: (i, jnp.minimum(k, k_half - 1))),
                # x2 chunk: clamped to chunk 0 until k >= k_half.
                pl.BlockSpec((bm, tk),
                             lambda i, k: (i, jnp.maximum(k - k_half, 0))),
                # Full W1, tiled over K by the grid (double-buffered by Pallas).
                pl.BlockSpec((tk, HIDDEN), lambda i, k: (k, 0)),
                # Small operands: resident (constant index_map) across K.
                pl.BlockSpec((1, HIDDEN), lambda i, k: (0, 0)),
                pl.BlockSpec((HIDDEN, C_PAD), lambda i, k: (0, 0)),
                pl.BlockSpec((1, C_PAD), lambda i, k: (0, 0)),
            ],
            out_specs=pl.BlockSpec((bm, C_PAD), lambda i, k: (i, 0)),
            scratch_shapes=[pltpu.VMEM((bm, HIDDEN), jnp.float32)],
        ),
        compiler_params=pltpu.CompilerParams(
            dimension_semantics=("parallel", "arbitrary"),
            vmem_limit_bytes=32 << 20,
        ),
    )(x1, x2, w1, b1_2d, w2p, b2p)

    return out[:B, :num_classes]


if __name__ == "__main__":
    key = jax.random.PRNGKey(0)
    k_x1, k_x2, k_w1, k_b1, k_w2, k_b2 = jax.random.split(key, 6)

    B = 8  # small batch
    x1 = jax.random.normal(k_x1, (B, IN1), dtype=jnp.float32)
    x2 = jax.random.normal(k_x2, (B, IN2), dtype=jnp.float32)

    # Deterministic parameter init (uniform, PyTorch-Linear-like scale).
    lim1 = 1.0 / jnp.sqrt(jnp.float32(IN1 + IN2))
    lim2 = 1.0 / jnp.sqrt(jnp.float32(HIDDEN))
    w1 = jax.random.uniform(k_w1, (IN1 + IN2, HIDDEN), jnp.float32, -lim1, lim1)
    b1 = jax.random.uniform(k_b1, (HIDDEN,), jnp.float32, -lim1, lim1)
    w2 = jax.random.uniform(k_w2, (HIDDEN, NUM_CLASSES), jnp.float32, -lim2, lim2)
    b2 = jax.random.uniform(k_b2, (NUM_CLASSES,), jnp.float32, -lim2, lim2)

    out = output_layer_forward(x1, x2, w1, b1, w2, b2)
    out = jax.block_until_ready(out)
    assert out.shape == (B, NUM_CLASSES)

    # Reference with the same bf16-transfer / f32-accumulate recipe.
    x_cat = jnp.concatenate([x1, x2], axis=1).astype(jnp.bfloat16)
    h_ref = jnp.maximum(
        jnp.dot(x_cat, w1.astype(jnp.bfloat16),
                preferred_element_type=jnp.float32) + b1, 0.0)
    ref = jnp.dot(h_ref.astype(jnp.bfloat16), w2.astype(jnp.bfloat16),
                  preferred_element_type=jnp.float32) + b2
    assert jnp.allclose(out, ref, atol=2e-2, rtol=2e-2)

    # Loose sanity check against the pure-f32 math (bf16 quantization error only).
    ref_f32 = jnp.maximum(jnp.concatenate([x1, x2], axis=1) @ w1 + b1, 0.0) @ w2 + b2
    assert jnp.max(jnp.abs(out - ref_f32)) < 0.1

    print("KERNEL_OK")
</pallas_src>

<mosaic_0001>
module attributes {stable_mosaic.version = 11 : i64} {
  func.func @kernel(%arg0: i32, %arg1: i32, %arg2: memref<16x512xbf16, #tpu.memory_space<vmem>>, %arg3: memref<16x512xbf16, #tpu.memory_space<vmem>>, %arg4: memref<512x1024xbf16, #tpu.memory_space<vmem>>, %arg5: memref<1x1024xf32, #tpu.memory_space<vmem>>, %arg6: memref<1024x128xbf16, #tpu.memory_space<vmem>>, %arg7: memref<1x128xf32, #tpu.memory_space<vmem>>, %arg8: memref<16x128xf32, #tpu.memory_space<vmem>>, %arg9: memref<16x1024xf32, #tpu.memory_space<vmem>>) attributes {dimension_semantics = [#tpu.dimension_semantics<parallel>, #tpu.dimension_semantics<arbitrary>], iteration_bounds = array<i64: 1, 4>, scalar_prefetch = 0 : i64, scratch_operands = 1 : i64, tpu.core_type = #tpu.core_type<tc>, window_params = [{transform_indices = @transform_0, window_bounds = array<i64: 16, 512>}, {transform_indices = @transform_1, window_bounds = array<i64: 16, 512>}, {transform_indices = @transform_2, window_bounds = array<i64: 512, 1024>}, {pipeline_mode = #tpu.pipeline_mode<synchronous>, transform_indices = @transform_3, window_bounds = array<i64: 1, 1024>}, {pipeline_mode = #tpu.pipeline_mode<synchronous>, transform_indices = @transform_4, window_bounds = array<i64: 1024, 128>}, {pipeline_mode = #tpu.pipeline_mode<synchronous>, transform_indices = @transform_5, window_bounds = array<i64: 1, 128>}, {transform_indices = @transform_6, window_bounds = array<i64: 16, 128>}]} {
    %c0_i32 = arith.constant 0 : i32
    %0 = arith.cmpi eq, %arg1, %c0_i32 : i32
    %1 = arith.extui %0 : i1 to i32
    %c0_i32_0 = arith.constant 0 : i32
    %2 = arith.cmpi ne, %1, %c0_i32_0 : i32
    scf.if %2 {
      %cst = arith.constant 0.000000e+00 : f32
      %12 = vector.broadcast %cst : f32 to vector<16x1024xf32>
      %c0 = arith.constant 0 : index
      %c0_5 = arith.constant 0 : index
      %13 = vector.load %arg9[%c0, %c0_5] : memref<16x1024xf32, #tpu.memory_space<vmem>>, vector<16x1024xf32>
      tpu.vector_store %arg9[%c0, %c0_5], %12 {strides = array<i32>} : memref<16x1024xf32, #tpu.memory_space<vmem>>, vector<16x1024xf32>,
    } else {
    }
    %c2_i32 = arith.constant 2 : i32
    %3 = arith.cmpi slt, %arg1, %c2_i32 : i32
    %4 = arith.extui %3 : i1 to i32
    %c0_i32_1 = arith.constant 0 : i32
    %5 = arith.cmpi ne, %4, %c0_i32_1 : i32
    scf.if %5 {
      %c0 = arith.constant 0 : index
      %c0_5 = arith.constant 0 : index
      %12 = vector.load %arg9[%c0, %c0_5] : memref<16x1024xf32, #tpu.memory_space<vmem>>, vector<16x1024xf32>
      %c0_6 = arith.constant 0 : index
      %c0_7 = arith.constant 0 : index
      %13 = vector.load %arg2[%c0_6, %c0_7] : memref<16x512xbf16, #tpu.memory_space<vmem>>, vector<16x512xbf16>
      %c0_8 = arith.constant 0 : index
      %c0_9 = arith.constant 0 : index
      %14 = vector.load %arg4[%c0_8, %c0_9] : memref<512x1024xbf16, #tpu.memory_space<vmem>>, vector<512x1024xbf16>
      %cst = arith.constant dense<0.000000e+00> : vector<16x1024xf32>
      %15 = tpu.matmul %13, %14, %cst {dimension_numbers = #tpu.dot_dimension_numbers<[1], [0], [0], [1], [0, 0, 1, 1], [], []>} : vector<16x512xbf16>, vector<512x1024xbf16>, vector<16x1024xf32> -> vector<16x1024xf32>
      %16 = arith.addf %12, %15 : vector<16x1024xf32>
      %c0_10 = arith.constant 0 : index
      %c0_11 = arith.constant 0 : index
      %17 = vector.load %arg9[%c0_10, %c0_11] : memref<16x1024xf32, #tpu.memory_space<vmem>>, vector<16x1024xf32>
      tpu.vector_store %arg9[%c0_10, %c0_11], %16 {strides = array<i32>} : memref<16x1024xf32, #tpu.memory_space<vmem>>, vector<16x1024xf32>,
    } else {
    }
    %c2_i32_2 = arith.constant 2 : i32
    %6 = arith.cmpi sge, %arg1, %c2_i32_2 : i32
    %7 = arith.extui %6 : i1 to i32
    %c0_i32_3 = arith.constant 0 : i32
    %8 = arith.cmpi ne, %7, %c0_i32_3 : i32
    scf.if %8 {
      %c0 = arith.constant 0 : index
      %c0_5 = arith.constant 0 : index
      %12 = vector.load %arg9[%c0, %c0_5] : memref<16x1024xf32, #tpu.memory_space<vmem>>, vector<16x1024xf32>
      %c0_6 = arith.constant 0 : index
      %c0_7 = arith.constant 0 : index
      %13 = vector.load %arg3[%c0_6, %c0_7] : memref<16x512xbf16, #tpu.memory_space<vmem>>, vector<16x512xbf16>
      %c0_8 = arith.constant 0 : index
      %c0_9 = arith.constant 0 : index
      %14 = vector.load %arg4[%c0_8, %c0_9] : memref<512x1024xbf16, #tpu.memory_space<vmem>>, vector<512x1024xbf16>
      %cst = arith.constant dense<0.000000e+00> : vector<16x1024xf32>
      %15 = tpu.matmul %13, %14, %cst {dimension_numbers = #tpu.dot_dimension_numbers<[1], [0], [0], [1], [0, 0, 1, 1], [], []>} : vector<16x512xbf16>, vector<512x1024xbf16>, vector<16x1024xf32> -> vector<16x1024xf32>
      %16 = arith.addf %12, %15 : vector<16x1024xf32>
      %c0_10 = arith.constant 0 : index
      %c0_11 = arith.constant 0 : index
      %17 = vector.load %arg9[%c0_10, %c0_11] : memref<16x1024xf32, #tpu.memory_space<vmem>>, vector<16x1024xf32>
      tpu.vector_store %arg9[%c0_10, %c0_11], %16 {strides = array<i32>} : memref<16x1024xf32, #tpu.memory_space<vmem>>, vector<16x1024xf32>,
    } else {
    }
    %c3_i32 = arith.constant 3 : i32
    %9 = arith.cmpi eq, %arg1, %c3_i32 : i32
    %10 = arith.extui %9 : i1 to i32
    %c0_i32_4 = arith.constant 0 : i32
    %11 = arith.cmpi ne, %10, %c0_i32_4 : i32
    scf.if %11 {
      %c0 = arith.constant 0 : index
      %c0_5 = arith.constant 0 : index
      %12 = vector.load %arg9[%c0, %c0_5] : memref<16x1024xf32, #tpu.memory_space<vmem>>, vector<16x1024xf32>
      %c0_6 = arith.constant 0 : index
      %c0_7 = arith.constant 0 : index
      %13 = vector.load %arg5[%c0_6, %c0_7] : memref<1x1024xf32, #tpu.memory_space<vmem>>, vector<1x1024xf32>
      %14 = vector.broadcast %13 : vector<1x1024xf32> to vector<16x1024xf32>
      %15 = arith.addf %12, %14 : vector<16x1024xf32>
      %cst = arith.constant 0.000000e+00 : f32
      %16 = vector.broadcast %cst : f32 to vector<16x1024xf32>
      %17 = arith.maximumf %15, %16 : vector<16x1024xf32>
      %18 = arith.truncf %17 : vector<16x1024xf32> to vector<16x1024xbf16>
      %c0_8 = arith.constant 0 : index
      %c0_9 = arith.constant 0 : index
      %19 = vector.load %arg6[%c0_8, %c0_9] : memref<1024x128xbf16, #tpu.memory_space<vmem>>, vector<1024x128xbf16>
      %cst_10 = arith.constant dense<0.000000e+00> : vector<16x128xf32>
      %20 = tpu.matmul %18, %19, %cst_10 {dimension_numbers = #tpu.dot_dimension_numbers<[1], [0], [0], [1], [0, 0, 1, 1], [], []>} : vector<16x1024xbf16>, vector<1024x128xbf16>, vector<16x128xf32> -> vector<16x128xf32>
      %c0_11 = arith.constant 0 : index
      %c0_12 = arith.constant 0 : index
      %21 = vector.load %arg7[%c0_11, %c0_12] : memref<1x128xf32, #tpu.memory_space<vmem>>, vector<1x128xf32>
      %22 = vector.broadcast %21 : vector<1x128xf32> to vector<16x128xf32>
      %23 = arith.addf %20, %22 : vector<16x128xf32>
      %c0_13 = arith.constant 0 : index
      %c0_14 = arith.constant 0 : index
      %24 = vector.load %arg8[%c0_13, %c0_14] : memref<16x128xf32, #tpu.memory_space<vmem>>, vector<16x128xf32>
      tpu.vector_store %arg8[%c0_13, %c0_14], %23 {strides = array<i32>} : memref<16x128xf32, #tpu.memory_space<vmem>>, vector<16x128xf32>,
    } else {
    }
    return
  }
  func.func @transform_0(%arg0: i32, %arg1: i32) -> (i32, i32) {
    %c1_i32 = arith.constant 1 : i32
    %0 = arith.minsi %arg1, %c1_i32 : i32
    %c0_i32 = arith.constant 0 : i32
    return %arg0, %0 : i32, i32
  }
  func.func @transform_1(%arg0: i32, %arg1: i32) -> (i32, i32) {
    %c2_i32 = arith.constant 2 : i32
    %0 = arith.subi %arg1, %c2_i32 : i32
    %c0_i32 = arith.constant 0 : i32
    %1 = arith.maxsi %0, %c0_i32 : i32
    %c0_i32_0 = arith.constant 0 : i32
    return %arg0, %1 : i32, i32
  }
  func.func @transform_2(%arg0: i32, %arg1: i32) -> (i32, i32) {
    %c0_i32 = arith.constant 0 : i32
    %c0_i32_0 = arith.constant 0 : i32
    return %arg1, %c0_i32 : i32, i32
  }
  func.func @transform_3(%arg0: i32, %arg1: i32) -> (i32, i32) {
    %c0_i32 = arith.constant 0 : i32
    %c0_i32_0 = arith.constant 0 : i32
    %c0_i32_1 = arith.constant 0 : i32
    return %c0_i32, %c0_i32_0 : i32, i32
  }
  func.func @transform_4(%arg0: i32, %arg1: i32) -> (i32, i32) {
    %c0_i32 = arith.constant 0 : i32
    %c0_i32_0 = arith.constant 0 : i32
    %c0_i32_1 = arith.constant 0 : i32
    return %c0_i32, %c0_i32_0 : i32, i32
  }
  func.func @transform_5(%arg0: i32, %arg1: i32) -> (i32, i32) {
    %c0_i32 = arith.constant 0 : i32
    %c0_i32_0 = arith.constant 0 : i32
    %c0_i32_1 = arith.constant 0 : i32
    return %c0_i32, %c0_i32_0 : i32, i32
  }
  func.func @transform_6(%arg0: i32, %arg1: i32) -> (i32, i32) {
    %c0_i32 = arith.constant 0 : i32
    %c0_i32_0 = arith.constant 0 : i32
    return %arg0, %c0_i32 : i32, i32
  }
}

</mosaic_0001>

<llo_original>
// kernel: tpu_custom_call.1
$region0: #{tpu_custom_call.1}
  #allocation0 [shape = 'u32[]', space=smem, size = 0x4, offset = 0x4, fixed_abs, tag = 'smem constant byte address 0x4 - core index']
  #allocation1 [shape = 'u32[72,128]{1,0:T(1,128)}', space=vmem, size = 0x9000, scoped, tag = 'internal scratch']
  #allocation2 [shape = 'f32[16,1024]{1,0:T(8,128)}', space=vmem, size = 0x10000, scoped, tag = 'scratch operand']
  %s0 = inlined_call_operand.hbm [shape: bf16[16,1024], index: 0, kind: input, shape index: {}]
  %s1 = inlined_call_operand.hbm [shape: bf16[16,1024], index: 1, kind: input, shape index: {}]
  %s2 = inlined_call_operand.hbm [shape: bf16[2048,1024], index: 2, kind: input, shape index: {}]
  %s3 = inlined_call_operand.hbm [shape: f32[1,1024], index: 3, kind: input, shape index: {}]
  %s4 = inlined_call_operand.hbm [shape: bf16[1024,128], index: 4, kind: input, shape index: {}]
  %s5 = inlined_call_operand.hbm [shape: f32[1,128], index: 5, kind: input, shape index: {}]
  %s6 = inlined_call_operand.hbm [shape: f32[16,128], index: 6, kind: output, shape index: {}]
  %s7 = sld [smem:[#allocation0]]
  $region97: #{tpu_custom_call.1} parent=0
    _
  %s9 = ssub.s32 1, %s7
  %s10 = scalar_select 0, %s9, %s7
  $region1: #{tpu_custom_call.1} parent=0
    #allocation3 [shape = 'u8[32768]{0}', space=vmem, size = 0x8000, scoped, tag = 'input window, operand 0']
    #allocation4 [shape = 's32[2]{0}', space=sflag, size = 0x8, scoped, tag = 'scoped memory for tpu_custom_call.1']
    #allocation5 [shape = 's32[2]{0}', space=sflag, size = 0x8, scoped, tag = 'scoped memory for tpu_custom_call.1']
    #allocation6 [shape = 'u8[32768]{0}', space=vmem, size = 0x8000, scoped, tag = 'input window, operand 1']
    #allocation7 [shape = 's32[2]{0}', space=sflag, size = 0x8, scoped, tag = 'scoped memory for tpu_custom_call.1']
    #allocation8 [shape = 'u8[2097152]{0}', space=vmem, size = 0x200000, scoped, tag = 'input window, operand 2']
    #allocation9 [shape = 'u8[4096]{0}', space=vmem, size = 0x1000, scoped, tag = 'input window, operand 3, single buffered']
    #allocation10 [shape = 's32[1]{0}', space=sflag, size = 0x4, scoped, tag = 'scoped memory for tpu_custom_call.1']
    #allocation11 [shape = 'u8[262144]{0}', space=vmem, size = 0x40000, scoped, tag = 'input window, operand 4, single buffered']
    #allocation12 [shape = 'u8[512]{0}', space=vmem, size = 0x400, scoped, tag = 'input window, operand 5, single buffered']
    #allocation13 [shape = 's32[1]{0}', space=sflag, size = 0x4, scoped, tag = 'scoped memory for tpu_custom_call.1']
    #allocation14 [shape = 'u8[8192]{0}', space=vmem, size = 0x2000, scoped, tag = 'output window, operand 0, single buffered']
    %11 = vsyncpa [#allocation4], 0
    %s12 = scalar_lea.sflag [#allocation4], 1
    %13 = vsyncpa %s12, 0
    %14 = vsyncpa [#allocation7], 0
    %s15 = scalar_lea.sflag [#allocation7], 1
    %16 = vsyncpa %s15, 0
    %17 = vsyncpa [#allocation10], 0
    %18 = vsyncpa [#allocation13], 0
    %19 = vsyncpa [#allocation5], 0
    loop: start=0, step=1, limit=6
    $region2: #{tpu_custom_call.1} parent=1 // loop_pre_header
      _
    $region3: #{tpu_custom_call.1} parent=1 // loop_header
      %s21 = sphi 0, %s25
      %p22 = scmp.ge.s32.totalorder %s21, 6
      %s28 = sphi 0, %s40
      %s29 = sphi 0, %s36
      %s30 = sphi 0, %s28
      %s31 = sphi 0, %s29
      %s32 = sphi 0, %s30
      %s33 = sphi 0, %s31
      %s49 = sphi 0, %s51
      %s52 = sphi 0, %s49
      %s53 = sphi 0, %s52
      %s69 = sphi 0, %s53
      %s83 = sphi 0, %s85
      %s86 = sphi 0, %s83
      %s87 = sphi 0, %s86
      %s103 = sphi 0, %s87
      %s109 = sphi 0, %s111
      %s112 = sphi 0, %s109
      %s113 = sphi 0, %s112
      %s129 = sphi 0, %s113
      %s133 = sphi 0, %s133
      %s135 = sphi 0, %s133
      %s136 = sphi 0, %s135
      %s150 = sphi 0, %s136
      %s154 = sphi 0, %s154
      %s156 = sphi 0, %s154
      %s157 = sphi 0, %s156
      %s171 = sphi 0, %s157
      %s175 = sphi 0, %s175
      %s177 = sphi 0, %s175
      %s178 = sphi 0, %s177
      %s192 = sphi 0, %s178
      %s198 = sphi 0, %s200
      %s201 = sphi 0, %s198
      %s202 = sphi 0, %s201
      %s218 = sphi 0, %s202
    $region4: #{tpu_custom_call.1} parent=1 // loop_header_branch
      %24 = sbr.rel (%p22) target = $region8
    $region5: #{tpu_custom_call.1} parent=1 // loop_body
      %s26 = ssub.s32 %s21, 1
      %s27 = ssub.s32 %s21, 2
      %s34 = sadd.s32 1, %s29
      %p35 = scmp.ge.s32.totalorder %s34, 4
      %s36 = scalar_select %p35, 0, %s34
      %s37 = sadd.s32 1, %s28
      %s38 = scalar_select %p35, %s37, %s28
      %p39 = scmp.ge.s32.totalorder %s38, 1
      %s40 = scalar_select %p39, 0, %s38
      %p41 = scmp.lt.s32.totalorder %s29, 1
      %s42 = scalar_select %p41, %s29, 1
      %p43 = scmp.lt.s32.totalorder %s36, 1
      %s44 = scalar_select %p43, %s36, 1
      %s45 = ssub.s32 %s28, %s40
      %s46 = ssub.s32 %s42, %s44
      %s47 = sor.u32 %s45, %s46
      %p48 = scmp.eq.s32.totalorder %s47, 0
      %s50 = sadd.s32 %s49, 1
      %s51 = scalar_select %p48, %s49, %s50
      %p54 = pneg %p48
      %p55 = scmp.eq.s32.totalorder %s21, 3
      %p56 = por %p54, %p55
      %p57 = scmp.ne.s32.totalorder %s49, %s52
      %p58 = scmp.eq.s32.totalorder %s21, 0
      %p59 = por %p57, %p58
      %p60 = scmp.ne.s32.totalorder %s49, %s52
      %p61 = scmp.eq.s32.totalorder %s26, 3
      %p62 = por %p60, %p61
      %p63 = scmp.ne.s32.totalorder %s52, %s53
      %p64 = scmp.eq.s32.totalorder %s26, 0
      %p65 = por %p63, %p64
      %p66 = scmp.ne.s32.totalorder %s52, %s53
      %p67 = scmp.eq.s32.totalorder %s27, 3
      %p68 = por %p66, %p67
      %p70 = scmp.ne.s32.totalorder %s53, %s69
      %p71 = scmp.eq.s32.totalorder %s27, 0
      %p72 = por %p70, %p71
      %s73 = ssub.s32 %s29, 2
      %p74 = scmp.gt.s32.totalorder %s73, 0
      %s75 = scalar_select %p74, %s73, 0
      %s76 = ssub.s32 %s36, 2
      %p77 = scmp.gt.s32.totalorder %s76, 0
      %s78 = scalar_select %p77, %s76, 0
      %s79 = ssub.s32 %s28, %s40
      %s80 = ssub.s32 %s75, %s78
      %s81 = sor.u32 %s79, %s80
      %p82 = scmp.eq.s32.totalorder %s81, 0
      %s84 = sadd.s32 %s83, 1
      %s85 = scalar_select %p82, %s83, %s84
      %p88 = pneg %p82
      %p89 = scmp.eq.s32.totalorder %s21, 3
      %p90 = por %p88, %p89
      %p91 = scmp.ne.s32.totalorder %s83, %s86
      %p92 = scmp.eq.s32.totalorder %s21, 0
      %p93 = por %p91, %p92
      %p94 = scmp.ne.s32.totalorder %s83, %s86
      %p95 = scmp.eq.s32.totalorder %s26, 3
      %p96 = por %p94, %p95
      %p97 = scmp.ne.s32.totalorder %s86, %s87
      %p98 = scmp.eq.s32.totalorder %s26, 0
      %p99 = por %p97, %p98
      %p100 = scmp.ne.s32.totalorder %s86, %s87
      %p101 = scmp.eq.s32.totalorder %s27, 3
      %p102 = por %p100, %p101
      %p104 = scmp.ne.s32.totalorder %s87, %s103
      %p105 = scmp.eq.s32.totalorder %s27, 0
      %p106 = por %p104, %p105
      %s107 = ssub.s32 %s29, %s36
      %p108 = scmp.eq.s32.totalorder %s107, 0
      %s110 = sadd.s32 %s109, 1
      %s111 = scalar_select %p108, %s109, %s110
      %p114 = pneg %p108
      %p115 = scmp.eq.s32.totalorder %s21, 3
      %p116 = por %p114, %p115
      %p117 = scmp.ne.s32.totalorder %s109, %s112
      %p118 = scmp.eq.s32.totalorder %s21, 0
      %p119 = por %p117, %p118
      %p120 = scmp.ne.s32.totalorder %s109, %s112
      %p121 = scmp.eq.s32.totalorder %s26, 3
      %p122 = por %p120, %p121
      %p123 = scmp.ne.s32.totalorder %s112, %s113
      %p124 = scmp.eq.s32.totalorder %s26, 0
      %p125 = por %p123, %p124
      %p126 = scmp.ne.s32.totalorder %s112, %s113
      %p127 = scmp.eq.s32.totalorder %s27, 3
      %p128 = por %p126, %p127
      %p130 = scmp.ne.s32.totalorder %s113, %s129
      %p131 = scmp.eq.s32.totalorder %s27, 0
      %p132 = por %p130, %p131
      %s134 = sadd.s32 %s133, 1
      %p137 = scmp.eq.s32.totalorder %s21, 3
      %p138 = scmp.ne.s32.totalorder %s133, %s135
      %p139 = scmp.eq.s32.totalorder %s21, 0
      %p140 = por %p138, %p139
      %p141 = scmp.ne.s32.totalorder %s133, %s135
      %p142 = scmp.eq.s32.totalorder %s26, 3
      %p143 = por %p141, %p142
      %p144 = scmp.ne.s32.totalorder %s135, %s136
      %p145 = scmp.eq.s32.totalorder %s26, 0
      %p146 = por %p144, %p145
      %p147 = scmp.ne.s32.totalorder %s135, %s136
      %p148 = scmp.eq.s32.totalorder %s27, 3
      %p149 = por %p147, %p148
      %p151 = scmp.ne.s32.totalorder %s136, %s150
      %p152 = scmp.eq.s32.totalorder %s27, 0
      %p153 = por %p151, %p152
      %s155 = sadd.s32 %s154, 1
      %p158 = scmp.eq.s32.totalorder %s21, 3
      %p159 = scmp.ne.s32.totalorder %s154, %s156
      %p160 = scmp.eq.s32.totalorder %s21, 0
      %p161 = por %p159, %p160
      %p162 = scmp.ne.s32.totalorder %s154, %s156
      %p163 = scmp.eq.s32.totalorder %s26, 3
      %p164 = por %p162, %p163
      %p165 = scmp.ne.s32.totalorder %s156, %s157
      %p166 = scmp.eq.s32.totalorder %s26, 0
      %p167 = por %p165, %p166
      %p168 = scmp.ne.s32.totalorder %s156, %s157
      %p169 = scmp.eq.s32.totalorder %s27, 3
      %p170 = por %p168, %p169
      %p172 = scmp.ne.s32.totalorder %s157, %s171
      %p173 = scmp.eq.s32.totalorder %s27, 0
      %p174 = por %p172, %p173
      %s176 = sadd.s32 %s175, 1
      %p179 = scmp.eq.s32.totalorder %s21, 3
      %p180 = scmp.ne.s32.totalorder %s175, %s177
      %p181 = scmp.eq.s32.totalorder %s21, 0
      %p182 = por %p180, %p181
      %p183 = scmp.ne.s32.totalorder %s175, %s177
      %p184 = scmp.eq.s32.totalorder %s26, 3
      %p185 = por %p183, %p184
      %p186 = scmp.ne.s32.totalorder %s177, %s178
      %p187 = scmp.eq.s32.totalorder %s26, 0
      %p188 = por %p186, %p187
      %p189 = scmp.ne.s32.totalorder %s177, %s178
      %p190 = scmp.eq.s32.totalorder %s27, 3
      %p191 = por %p189, %p190
      %p193 = scmp.ne.s32.totalorder %s178, %s192
      %p194 = scmp.eq.s32.totalorder %s27, 0
      %p195 = por %p193, %p194
      %s196 = ssub.s32 %s28, %s40
      %p197 = scmp.eq.s32.totalorder %s196, 0
      %s199 = sadd.s32 %s198, 1
      %s200 = scalar_select %p197, %s198, %s199
      %p203 = pneg %p197
      %p204 = scmp.eq.s32.totalorder %s21, 3
      %p205 = por %p203, %p204
      %p206 = scmp.ne.s32.totalorder %s198, %s201
      %p207 = scmp.eq.s32.totalorder %s21, 0
      %p208 = por %p206, %p207
      %p209 = scmp.ne.s32.totalorder %s198, %s201
      %p210 = scmp.eq.s32.totalorder %s26, 3
      %p211 = por %p209, %p210
      %p212 = scmp.ne.s32.totalorder %s201, %s202
      %p213 = scmp.eq.s32.totalorder %s26, 0
      %p214 = por %p212, %p213
      %p215 = scmp.ne.s32.totalorder %s201, %s202
      %p216 = scmp.eq.s32.totalorder %s27, 3
      %p217 = por %p215, %p216
      %p219 = scmp.ne.s32.totalorder %s202, %s218
      %p220 = scmp.eq.s32.totalorder %s27, 0
      %p221 = por %p219, %p220
      %p222 = scmp.le.s32.totalorder 1, %s21
      %p223 = scmp.lt.s32.totalorder %s21, 5
      %p224 = pnand %p222, %p223
      %p225 = pneg %p224
      // Predicated region
      $region9: #{tpu_custom_call.1} parent=5 // pred_check
        _
      $region10: #{tpu_custom_call.1} parent=5 // pred_check_branch
        %227 = sbr.rel (%p224) target = $region12
      $region11: #{tpu_custom_call.1} parent=5 // pred_region
        %s228 = ssub.s32 %s21, 1
        // Predicated region
        $region13: #{tpu_custom_call.1} parent=11 // pred_check
          %p229 = pneg %p146
        $region14: #{tpu_custom_call.1} parent=11 // pred_check_branch
          %231 = sbr.rel (%p229) target = $region16
        $region15: #{tpu_custom_call.1} parent=11 // pred_region
          %233 = vsyncadd [#allocation10], 0
          %s235 = sshll.u32 %s3, 4
          %s236 = int_to_ptr.hbm [resolvable:$true] %s235
          %s237 = sshll.u32 [#allocation9], 4
          %s238 = int_to_ptr.vmem [resolvable:$true] %s237
          %240 = dma.hbm_to_vmem [thread:$0]  %s236, 128, %s238, [#allocation10]
        $region16: #{tpu_custom_call.1} parent=11 // pred_fallthru
          _
        // Predicated region
        $region17: #{tpu_custom_call.1} parent=11 // pred_check
          %p241 = pneg %p167
        $region18: #{tpu_custom_call.1} parent=11 // pred_check_branch
          %243 = sbr.rel (%p241) target = $region20
        $region19: #{tpu_custom_call.1} parent=11 // pred_region
          %245 = vsyncadd [#allocation10], 0
          %s246 = sshll.u32 %s4, 4
          %s247 = int_to_ptr.hbm [resolvable:$true] %s246
          %s248 = sshll.u32 [#allocation11], 4
          %s249 = int_to_ptr.vmem [resolvable:$true] %s248
          %254 = dma.hbm_to_vmem [thread:$0]  %s247, 8192, %s249, [#allocation10], 64, 64, 4
        $region20: #{tpu_custom_call.1} parent=11 // pred_fallthru
          _
        // Predicated region
        $region21: #{tpu_custom_call.1} parent=11 // pred_check
          %p255 = pneg %p188
        $region22: #{tpu_custom_call.1} parent=11 // pred_check_branch
          %257 = sbr.rel (%p255) target = $region24
        $region23: #{tpu_custom_call.1} parent=11 // pred_region
          %259 = vsyncadd [#allocation13], 0
          %s261 = sshll.u32 %s5, 4
          %s262 = int_to_ptr.hbm [resolvable:$true] %s261
          %s263 = sshll.u32 [#allocation12], 4
          %s264 = int_to_ptr.vmem [resolvable:$true] %s263
          %266 = dma.hbm_to_vmem [thread:$0]  %s262, 16, %s264, [#allocation13]
        $region24: #{tpu_custom_call.1} parent=11 // pred_fallthru
          _
      $region12: #{tpu_custom_call.1} parent=5 // pred_fallthru
        _
      %p267 = scmp.lt.s32.totalorder %s21, 4
      // Predicated region
      $region25: #{tpu_custom_call.1} parent=5 // pred_check
        %p268 = pneg %p267
      $region26: #{tpu_custom_call.1} parent=5 // pred_check_branch
        %270 = sbr.rel (%p268) target = $region28
      $region27: #{tpu_custom_call.1} parent=5 // pred_region
        // Predicated region
        $region29: #{tpu_custom_call.1} parent=27 // pred_check
          %p271 = pneg %p59
        $region30: #{tpu_custom_call.1} parent=27 // pred_check_branch
          %273 = sbr.rel (%p271) target = $region32
        $region31: #{tpu_custom_call.1} parent=27 // pred_region
          %s274 = sand.u32 %s49, 1
          %s275 = scalar_lea.sflag [#allocation4], %s274
          %s276 = sand.u32 %s49, 1
          %s277 = smul.addr %s276, 32
          %s278 = scalar_lea.vmem [#allocation3], %s277
          %p279 = scmp.lt.s32.totalorder %s29, 1
          %s280 = scalar_select %p279, %s29, 1
          %s281 = smul.u32 2, %s28
          %s282 = smul.u32 4, %s280
          %284 = vsyncadd %s275, 0
          %s285 = smul.addr %s281, 8
          %s286 = sadd.s32 %s282, %s285
          %s287 = smul.addr %s286, 4
          %s288 = scalar_lea.hbm %s0, %s287
          %s289 = sshll.u32 %s288, 4
          %s290 = int_to_ptr.hbm [resolvable:$true] %s289
          %s291 = sshll.u32 %s278, 4
          %s292 = int_to_ptr.vmem [resolvable:$true] %s291
          %297 = dma.hbm_to_vmem [thread:$0]  %s290, 512, %s292, %s275, 512, 256, 16
        $region32: #{tpu_custom_call.1} parent=27 // pred_fallthru
          _
        // Predicated region
        $region33: #{tpu_custom_call.1} parent=27 // pred_check
          %p298 = pneg %p93
        $region34: #{tpu_custom_call.1} parent=27 // pred_check_branch
          %300 = sbr.rel (%p298) target = $region36
        $region35: #{tpu_custom_call.1} parent=27 // pred_region
          %s301 = sand.u32 %s21, 1
          %s302 = scalar_lea.sflag [#allocation7], %s301
          %s303 = sand.u32 %s83, 1
          %s304 = smul.addr %s303, 32
          %s305 = scalar_lea.vmem [#allocation6], %s304
          %s306 = ssub.s32 %s29, 2
          %p307 = scmp.gt.s32.totalorder %s306, 0
          %s308 = scalar_select %p307, %s306, 0
          %s309 = smul.u32 2, %s28
          %s310 = smul.u32 4, %s308
          %312 = vsyncadd %s302, 0
          %s313 = smul.addr %s309, 8
          %s314 = sadd.s32 %s310, %s313
          %s315 = smul.addr %s314, 4
          %s316 = scalar_lea.hbm %s1, %s315
          %s317 = sshll.u32 %s316, 4
          %s318 = int_to_ptr.hbm [resolvable:$true] %s317
          %s319 = sshll.u32 %s305, 4
          %s320 = int_to_ptr.vmem [resolvable:$true] %s319
          %325 = dma.hbm_to_vmem [thread:$0]  %s318, 512, %s320, %s302, 512, 256, 16
        $region36: #{tpu_custom_call.1} parent=27 // pred_fallthru
          _
        // Predicated region
        $region37: #{tpu_custom_call.1} parent=27 // pred_check
          %p326 = pneg %p119
        $region38: #{tpu_custom_call.1} parent=27 // pred_check_branch
          %328 = sbr.rel (%p326) target = $region40
        $region39: #{tpu_custom_call.1} parent=27 // pred_region
          %s329 = sand.u32 %s21, 1
          %s330 = scalar_lea.sflag [#allocation7], %s329
          %s331 = sand.u32 %s109, 1
          %s332 = smul.addr %s331, 2048
          %s333 = scalar_lea.vmem [#allocation8], %s332
          %s334 = smul.u32 64, %s29
          %336 = vsyncadd %s330, 0
          %s337 = smul.addr %s334, 8
          %s338 = smul.addr %s337, 4
          %s339 = scalar_lea.hbm %s2, %s338
          %s340 = sshll.u32 %s339, 4
          %s341 = int_to_ptr.hbm [resolvable:$true] %s340
          %s342 = sshll.u32 %s333, 4
          %s343 = int_to_ptr.vmem [resolvable:$true] %s342
          %348 = dma.hbm_to_vmem [thread:$0]  %s341, 32768, %s343, %s330, 512, 512, 32
        $region40: #{tpu_custom_call.1} parent=27 // pred_fallthru
          _
      $region28: #{tpu_custom_call.1} parent=5 // pred_fallthru
        _
      %p349 = scmp.le.s32.totalorder 1, %s21
      %p350 = scmp.lt.s32.totalorder %s21, 5
      %p351 = pnand %p349, %p350
      %p352 = pneg %p351
      // Predicated region
      $region41: #{tpu_custom_call.1} parent=5 // pred_check
        _
      $region42: #{tpu_custom_call.1} parent=5 // pred_check_branch
        %354 = sbr.rel (%p351) target = $region44
      $region43: #{tpu_custom_call.1} parent=5 // pred_region
        %s355 = ssub.s32 %s21, 1
        %s356 = sand.u32 %s52, 1
        %s357 = scalar_lea.sflag [#allocation4], %s356
        %s358 = sand.u32 %s52, 1
        %s359 = smul.addr %s358, 32
        %s360 = scalar_lea.vmem [#allocation3], %s359
        // Predicated region
        $region45: #{tpu_custom_call.1} parent=43 // pred_check
          %p361 = pneg %p65
        $region46: #{tpu_custom_call.1} parent=43 // pred_check_branch
          %363 = sbr.rel (%p361) target = $region48
        $region47: #{tpu_custom_call.1} parent=43 // pred_region
          %365 = dma.done %s357, 512
        $region48: #{tpu_custom_call.1} parent=43 // pred_fallthru
          _
        %s366 = sand.u32 %s26, 1
        %s367 = scalar_lea.sflag [#allocation7], %s366
        %s368 = sand.u32 %s86, 1
        %s369 = smul.addr %s368, 32
        %s370 = scalar_lea.vmem [#allocation6], %s369
        // Predicated region
        $region49: #{tpu_custom_call.1} parent=43 // pred_check
          %p371 = pneg %p99
        $region50: #{tpu_custom_call.1} parent=43 // pred_check_branch
          %373 = sbr.rel (%p371) target = $region52
        $region51: #{tpu_custom_call.1} parent=43 // pred_region
          %375 = dma.done %s367, 512
        $region52: #{tpu_custom_call.1} parent=43 // pred_fallthru
          _
        %s376 = sand.u32 %s26, 1
        %s377 = scalar_lea.sflag [#allocation7], %s376
        %s378 = sand.u32 %s112, 1
        %s379 = smul.addr %s378, 2048
        %s380 = scalar_lea.vmem [#allocation8], %s379
        // Predicated region
        $region53: #{tpu_custom_call.1} parent=43 // pred_check
          %p381 = pneg %p125
        $region54: #{tpu_custom_call.1} parent=43 // pred_check_branch
          %383 = sbr.rel (%p381) target = $region56
        $region55: #{tpu_custom_call.1} parent=43 // pred_region
          %385 = dma.done %s377, 32768
        $region56: #{tpu_custom_call.1} parent=43 // pred_fallthru
          _
        // Predicated region
        $region57: #{tpu_custom_call.1} parent=43 // pred_check
          %p386 = pneg %p146
        $region58: #{tpu_custom_call.1} parent=43 // pred_check_branch
          %388 = sbr.rel (%p386) target = $region60
        $region59: #{tpu_custom_call.1} parent=43 // pred_region
          %390 = dma.done [#allocation10], 128
        $region60: #{tpu_custom_call.1} parent=43 // pred_fallthru
          _
        // Predicated region
        $region61: #{tpu_custom_call.1} parent=43 // pred_check
          %p391 = pneg %p167
        $region62: #{tpu_custom_call.1} parent=43 // pred_check_branch
          %393 = sbr.rel (%p391) target = $region64
        $region63: #{tpu_custom_call.1} parent=43 // pred_region
          %395 = dma.done [#allocation10], 8192
        $region64: #{tpu_custom_call.1} parent=43 // pred_fallthru
          _
        // Predicated region
        $region65: #{tpu_custom_call.1} parent=43 // pred_check
          %p396 = pneg %p188
        $region66: #{tpu_custom_call.1} parent=43 // pred_check_branch
          %398 = sbr.rel (%p396) target = $region68
        $region67: #{tpu_custom_call.1} parent=43 // pred_region
          %400 = dma.done [#allocation13], 16
        $region68: #{tpu_custom_call.1} parent=43 // pred_fallthru
          _
        %s401 = sand.u32 %s52, 1
        %s402 = scalar_lea.sflag [#allocation4], %s401
        %s403 = sand.u32 %s52, 1
        %s404 = smul.addr %s403, 32
        %s405 = scalar_lea.vmem [#allocation3], %s404
        %p406 = pneg %p65
        %p407 = pneg %p62
        %s408 = sand.u32 %s26, 1
        %s409 = scalar_lea.sflag [#allocation7], %s408
        %s410 = sand.u32 %s86, 1
        %s411 = smul.addr %s410, 32
        %s412 = scalar_lea.vmem [#allocation6], %s411
        %p413 = pneg %p99
        %p414 = pneg %p96
        %s415 = sand.u32 %s26, 1
        %s416 = scalar_lea.sflag [#allocation7], %s415
        %s417 = sand.u32 %s112, 1
        %s418 = smul.addr %s417, 2048
        %s419 = scalar_lea.vmem [#allocation8], %s418
        %p420 = pneg %p125
        %p421 = pneg %p122
        %p422 = pneg %p146
        %p423 = pneg %p143
        %p424 = pneg %p167
        %p425 = pneg %p164
        %p426 = pneg %p188
        %p427 = pneg %p185
        %p428 = pneg %p214
        %p429 = pneg %p211
        %p430 = scmp.lt.s32.totalorder %s31, 1
        %s431 = scalar_select %p430, %s31, 1
        %s432 = smul.u32 2, %s30
        %s433 = smul.u32 4, %s431
        %s434 = ssub.s32 %s31, 2
        %p435 = scmp.gt.s32.totalorder %s434, 0
        %s436 = scalar_select %p435, %s434, 0
        %s437 = smul.u32 2, %s30
        %s438 = smul.u32 4, %s436
        %s439 = smul.u32 64, %s31
        %s440 = smul.u32 2, %s30
        %p441 = scmp.eq.s32.totalorder %s31, 0
        // Predicated region
        $region69: #{tpu_custom_call.1} parent=43 // pred_check
          %p442 = pneg %p441
        $region70: #{tpu_custom_call.1} parent=43 // pred_check_branch
          %444 = sbr.rel (%p442) target = $region72
        $region71: #{tpu_custom_call.1} parent=43 // pred_region
          %445 = vst [vmem:[#allocation2] sm:$0xff] 0.0
          %446 = vst [vmem:[#allocation2 + $0x8] sm:$0xff] 0.0
          %447 = vst [vmem:[#allocation2 + $0x10] sm:$0xff] 0.0
          %448 = vst [vmem:[#allocation2 + $0x18] sm:$0xff] 0.0
          %449 = vst [vmem:[#allocation2 + $0x20] sm:$0xff] 0.0
          %450 = vst [vmem:[#allocation2 + $0x28] sm:$0xff] 0.0
          %451 = vst [vmem:[#allocation2 + $0x30] sm:$0xff] 0.0
          %452 = vst [vmem:[#allocation2 + $0x38] sm:$0xff] 0.0
          %453 = vst [vmem:[#allocation2 + $0x40] sm:$0xff] 0.0
          %454 = vst [vmem:[#allocation2 + $0x48] sm:$0xff] 0.0
          %455 = vst [vmem:[#allocation2 + $0x50] sm:$0xff] 0.0
          %456 = vst [vmem:[#allocation2 + $0x58] sm:$0xff] 0.0
          %457 = vst [vmem:[#allocation2 + $0x60] sm:$0xff] 0.0
          %458 = vst [vmem:[#allocation2 + $0x68] sm:$0xff] 0.0
          %459 = vst [vmem:[#allocation2 + $0x70] sm:$0xff] 0.0
          %460 = vst [vmem:[#allocation2 + $0x78] sm:$0xff] 0.0
        $region72: #{tpu_custom_call.1} parent=43 // pred_fallthru
          _
        %p461 = scmp.lt.s32.totalorder %s31, 2
        // Predicated region
        $region73: #{tpu_custom_call.1} parent=43 // pred_check
          %p462 = pneg %p461
        $region74: #{tpu_custom_call.1} parent=43 // pred_check_branch
          %464 = sbr.rel (%p462) target = $region76
        $region75: #{tpu_custom_call.1} parent=43 // pred_region
          %v465 = vld [vmem:[#allocation2] sm:$0xff]
          %v466 = vld [vmem:[#allocation2 + $0x8] sm:$0xff]
          %v467 = vld [vmem:[#allocation2 + $0x10] sm:$0xff]
          %v468 = vld [vmem:[#allocation2 + $0x18] sm:$0xff]
          %v469 = vld [vmem:[#allocation2 + $0x20] sm:$0xff]
          %v470 = vld [vmem:[#allocation2 + $0x28] sm:$0xff]
          %v471 = vld [vmem:[#allocation2 + $0x30] sm:$0xff]
          %v472 = vld [vmem:[#allocation2 + $0x38] sm:$0xff]
          %v473 = vld [vmem:[#allocation2 + $0x40] sm:$0xff]
          %v474 = vld [vmem:[#allocation2 + $0x48] sm:$0xff]
          %v475 = vld [vmem:[#allocation2 + $0x50] sm:$0xff]
          %v476 = vld [vmem:[#allocation2 + $0x58] sm:$0xff]
          %v477 = vld [vmem:[#allocation2 + $0x60] sm:$0xff]
          %v478 = vld [vmem:[#allocation2 + $0x68] sm:$0xff]
          %v479 = vld [vmem:[#allocation2 + $0x70] sm:$0xff]
          %v480 = vld [vmem:[#allocation2 + $0x78] sm:$0xff]
          %v481 = vld [vmem:[%s360] sm:$0xff]
          %v482 = vld [vmem:[%s360 + $0x8] sm:$0xff]
          %v483 = vld [vmem:[%s360 + $0x10] sm:$0xff]
          %v484 = vld [vmem:[%s360 + $0x18] sm:$0xff]
          %v485 = vld [vmem:[%s380] sm:$0xff]
          %v486 = vld [vmem:[%s380 + $0x8] sm:$0xff]
          %v487 = vld [vmem:[%s380 + $0x10] sm:$0xff]
          %v488 = vld [vmem:[%s380 + $0x18] sm:$0xff]
          %v489 = vld [vmem:[%s380 + $0x20] sm:$0xff]
          %v490 = vld [vmem:[%s380 + $0x28] sm:$0xff]
          %v491 = vld [vmem:[%s380 + $0x30] sm:$0xff]
          %v492 = vld [vmem:[%s380 + $0x38] sm:$0xff]
          %v493 = vld [vmem:[%s380 + $0x40] sm:$0xff]
          %v494 = vld [vmem:[%s380 + $0x48] sm:$0xff]
          %v495 = vld [vmem:[%s380 + $0x50] sm:$0xff]
          %v496 = vld [vmem:[%s380 + $0x58] sm:$0xff]
          %v497 = vld [vmem:[%s380 + $0x60] sm:$0xff]
          %v498 = vld [vmem:[%s380 + $0x68] sm:$0xff]
          %v499 = vld [vmem:[%s380 + $0x70] sm:$0xff]
          %v500 = vld [vmem:[%s380 + $0x78] sm:$0xff]
          %v501 = vld [vmem:[%s380 + $0x80] sm:$0xff]
          %v502 = vld [vmem:[%s380 + $0x88] sm:$0xff]
          %v503 = vld [vmem:[%s380 + $0x90] sm:$0xff]
          %v504 = vld [vmem:[%s380 + $0x98] sm:$0xff]
          %v505 = vld [vmem:[%s380 + $0xa0] sm:$0xff]
          %v506 = vld [vmem:[%s380 + $0xa8] sm:$0xff]
          %v507 = vld [vmem:[%s380 + $0xb0] sm:$0xff]
          %v508 = vld [vmem:[%s380 + $0xb8] sm:$0xff]
          %v509 = vld [vmem:[%s380 + $0xc0] sm:$0xff]
          %v510 = vld [vmem:[%s380 + $0xc8] sm:$0xff]
          %v511 = vld [vmem:[%s380 + $0xd0] sm:$0xff]
          %v512 = vld [vmem:[%s380 + $0xd8] sm:$0xff]
          %v513 = vld [vmem:[%s380 + $0xe0] sm:$0xff]
          %v514 = vld [vmem:[%s380 + $0xe8] sm:$0xff]
          %v515 = vld [vmem:[%s380 + $0xf0] sm:$0xff]
          %v516 = vld [vmem:[%s380 + $0xf8] sm:$0xff]
          %v517 = vld [vmem:[%s380 + $0x100] sm:$0xff]
          %v518 = vld [vmem:[%s380 + $0x108] sm:$0xff]
          %v519 = vld [vmem:[%s380 + $0x110] sm:$0xff]
          %v520 = vld [vmem:[%s380 + $0x118] sm:$0xff]
          %v521 = vld [vmem:[%s380 + $0x120] sm:$0xff]
          %v522 = vld [vmem:[%s380 + $0x128] sm:$0xff]
          %v523 = vld [vmem:[%s380 + $0x130] sm:$0xff]
          %v524 = vld [vmem:[%s380 + $0x138] sm:$0xff]
          %v525 = vld [vmem:[%s380 + $0x140] sm:$0xff]
          %v526 = vld [vmem:[%s380 + $0x148] sm:$0xff]
          %v527 = vld [vmem:[%s380 + $0x150] sm:$0xff]
          %v528 = vld [vmem:[%s380 + $0x158] sm:$0xff]
          %v529 = vld [vmem:[%s380 + $0x160] sm:$0xff]
          %v530 = vld [vmem:[%s380 + $0x168] sm:$0xff]
          %v531 = vld [vmem:[%s380 + $0x170] sm:$0xff]
          %v532 = vld [vmem:[%s380 + $0x178] sm:$0xff]
          %v533 = vld [vmem:[%s380 + $0x180] sm:$0xff]
          %v534 = vld [vmem:[%s380 + $0x188] sm:$0xff]
          %v535 = vld [vmem:[%s380 + $0x190] sm:$0xff]
          %v536 = vld [vmem:[%s380 + $0x198] sm:$0xff]
          %v537 = vld [vmem:[%s380 + $0x1a0] sm:$0xff]
          %v538 = vld [vmem:[%s380 + $0x1a8] sm:$0xff]
          %v539 = vld [vmem:[%s380 + $0x1b0] sm:$0xff]
          %v540 = vld [vmem:[%s380 + $0x1b8] sm:$0xff]
          %v541 = vld [vmem:[%s380 + $0x1c0] sm:$0xff]
          %v542 = vld [vmem:[%s380 + $0x1c8] sm:$0xff]
          %v543 = vld [vmem:[%s380 + $0x1d0] sm:$0xff]
          %v544 = vld [vmem:[%s380 + $0x1d8] sm:$0xff]
          %v545 = vld [vmem:[%s380 + $0x1e0] sm:$0xff]
          %v546 = vld [vmem:[%s380 + $0x1e8] sm:$0xff]
          %v547 = vld [vmem:[%s380 + $0x1f0] sm:$0xff]
          %v548 = vld [vmem:[%s380 + $0x1f8] sm:$0xff]
          %v549 = vld [vmem:[%s380 + $0x200] sm:$0xff]
          %v550 = vld [vmem:[%s380 + $0x208] sm:$0xff]
          %v551 = vld [vmem:[%s380 + $0x210] sm:$0xff]
          %v552 = vld [vmem:[%s380 + $0x218] sm:$0xff]
          %v553 = vld [vmem:[%s380 + $0x220] sm:$0xff]
          %v554 = vld [vmem:[%s380 + $0x228] sm:$0xff]
          %v555 = vld [vmem:[%s380 + $0x230] sm:$0xff]
          %v556 = vld [vmem:[%s380 + $0x238] sm:$0xff]
          %v557 = vld [vmem:[%s380 + $0x240] sm:$0xff]
          %v558 = vld [vmem:[%s380 + $0x248] sm:$0xff]
          %v559 = vld [vmem:[%s380 + $0x250] sm:$0xff]
          %v560 = vld [vmem:[%s380 + $0x258] sm:$0xff]
          %v561 = vld [vmem:[%s380 + $0x260] sm:$0xff]
          %v562 = vld [vmem:[%s380 + $0x268] sm:$0xff]
          %v563 = vld [vmem:[%s380 + $0x270] sm:$0xff]
          %v564 = vld [vmem:[%s380 + $0x278] sm:$0xff]
          %v565 = vld [vmem:[%s380 + $0x280] sm:$0xff]
          %v566 = vld [vmem:[%s380 + $0x288] sm:$0xff]
          %v567 = vld [vmem:[%s380 + $0x290] sm:$0xff]
          %v568 = vld [vmem:[%s380 + $0x298] sm:$0xff]
          %v569 = vld [vmem:[%s380 + $0x2a0] sm:$0xff]
          %v570 = vld [vmem:[%s380 + $0x2a8] sm:$0xff]
          %v571 = vld [vmem:[%s380 + $0x2b0] sm:$0xff]
          %v572 = vld [vmem:[%s380 + $0x2b8] sm:$0xff]
          %v573 = vld [vmem:[%s380 + $0x2c0] sm:$0xff]
          %v574 = vld [vmem:[%s380 + $0x2c8] sm:$0xff]
          %v575 = vld [vmem:[%s380 + $0x2d0] sm:$0xff]
          %v576 = vld [vmem:[%s380 + $0x2d8] sm:$0xff]
          %v577 = vld [vmem:[%s380 + $0x2e0] sm:$0xff]
          %v578 = vld [vmem:[%s380 + $0x2e8] sm:$0xff]
          %v579 = vld [vmem:[%s380 + $0x2f0] sm:$0xff]
          %v580 = vld [vmem:[%s380 + $0x2f8] sm:$0xff]
          %v581 = vld [vmem:[%s380 + $0x300] sm:$0xff]
          %v582 = vld [vmem:[%s380 + $0x308] sm:$0xff]
          %v583 = vld [vmem:[%s380 + $0x310] sm:$0xff]
          %v584 = vld [vmem:[%s380 + $0x318] sm:$0xff]
          %v585 = vld [vmem:[%s380 + $0x320] sm:$0xff]
          %v586 = vld [vmem:[%s380 + $0x328] sm:$0xff]
          %v587 = vld [vmem:[%s380 + $0x330] sm:$0xff]
          %v588 = vld [vmem:[%s380 + $0x338] sm:$0xff]
          %v589 = vld [vmem:[%s380 + $0x340] sm:$0xff]
          %v590 = vld [vmem:[%s380 + $0x348] sm:$0xff]
          %v591 = vld [vmem:[%s380 + $0x350] sm:$0xff]
          %v592 = vld [vmem:[%s380 + $0x358] sm:$0xff]
          %v593 = vld [vmem:[%s380 + $0x360] sm:$0xff]
          %v594 = vld [vmem:[%s380 + $0x368] sm:$0xff]
          %v595 = vld [vmem:[%s380 + $0x370] sm:$0xff]
          %v596 = vld [vmem:[%s380 + $0x378] sm:$0xff]
          %v597 = vld [vmem:[%s380 + $0x380] sm:$0xff]
          %v598 = vld [vmem:[%s380 + $0x388] sm:$0xff]
          %v599 = vld [vmem:[%s380 + $0x390] sm:$0xff]
          %v600 = vld [vmem:[%s380 + $0x398] sm:$0xff]
          %v601 = vld [vmem:[%s380 + $0x3a0] sm:$0xff]
          %v602 = vld [vmem:[%s380 + $0x3a8] sm:$0xff]
          %v603 = vld [vmem:[%s380 + $0x3b0] sm:$0xff]
          %v604 = vld [vmem:[%s380 + $0x3b8] sm:$0xff]
          %v605 = vld [vmem:[%s380 + $0x3c0] sm:$0xff]
          %v606 = vld [vmem:[%s380 + $0x3c8] sm:$0xff]
          %v607 = vld [vmem:[%s380 + $0x3d0] sm:$0xff]
          %v608 = vld [vmem:[%s380 + $0x3d8] sm:$0xff]
          %v609 = vld [vmem:[%s380 + $0x3e0] sm:$0xff]
          %v610 = vld [vmem:[%s380 + $0x3e8] sm:$0xff]
          %v611 = vld [vmem:[%s380 + $0x3f0] sm:$0xff]
          %v612 = vld [vmem:[%s380 + $0x3f8] sm:$0xff]
          %v613 = vld [vmem:[%s380 + $0x400] sm:$0xff]
          %v614 = vld [vmem:[%s380 + $0x408] sm:$0xff]
          %v615 = vld [vmem:[%s380 + $0x410] sm:$0xff]
          %v616 = vld [vmem:[%s380 + $0x418] sm:$0xff]
          %v617 = vld [vmem:[%s380 + $0x420] sm:$0xff]
          %v618 = vld [vmem:[%s380 + $0x428] sm:$0xff]
          %v619 = vld [vmem:[%s380 + $0x430] sm:$0xff]
          %v620 = vld [vmem:[%s380 + $0x438] sm:$0xff]
          %v621 = vld [vmem:[%s380 + $0x440] sm:$0xff]
          %v622 = vld [vmem:[%s380 + $0x448] sm:$0xff]
          %v623 = vld [vmem:[%s380 + $0x450] sm:$0xff]
          %v624 = vld [vmem:[%s380 + $0x458] sm:$0xff]
          %v625 = vld [vmem:[%s380 + $0x460] sm:$0xff]
          %v626 = vld [vmem:[%s380 + $0x468] sm:$0xff]
          %v627 = vld [vmem:[%s380 + $0x470] sm:$0xff]
          %v628 = vld [vmem:[%s380 + $0x478] sm:$0xff]
          %v629 = vld [vmem:[%s380 + $0x480] sm:$0xff]
          %v630 = vld [vmem:[%s380 + $0x488] sm:$0xff]
          %v631 = vld [vmem:[%s380 + $0x490] sm:$0xff]
          %v632 = vld [vmem:[%s380 + $0x498] sm:$0xff]
          %v633 = vld [vmem:[%s380 + $0x4a0] sm:$0xff]
          %v634 = vld [vmem:[%s380 + $0x4a8] sm:$0xff]
          %v635 = vld [vmem:[%s380 + $0x4b0] sm:$0xff]
          %v636 = vld [vmem:[%s380 + $0x4b8] sm:$0xff]
          %v637 = vld [vmem:[%s380 + $0x4c0] sm:$0xff]
          %v638 = vld [vmem:[%s380 + $0x4c8] sm:$0xff]
          %v639 = vld [vmem:[%s380 + $0x4d0] sm:$0xff]
          %v640 = vld [vmem:[%s380 + $0x4d8] sm:$0xff]
          %v641 = vld [vmem:[%s380 + $0x4e0] sm:$0xff]
          %v642 = vld [vmem:[%s380 + $0x4e8] sm:$0xff]
          %v643 = vld [vmem:[%s380 + $0x4f0] sm:$0xff]
          %v644 = vld [vmem:[%s380 + $0x4f8] sm:$0xff]
          %v645 = vld [vmem:[%s380 + $0x500] sm:$0xff]
          %v646 = vld [vmem:[%s380 + $0x508] sm:$0xff]
          %v647 = vld [vmem:[%s380 + $0x510] sm:$0xff]
          %v648 = vld [vmem:[%s380 + $0x518] sm:$0xff]
          %v649 = vld [vmem:[%s380 + $0x520] sm:$0xff]
          %v650 = vld [vmem:[%s380 + $0x528] sm:$0xff]
          %v651 = vld [vmem:[%s380 + $0x530] sm:$0xff]
          %v652 = vld [vmem:[%s380 + $0x538] sm:$0xff]
          %v653 = vld [vmem:[%s380 + $0x540] sm:$0xff]
          %v654 = vld [vmem:[%s380 + $0x548] sm:$0xff]
          %v655 = vld [vmem:[%s380 + $0x550] sm:$0xff]
          %v656 = vld [vmem:[%s380 + $0x558] sm:$0xff]
          %v657 = vld [vmem:[%s380 + $0x560] sm:$0xff]
          %v658 = vld [vmem:[%s380 + $0x568] sm:$0xff]
          %v659 = vld [vmem:[%s380 + $0x570] sm:$0xff]
          %v660 = vld [vmem:[%s380 + $0x578] sm:$0xff]
          %v661 = vld [vmem:[%s380 + $0x580] sm:$0xff]
          %v662 = vld [vmem:[%s380 + $0x588] sm:$0xff]
          %v663 = vld [vmem:[%s380 + $0x590] sm:$0xff]
          %v664 = vld [vmem:[%s380 + $0x598] sm:$0xff]
          %v665 = vld [vmem:[%s380 + $0x5a0] sm:$0xff]
          %v666 = vld [vmem:[%s380 + $0x5a8] sm:$0xff]
          %v667 = vld [vmem:[%s380 + $0x5b0] sm:$0xff]
          %v668 = vld [vmem:[%s380 + $0x5b8] sm:$0xff]
          %v669 = vld [vmem:[%s380 + $0x5c0] sm:$0xff]
          %v670 = vld [vmem:[%s380 + $0x5c8] sm:$0xff]
          %v671 = vld [vmem:[%s380 + $0x5d0] sm:$0xff]
          %v672 = vld [vmem:[%s380 + $0x5d8] sm:$0xff]
          %v673 = vld [vmem:[%s380 + $0x5e0] sm:$0xff]
          %v674 = vld [vmem:[%s380 + $0x5e8] sm:$0xff]
          %v675 = vld [vmem:[%s380 + $0x5f0] sm:$0xff]
          %v676 = vld [vmem:[%s380 + $0x5f8] sm:$0xff]
          %v677 = vld [vmem:[%s380 + $0x600] sm:$0xff]
          %v678 = vld [vmem:[%s380 + $0x608] sm:$0xff]
          %v679 = vld [vmem:[%s380 + $0x610] sm:$0xff]
          %v680 = vld [vmem:[%s380 + $0x618] sm:$0xff]
          %v681 = vld [vmem:[%s380 + $0x620] sm:$0xff]
          %v682 = vld [vmem:[%s380 + $0x628] sm:$0xff]
          %v683 = vld [vmem:[%s380 + $0x630] sm:$0xff]
          %v684 = vld [vmem:[%s380 + $0x638] sm:$0xff]
          %v685 = vld [vmem:[%s380 + $0x640] sm:$0xff]
          %v686 = vld [vmem:[%s380 + $0x648] sm:$0xff]
          %v687 = vld [vmem:[%s380 + $0x650] sm:$0xff]
          %v688 = vld [vmem:[%s380 + $0x658] sm:$0xff]
          %v689 = vld [vmem:[%s380 + $0x660] sm:$0xff]
          %v690 = vld [vmem:[%s380 + $0x668] sm:$0xff]
          %v691 = vld [vmem:[%s380 + $0x670] sm:$0xff]
          %v692 = vld [vmem:[%s380 + $0x678] sm:$0xff]
          %v693 = vld [vmem:[%s380 + $0x680] sm:$0xff]
          %v694 = vld [vmem:[%s380 + $0x688] sm:$0xff]
          %v695 = vld [vmem:[%s380 + $0x690] sm:$0xff]
          %v696 = vld [vmem:[%s380 + $0x698] sm:$0xff]
          %v697 = vld [vmem:[%s380 + $0x6a0] sm:$0xff]
          %v698 = vld [vmem:[%s380 + $0x6a8] sm:$0xff]
          %v699 = vld [vmem:[%s380 + $0x6b0] sm:$0xff]
          %v700 = vld [vmem:[%s380 + $0x6b8] sm:$0xff]
          %v701 = vld [vmem:[%s380 + $0x6c0] sm:$0xff]
          %v702 = vld [vmem:[%s380 + $0x6c8] sm:$0xff]
          %v703 = vld [vmem:[%s380 + $0x6d0] sm:$0xff]
          %v704 = vld [vmem:[%s380 + $0x6d8] sm:$0xff]
          %v705 = vld [vmem:[%s380 + $0x6e0] sm:$0xff]
          %v706 = vld [vmem:[%s380 + $0x6e8] sm:$0xff]
          %v707 = vld [vmem:[%s380 + $0x6f0] sm:$0xff]
          %v708 = vld [vmem:[%s380 + $0x6f8] sm:$0xff]
          %v709 = vld [vmem:[%s380 + $0x700] sm:$0xff]
          %v710 = vld [vmem:[%s380 + $0x708] sm:$0xff]
          %v711 = vld [vmem:[%s380 + $0x710] sm:$0xff]
          %v712 = vld [vmem:[%s380 + $0x718] sm:$0xff]
          %v713 = vld [vmem:[%s380 + $0x720] sm:$0xff]
          %v714 = vld [vmem:[%s380 + $0x728] sm:$0xff]
          %v715 = vld [vmem:[%s380 + $0x730] sm:$0xff]
          %v716 = vld [vmem:[%s380 + $0x738] sm:$0xff]
          %v717 = vld [vmem:[%s380 + $0x740] sm:$0xff]
          %v718 = vld [vmem:[%s380 + $0x748] sm:$0xff]
          %v719 = vld [vmem:[%s380 + $0x750] sm:$0xff]
          %v720 = vld [vmem:[%s380 + $0x758] sm:$0xff]
          %v721 = vld [vmem:[%s380 + $0x760] sm:$0xff]
          %v722 = vld [vmem:[%s380 + $0x768] sm:$0xff]
          %v723 = vld [vmem:[%s380 + $0x770] sm:$0xff]
          %v724 = vld [vmem:[%s380 + $0x778] sm:$0xff]
          %v725 = vld [vmem:[%s380 + $0x780] sm:$0xff]
          %v726 = vld [vmem:[%s380 + $0x788] sm:$0xff]
          %v727 = vld [vmem:[%s380 + $0x790] sm:$0xff]
          %v728 = vld [vmem:[%s380 + $0x798] sm:$0xff]
          %v729 = vld [vmem:[%s380 + $0x7a0] sm:$0xff]
          %v730 = vld [vmem:[%s380 + $0x7a8] sm:$0xff]
          %v731 = vld [vmem:[%s380 + $0x7b0] sm:$0xff]
          %v732 = vld [vmem:[%s380 + $0x7b8] sm:$0xff]
          %v733 = vld [vmem:[%s380 + $0x7c0] sm:$0xff]
          %v734 = vld [vmem:[%s380 + $0x7c8] sm:$0xff]
          %v735 = vld [vmem:[%s380 + $0x7d0] sm:$0xff]
          %v736 = vld [vmem:[%s380 + $0x7d8] sm:$0xff]
          %v737 = vld [vmem:[%s380 + $0x7e0] sm:$0xff]
          %v738 = vld [vmem:[%s380 + $0x7e8] sm:$0xff]
          %v739 = vld [vmem:[%s380 + $0x7f0] sm:$0xff]
          %v740 = vld [vmem:[%s380 + $0x7f8] sm:$0xff]
          %v745 = vunpack.c.l.b16 %v481
          %v746 = vunpack.c.h.b16 %v481
          %v747 = vunpack.c.l.b16 %v482
          %v748 = vunpack.c.h.b16 %v482
          %v749 = vunpack.c.l.b16 %v483
          %v750 = vunpack.c.h.b16 %v483
          %v751 = vunpack.c.l.b16 %v484
          %v752 = vunpack.c.h.b16 %v484
          %v753 = vpack.c.b16 %v749, %v745
          %v754 = vpack.c.b16 %v750, %v746
          %v755 = vpack.c.b16 %v751, %v747
          %v756 = vpack.c.b16 %v752, %v748
          %v1017 = vunpack.c.l.b16 %v485
          %v1018 = vunpack.c.h.b16 %v485
          %v1019 = vunpack.c.l.b16 %v486
          %v1020 = vunpack.c.h.b16 %v486
          %v1021 = vunpack.c.l.b16 %v487
          %v1022 = vunpack.c.h.b16 %v487
          %v1023 = vunpack.c.l.b16 %v488
          %v1024 = vunpack.c.h.b16 %v488
          %v1025 = vunpack.c.l.b16 %v489
          %v1026 = vunpack.c.h.b16 %v489
          %v1027 = vunpack.c.l.b16 %v490
          %v1028 = vunpack.c.h.b16 %v490
          %v1029 = vunpack.c.l.b16 %v491
          %v1030 = vunpack.c.h.b16 %v491
          %v1031 = vunpack.c.l.b16 %v492
          %v1032 = vunpack.c.h.b16 %v492
          %v1033 = vunpack.c.l.b16 %v493
          %v1034 = vunpack.c.h.b16 %v493
          %v1035 = vunpack.c.l.b16 %v494
          %v1036 = vunpack.c.h.b16 %v494
          %v1037 = vunpack.c.l.b16 %v495
          %v1038 = vunpack.c.h.b16 %v495
          %v1039 = vunpack.c.l.b16 %v496
          %v1040 = vunpack.c.h.b16 %v496
          %v1041 = vunpack.c.l.b16 %v497
          %v1042 = vunpack.c.h.b16 %v497
          %v1043 = vunpack.c.l.b16 %v498
          %v1044 = vunpack.c.h.b16 %v498
          %v1045 = vunpack.c.l.b16 %v499
          %v1046 = vunpack.c.h.b16 %v499
          %v1047 = vunpack.c.l.b16 %v500
          %v1048 = vunpack.c.h.b16 %v500
          %v1049 = vunpack.c.l.b16 %v501
          %v1050 = vunpack.c.h.b16 %v501
          %v1051 = vunpack.c.l.b16 %v502
          %v1052 = vunpack.c.h.b16 %v502
          %v1053 = vunpack.c.l.b16 %v503
          %v1054 = vunpack.c.h.b16 %v503
          %v1055 = vunpack.c.l.b16 %v504
          %v1056 = vunpack.c.h.b16 %v504
          %v1057 = vunpack.c.l.b16 %v505
          %v1058 = vunpack.c.h.b16 %v505
          %v1059 = vunpack.c.l.b16 %v506
          %v1060 = vunpack.c.h.b16 %v506
          %v1061 = vunpack.c.l.b16 %v507
          %v1062 = vunpack.c.h.b16 %v507
          %v1063 = vunpack.c.l.b16 %v508
          %v1064 = vunpack.c.h.b16 %v508
          %v1065 = vunpack.c.l.b16 %v509
          %v1066 = vunpack.c.h.b16 %v509
          %v1067 = vunpack.c.l.b16 %v510
          %v1068 = vunpack.c.h.b16 %v510
          %v1069 = vunpack.c.l.b16 %v511
          %v1070 = vunpack.c.h.b16 %v511
          %v1071 = vunpack.c.l.b16 %v512
          %v1072 = vunpack.c.h.b16 %v512
          %v1073 = vunpack.c.l.b16 %v513
          %v1074 = vunpack.c.h.b16 %v513
          %v1075 = vunpack.c.l.b16 %v514
          %v1076 = vunpack.c.h.b16 %v514
          %v1077 = vunpack.c.l.b16 %v515
          %v1078 = vunpack.c.h.b16 %v515
          %v1079 = vunpack.c.l.b16 %v516
          %v1080 = vunpack.c.h.b16 %v516
          %v1081 = vunpack.c.l.b16 %v517
          %v1082 = vunpack.c.h.b16 %v517
          %v1083 = vunpack.c.l.b16 %v518
          %v1084 = vunpack.c.h.b16 %v518
          %v1085 = vunpack.c.l.b16 %v519
          %v1086 = vunpack.c.h.b16 %v519
          %v1087 = vunpack.c.l.b16 %v520
          %v1088 = vunpack.c.h.b16 %v520
          %v1089 = vunpack.c.l.b16 %v521
          %v1090 = vunpack.c.h.b16 %v521
          %v1091 = vunpack.c.l.b16 %v522
          %v1092 = vunpack.c.h.b16 %v522
          %v1093 = vunpack.c.l.b16 %v523
          %v1094 = vunpack.c.h.b16 %v523
          %v1095 = vunpack.c.l.b16 %v524
          %v1096 = vunpack.c.h.b16 %v524
          %v1097 = vunpack.c.l.b16 %v525
          %v1098 = vunpack.c.h.b16 %v525
          %v1099 = vunpack.c.l.b16 %v526
          %v1100 = vunpack.c.h.b16 %v526
          %v1101 = vunpack.c.l.b16 %v527
          %v1102 = vunpack.c.h.b16 %v527
          %v1103 = vunpack.c.l.b16 %v528
          %v1104 = vunpack.c.h.b16 %v528
          %v1105 = vunpack.c.l.b16 %v529
          %v1106 = vunpack.c.h.b16 %v529
          %v1107 = vunpack.c.l.b16 %v530
          %v1108 = vunpack.c.h.b16 %v530
          %v1109 = vunpack.c.l.b16 %v531
          %v1110 = vunpack.c.h.b16 %v531
          %v1111 = vunpack.c.l.b16 %v532
          %v1112 = vunpack.c.h.b16 %v532
          %v1113 = vunpack.c.l.b16 %v533
          %v1114 = vunpack.c.h.b16 %v533
          %v1115 = vunpack.c.l.b16 %v534
          %v1116 = vunpack.c.h.b16 %v534
          %v1117 = vunpack.c.l.b16 %v535
          %v1118 = vunpack.c.h.b16 %v535
          %v1119 = vunpack.c.l.b16 %v536
          %v1120 = vunpack.c.h.b16 %v536
          %v1121 = vunpack.c.l.b16 %v537
          %v1122 = vunpack.c.h.b16 %v537
          %v1123 = vunpack.c.l.b16 %v538
          %v1124 = vunpack.c.h.b16 %v538
          %v1125 = vunpack.c.l.b16 %v539
          %v1126 = vunpack.c.h.b16 %v539
          %v1127 = vunpack.c.l.b16 %v540
          %v1128 = vunpack.c.h.b16 %v540
          %v1129 = vunpack.c.l.b16 %v541
          %v1130 = vunpack.c.h.b16 %v541
          %v1131 = vunpack.c.l.b16 %v542
          %v1132 = vunpack.c.h.b16 %v542
          %v1133 = vunpack.c.l.b16 %v543
          %v1134 = vunpack.c.h.b16 %v543
          %v1135 = vunpack.c.l.b16 %v544
          %v1136 = vunpack.c.h.b16 %v544
          %v1137 = vunpack.c.l.b16 %v545
          %v1138 = vunpack.c.h.b16 %v545
          %v1139 = vunpack.c.l.b16 %v546
          %v1140 = vunpack.c.h.b16 %v546
          %v1141 = vunpack.c.l.b16 %v547
          %v1142 = vunpack.c.h.b16 %v547
          %v1143 = vunpack.c.l.b16 %v548
          %v1144 = vunpack.c.h.b16 %v548
          %v1145 = vunpack.c.l.b16 %v549
          %v1146 = vunpack.c.h.b16 %v549
          %v1147 = vunpack.c.l.b16 %v550
          %v1148 = vunpack.c.h.b16 %v550
          %v1149 = vunpack.c.l.b16 %v551
          %v1150 = vunpack.c.h.b16 %v551
          %v1151 = vunpack.c.l.b16 %v552
          %v1152 = vunpack.c.h.b16 %v552
          %v1153 = vunpack.c.l.b16 %v553
          %v1154 = vunpack.c.h.b16 %v553
          %v1155 = vunpack.c.l.b16 %v554
          %v1156 = vunpack.c.h.b16 %v554
          %v1157 = vunpack.c.l.b16 %v555
          %v1158 = vunpack.c.h.b16 %v555
          %v1159 = vunpack.c.l.b16 %v556
          %v1160 = vunpack.c.h.b16 %v556
          %v1161 = vunpack.c.l.b16 %v557
          %v1162 = vunpack.c.h.b16 %v557
          %v1163 = vunpack.c.l.b16 %v558
          %v1164 = vunpack.c.h.b16 %v558
          %v1165 = vunpack.c.l.b16 %v559
          %v1166 = vunpack.c.h.b16 %v559
          %v1167 = vunpack.c.l.b16 %v560
          %v1168 = vunpack.c.h.b16 %v560
          %v1169 = vunpack.c.l.b16 %v561
          %v1170 = vunpack.c.h.b16 %v561
          %v1171 = vunpack.c.l.b16 %v562
          %v1172 = vunpack.c.h.b16 %v562
          %v1173 = vunpack.c.l.b16 %v563
          %v1174 = vunpack.c.h.b16 %v563
          %v1175 = vunpack.c.l.b16 %v564
          %v1176 = vunpack.c.h.b16 %v564
          %v1177 = vunpack.c.l.b16 %v565
          %v1178 = vunpack.c.h.b16 %v565
          %v1179 = vunpack.c.l.b16 %v566
          %v1180 = vunpack.c.h.b16 %v566
          %v1181 = vunpack.c.l.b16 %v567
          %v1182 = vunpack.c.h.b16 %v567
          %v1183 = vunpack.c.l.b16 %v568
          %v1184 = vunpack.c.h.b16 %v568
          %v1185 = vunpack.c.l.b16 %v569
          %v1186 = vunpack.c.h.b16 %v569
          %v1187 = vunpack.c.l.b16 %v570
          %v1188 = vunpack.c.h.b16 %v570
          %v1189 = vunpack.c.l.b16 %v571
          %v1190 = vunpack.c.h.b16 %v571
          %v1191 = vunpack.c.l.b16 %v572
          %v1192 = vunpack.c.h.b16 %v572
          %v1193 = vunpack.c.l.b16 %v573
          %v1194 = vunpack.c.h.b16 %v573
          %v1195 = vunpack.c.l.b16 %v574
          %v1196 = vunpack.c.h.b16 %v574
          %v1197 = vunpack.c.l.b16 %v575
          %v1198 = vunpack.c.h.b16 %v575
          %v1199 = vunpack.c.l.b16 %v576
          %v1200 = vunpack.c.h.b16 %v576
          %v1201 = vunpack.c.l.b16 %v577
          %v1202 = vunpack.c.h.b16 %v577
          %v1203 = vunpack.c.l.b16 %v578
          %v1204 = vunpack.c.h.b16 %v578
          %v1205 = vunpack.c.l.b16 %v579
          %v1206 = vunpack.c.h.b16 %v579
          %v1207 = vunpack.c.l.b16 %v580
          %v1208 = vunpack.c.h.b16 %v580
          %v1209 = vunpack.c.l.b16 %v581
          %v1210 = vunpack.c.h.b16 %v581
          %v1211 = vunpack.c.l.b16 %v582
          %v1212 = vunpack.c.h.b16 %v582
          %v1213 = vunpack.c.l.b16 %v583
          %v1214 = vunpack.c.h.b16 %v583
          %v1215 = vunpack.c.l.b16 %v584
          %v1216 = vunpack.c.h.b16 %v584
          %v1217 = vunpack.c.l.b16 %v585
          %v1218 = vunpack.c.h.b16 %v585
          %v1219 = vunpack.c.l.b16 %v586
          %v1220 = vunpack.c.h.b16 %v586
          %v1221 = vunpack.c.l.b16 %v587
          %v1222 = vunpack.c.h.b16 %v587
          %v1223 = vunpack.c.l.b16 %v588
          %v1224 = vunpack.c.h.b16 %v588
          %v1225 = vunpack.c.l.b16 %v589
          %v1226 = vunpack.c.h.b16 %v589
          %v1227 = vunpack.c.l.b16 %v590
          %v1228 = vunpack.c.h.b16 %v590
          %v1229 = vunpack.c.l.b16 %v591
          %v1230 = vunpack.c.h.b16 %v591
          %v1231 = vunpack.c.l.b16 %v592
          %v1232 = vunpack.c.h.b16 %v592
          %v1233 = vunpack.c.l.b16 %v593
          %v1234 = vunpack.c.h.b16 %v593
          %v1235 = vunpack.c.l.b16 %v594
          %v1236 = vunpack.c.h.b16 %v594
          %v1237 = vunpack.c.l.b16 %v595
          %v1238 = vunpack.c.h.b16 %v595
          %v1239 = vunpack.c.l.b16 %v596
          %v1240 = vunpack.c.h.b16 %v596
          %v1241 = vunpack.c.l.b16 %v597
          %v1242 = vunpack.c.h.b16 %v597
          %v1243 = vunpack.c.l.b16 %v598
          %v1244 = vunpack.c.h.b16 %v598
          %v1245 = vunpack.c.l.b16 %v599
          %v1246 = vunpack.c.h.b16 %v599
          %v1247 = vunpack.c.l.b16 %v600
          %v1248 = vunpack.c.h.b16 %v600
          %v1249 = vunpack.c.l.b16 %v601
          %v1250 = vunpack.c.h.b16 %v601
          %v1251 = vunpack.c.l.b16 %v602
          %v1252 = vunpack.c.h.b16 %v602
          %v1253 = vunpack.c.l.b16 %v603
          %v1254 = vunpack.c.h.b16 %v603
          %v1255 = vunpack.c.l.b16 %v604
          %v1256 = vunpack.c.h.b16 %v604
          %v1257 = vunpack.c.l.b16 %v605
          %v1258 = vunpack.c.h.b16 %v605
          %v1259 = vunpack.c.l.b16 %v606
          %v1260 = vunpack.c.h.b16 %v606
          %v1261 = vunpack.c.l.b16 %v607
          %v1262 = vunpack.c.h.b16 %v607
          %v1263 = vunpack.c.l.b16 %v608
          %v1264 = vunpack.c.h.b16 %v608
          %v1265 = vunpack.c.l.b16 %v609
          %v1266 = vunpack.c.h.b16 %v609
          %v1267 = vunpack.c.l.b16 %v610
          %v1268 = vunpack.c.h.b16 %v610
          %v1269 = vunpack.c.l.b16 %v611
          %v1270 = vunpack.c.h.b16 %v611
          %v1271 = vunpack.c.l.b16 %v612
          %v1272 = vunpack.c.h.b16 %v612
          %v1273 = vunpack.c.l.b16 %v613
          %v1274 = vunpack.c.h.b16 %v613
          %v1275 = vunpack.c.l.b16 %v614
          %v1276 = vunpack.c.h.b16 %v614
          %v1277 = vunpack.c.l.b16 %v615
          %v1278 = vunpack.c.h.b16 %v615
          %v1279 = vunpack.c.l.b16 %v616
          %v1280 = vunpack.c.h.b16 %v616
          %v1281 = vunpack.c.l.b16 %v617
          %v1282 = vunpack.c.h.b16 %v617
          %v1283 = vunpack.c.l.b16 %v618
          %v1284 = vunpack.c.h.b16 %v618
          %v1285 = vunpack.c.l.b16 %v619
          %v1286 = vunpack.c.h.b16 %v619
          %v1287 = vunpack.c.l.b16 %v620
          %v1288 = vunpack.c.h.b16 %v620
          %v1289 = vunpack.c.l.b16 %v621
          %v1290 = vunpack.c.h.b16 %v621
          %v1291 = vunpack.c.l.b16 %v622
          %v1292 = vunpack.c.h.b16 %v622
          %v1293 = vunpack.c.l.b16 %v623
          %v1294 = vunpack.c.h.b16 %v623
          %v1295 = vunpack.c.l.b16 %v624
          %v1296 = vunpack.c.h.b16 %v624
          %v1297 = vunpack.c.l.b16 %v625
          %v1298 = vunpack.c.h.b16 %v625
          %v1299 = vunpack.c.l.b16 %v626
          %v1300 = vunpack.c.h.b16 %v626
          %v1301 = vunpack.c.l.b16 %v627
          %v1302 = vunpack.c.h.b16 %v627
          %v1303 = vunpack.c.l.b16 %v628
          %v1304 = vunpack.c.h.b16 %v628
          %v1305 = vunpack.c.l.b16 %v629
          %v1306 = vunpack.c.h.b16 %v629
          %v1307 = vunpack.c.l.b16 %v630
          %v1308 = vunpack.c.h.b16 %v630
          %v1309 = vunpack.c.l.b16 %v631
          %v1310 = vunpack.c.h.b16 %v631
          %v1311 = vunpack.c.l.b16 %v632
          %v1312 = vunpack.c.h.b16 %v632
          %v1313 = vunpack.c.l.b16 %v633
          %v1314 = vunpack.c.h.b16 %v633
          %v1315 = vunpack.c.l.b16 %v634
          %v1316 = vunpack.c.h.b16 %v634
          %v1317 = vunpack.c.l.b16 %v635
          %v1318 = vunpack.c.h.b16 %v635
          %v1319 = vunpack.c.l.b16 %v636
          %v1320 = vunpack.c.h.b16 %v636
          %v1321 = vunpack.c.l.b16 %v637
          %v1322 = vunpack.c.h.b16 %v637
          %v1323 = vunpack.c.l.b16 %v638
          %v1324 = vunpack.c.h.b16 %v638
          %v1325 = vunpack.c.l.b16 %v639
          %v1326 = vunpack.c.h.b16 %v639
          %v1327 = vunpack.c.l.b16 %v640
          %v1328 = vunpack.c.h.b16 %v640
          %v1329 = vunpack.c.l.b16 %v641
          %v1330 = vunpack.c.h.b16 %v641
          %v1331 = vunpack.c.l.b16 %v642
          %v1332 = vunpack.c.h.b16 %v642
          %v1333 = vunpack.c.l.b16 %v643
          %v1334 = vunpack.c.h.b16 %v643
          %v1335 = vunpack.c.l.b16 %v644
          %v1336 = vunpack.c.h.b16 %v644
          %v1337 = vunpack.c.l.b16 %v645
          %v1338 = vunpack.c.h.b16 %v645
          %v1339 = vunpack.c.l.b16 %v646
          %v1340 = vunpack.c.h.b16 %v646
          %v1341 = vunpack.c.l.b16 %v647
          %v1342 = vunpack.c.h.b16 %v647
          %v1343 = vunpack.c.l.b16 %v648
          %v1344 = vunpack.c.h.b16 %v648
          %v1345 = vunpack.c.l.b16 %v649
          %v1346 = vunpack.c.h.b16 %v649
          %v1347 = vunpack.c.l.b16 %v650
          %v1348 = vunpack.c.h.b16 %v650
          %v1349 = vunpack.c.l.b16 %v651
          %v1350 = vunpack.c.h.b16 %v651
          %v1351 = vunpack.c.l.b16 %v652
          %v1352 = vunpack.c.h.b16 %v652
          %v1353 = vunpack.c.l.b16 %v653
          %v1354 = vunpack.c.h.b16 %v653
          %v1355 = vunpack.c.l.b16 %v654
          %v1356 = vunpack.c.h.b16 %v654
          %v1357 = vunpack.c.l.b16 %v655
          %v1358 = vunpack.c.h.b16 %v655
          %v1359 = vunpack.c.l.b16 %v656
          %v1360 = vunpack.c.h.b16 %v656
          %v1361 = vunpack.c.l.b16 %v657
          %v1362 = vunpack.c.h.b16 %v657
          %v1363 = vunpack.c.l.b16 %v658
          %v1364 = vunpack.c.h.b16 %v658
          %v1365 = vunpack.c.l.b16 %v659
          %v1366 = vunpack.c.h.b16 %v659
          %v1367 = vunpack.c.l.b16 %v660
          %v1368 = vunpack.c.h.b16 %v660
          %v1369 = vunpack.c.l.b16 %v661
          %v1370 = vunpack.c.h.b16 %v661
          %v1371 = vunpack.c.l.b16 %v662
          %v1372 = vunpack.c.h.b16 %v662
          %v1373 = vunpack.c.l.b16 %v663
          %v1374 = vunpack.c.h.b16 %v663
          %v1375 = vunpack.c.l.b16 %v664
          %v1376 = vunpack.c.h.b16 %v664
          %v1377 = vunpack.c.l.b16 %v665
          %v1378 = vunpack.c.h.b16 %v665
          %v1379 = vunpack.c.l.b16 %v666
          %v1380 = vunpack.c.h.b16 %v666
          %v1381 = vunpack.c.l.b16 %v667
          %v1382 = vunpack.c.h.b16 %v667
          %v1383 = vunpack.c.l.b16 %v668
          %v1384 = vunpack.c.h.b16 %v668
          %v1385 = vunpack.c.l.b16 %v669
          %v1386 = vunpack.c.h.b16 %v669
          %v1387 = vunpack.c.l.b16 %v670
          %v1388 = vunpack.c.h.b16 %v670
          %v1389 = vunpack.c.l.b16 %v671
          %v1390 = vunpack.c.h.b16 %v671
          %v1391 = vunpack.c.l.b16 %v672
          %v1392 = vunpack.c.h.b16 %v672
          %v1393 = vunpack.c.l.b16 %v673
          %v1394 = vunpack.c.h.b16 %v673
          %v1395 = vunpack.c.l.b16 %v674
          %v1396 = vunpack.c.h.b16 %v674
          %v1397 = vunpack.c.l.b16 %v675
          %v1398 = vunpack.c.h.b16 %v675
          %v1399 = vunpack.c.l.b16 %v676
          %v1400 = vunpack.c.h.b16 %v676
          %v1401 = vunpack.c.l.b16 %v677
          %v1402 = vunpack.c.h.b16 %v677
          %v1403 = vunpack.c.l.b16 %v678
          %v1404 = vunpack.c.h.b16 %v678
          %v1405 = vunpack.c.l.b16 %v679
          %v1406 = vunpack.c.h.b16 %v679
          %v1407 = vunpack.c.l.b16 %v680
          %v1408 = vunpack.c.h.b16 %v680
          %v1409 = vunpack.c.l.b16 %v681
          %v1410 = vunpack.c.h.b16 %v681
          %v1411 = vunpack.c.l.b16 %v682
          %v1412 = vunpack.c.h.b16 %v682
          %v1413 = vunpack.c.l.b16 %v683
          %v1414 = vunpack.c.h.b16 %v683
          %v1415 = vunpack.c.l.b16 %v684
          %v1416 = vunpack.c.h.b16 %v684
          %v1417 = vunpack.c.l.b16 %v685
          %v1418 = vunpack.c.h.b16 %v685
          %v1419 = vunpack.c.l.b16 %v686
          %v1420 = vunpack.c.h.b16 %v686
          %v1421 = vunpack.c.l.b16 %v687
          %v1422 = vunpack.c.h.b16 %v687
          %v1423 = vunpack.c.l.b16 %v688
          %v1424 = vunpack.c.h.b16 %v688
          %v1425 = vunpack.c.l.b16 %v689
          %v1426 = vunpack.c.h.b16 %v689
          %v1427 = vunpack.c.l.b16 %v690
          %v1428 = vunpack.c.h.b16 %v690
          %v1429 = vunpack.c.l.b16 %v691
          %v1430 = vunpack.c.h.b16 %v691
          %v1431 = vunpack.c.l.b16 %v692
          %v1432 = vunpack.c.h.b16 %v692
          %v1433 = vunpack.c.l.b16 %v693
          %v1434 = vunpack.c.h.b16 %v693
          %v1435 = vunpack.c.l.b16 %v694
          %v1436 = vunpack.c.h.b16 %v694
          %v1437 = vunpack.c.l.b16 %v695
          %v1438 = vunpack.c.h.b16 %v695
          %v1439 = vunpack.c.l.b16 %v696
          %v1440 = vunpack.c.h.b16 %v696
          %v1441 = vunpack.c.l.b16 %v697
          %v1442 = vunpack.c.h.b16 %v697
          %v1443 = vunpack.c.l.b16 %v698
          %v1444 = vunpack.c.h.b16 %v698
          %v1445 = vunpack.c.l.b16 %v699
          %v1446 = vunpack.c.h.b16 %v699
          %v1447 = vunpack.c.l.b16 %v700
          %v1448 = vunpack.c.h.b16 %v700
          %v1449 = vunpack.c.l.b16 %v701
          %v1450 = vunpack.c.h.b16 %v701
          %v1451 = vunpack.c.l.b16 %v702
          %v1452 = vunpack.c.h.b16 %v702
          %v1453 = vunpack.c.l.b16 %v703
          %v1454 = vunpack.c.h.b16 %v703
          %v1455 = vunpack.c.l.b16 %v704
          %v1456 = vunpack.c.h.b16 %v704
          %v1457 = vunpack.c.l.b16 %v705
          %v1458 = vunpack.c.h.b16 %v705
          %v1459 = vunpack.c.l.b16 %v706
          %v1460 = vunpack.c.h.b16 %v706
          %v1461 = vunpack.c.l.b16 %v707
          %v1462 = vunpack.c.h.b16 %v707
          %v1463 = vunpack.c.l.b16 %v708
          %v1464 = vunpack.c.h.b16 %v708
          %v1465 = vunpack.c.l.b16 %v709
          %v1466 = vunpack.c.h.b16 %v709
          %v1467 = vunpack.c.l.b16 %v710
          %v1468 = vunpack.c.h.b16 %v710
          %v1469 = vunpack.c.l.b16 %v711
          %v1470 = vunpack.c.h.b16 %v711
          %v1471 = vunpack.c.l.b16 %v712
          %v1472 = vunpack.c.h.b16 %v712
          %v1473 = vunpack.c.l.b16 %v713
          %v1474 = vunpack.c.h.b16 %v713
          %v1475 = vunpack.c.l.b16 %v714
          %v1476 = vunpack.c.h.b16 %v714
          %v1477 = vunpack.c.l.b16 %v715
          %v1478 = vunpack.c.h.b16 %v715
          %v1479 = vunpack.c.l.b16 %v716
          %v1480 = vunpack.c.h.b16 %v716
          %v1481 = vunpack.c.l.b16 %v717
          %v1482 = vunpack.c.h.b16 %v717
          %v1483 = vunpack.c.l.b16 %v718
          %v1484 = vunpack.c.h.b16 %v718
          %v1485 = vunpack.c.l.b16 %v719
          %v1486 = vunpack.c.h.b16 %v719
          %v1487 = vunpack.c.l.b16 %v720
          %v1488 = vunpack.c.h.b16 %v720
          %v1489 = vunpack.c.l.b16 %v721
          %v1490 = vunpack.c.h.b16 %v721
          %v1491 = vunpack.c.l.b16 %v722
          %v1492 = vunpack.c.h.b16 %v722
          %v1493 = vunpack.c.l.b16 %v723
          %v1494 = vunpack.c.h.b16 %v723
          %v1495 = vunpack.c.l.b16 %v724
          %v1496 = vunpack.c.h.b16 %v724
          %v1497 = vunpack.c.l.b16 %v725
          %v1498 = vunpack.c.h.b16 %v725
          %v1499 = vunpack.c.l.b16 %v726
          %v1500 = vunpack.c.h.b16 %v726
          %v1501 = vunpack.c.l.b16 %v727
          %v1502 = vunpack.c.h.b16 %v727
          %v1503 = vunpack.c.l.b16 %v728
          %v1504 = vunpack.c.h.b16 %v728
          %v1505 = vunpack.c.l.b16 %v729
          %v1506 = vunpack.c.h.b16 %v729
          %v1507 = vunpack.c.l.b16 %v730
          %v1508 = vunpack.c.h.b16 %v730
          %v1509 = vunpack.c.l.b16 %v731
          %v1510 = vunpack.c.h.b16 %v731
          %v1511 = vunpack.c.l.b16 %v732
          %v1512 = vunpack.c.h.b16 %v732
          %v1513 = vunpack.c.l.b16 %v733
          %v1514 = vunpack.c.h.b16 %v733
          %v1515 = vunpack.c.l.b16 %v734
          %v1516 = vunpack.c.h.b16 %v734
          %v1517 = vunpack.c.l.b16 %v735
          %v1518 = vunpack.c.h.b16 %v735
          %v1519 = vunpack.c.l.b16 %v736
          %v1520 = vunpack.c.h.b16 %v736
          %v1521 = vunpack.c.l.b16 %v737
          %v1522 = vunpack.c.h.b16 %v737
          %v1523 = vunpack.c.l.b16 %v738
          %v1524 = vunpack.c.h.b16 %v738
          %v1525 = vunpack.c.l.b16 %v739
          %v1526 = vunpack.c.h.b16 %v739
          %v1527 = vunpack.c.l.b16 %v740
          %v1528 = vunpack.c.h.b16 %v740
          %v1529 = vpack.c.b16 %v1025, %v1017
          %v1530 = vpack.c.b16 %v1026, %v1018
          %v1531 = vpack.c.b16 %v1027, %v1019
          %v1532 = vpack.c.b16 %v1028, %v1020
          %v1533 = vpack.c.b16 %v1029, %v1021
          %v1534 = vpack.c.b16 %v1030, %v1022
          %v1535 = vpack.c.b16 %v1031, %v1023
          %v1536 = vpack.c.b16 %v1032, %v1024
          %v1537 = vpack.c.b16 %v1041, %v1033
          %v1538 = vpack.c.b16 %v1042, %v1034
          %v1539 = vpack.c.b16 %v1043, %v1035
          %v1540 = vpack.c.b16 %v1044, %v1036
          %v1541 = vpack.c.b16 %v1045, %v1037
          %v1542 = vpack.c.b16 %v1046, %v1038
          %v1543 = vpack.c.b16 %v1047, %v1039
          %v1544 = vpack.c.b16 %v1048, %v1040
          %v1545 = vpack.c.b16 %v1057, %v1049
          %v1546 = vpack.c.b16 %v1058, %v1050
          %v1547 = vpack.c.b16 %v1059, %v1051
          %v1548 = vpack.c.b16 %v1060, %v1052
          %v1549 = vpack.c.b16 %v1061, %v1053
          %v1550 = vpack.c.b16 %v1062, %v1054
          %v1551 = vpack.c.b16 %v1063, %v1055
          %v1552 = vpack.c.b16 %v1064, %v1056
          %v1553 = vpack.c.b16 %v1073, %v1065
          %v1554 = vpack.c.b16 %v1074, %v1066
          %v1555 = vpack.c.b16 %v1075, %v1067
          %v1556 = vpack.c.b16 %v1076, %v1068
          %v1557 = vpack.c.b16 %v1077, %v1069
          %v1558 = vpack.c.b16 %v1078, %v1070
          %v1559 = vpack.c.b16 %v1079, %v1071
          %v1560 = vpack.c.b16 %v1080, %v1072
          %v1561 = vpack.c.b16 %v1089, %v1081
          %v1562 = vpack.c.b16 %v1090, %v1082
          %v1563 = vpack.c.b16 %v1091, %v1083
          %v1564 = vpack.c.b16 %v1092, %v1084
          %v1565 = vpack.c.b16 %v1093, %v1085
          %v1566 = vpack.c.b16 %v1094, %v1086
          %v1567 = vpack.c.b16 %v1095, %v1087
          %v1568 = vpack.c.b16 %v1096, %v1088
          %v1569 = vpack.c.b16 %v1105, %v1097
          %v1570 = vpack.c.b16 %v1106, %v1098
          %v1571 = vpack.c.b16 %v1107, %v1099
          %v1572 = vpack.c.b16 %v1108, %v1100
          %v1573 = vpack.c.b16 %v1109, %v1101
          %v1574 = vpack.c.b16 %v1110, %v1102
          %v1575 = vpack.c.b16 %v1111, %v1103
          %v1576 = vpack.c.b16 %v1112, %v1104
          %v1577 = vpack.c.b16 %v1121, %v1113
          %v1578 = vpack.c.b16 %v1122, %v1114
          %v1579 = vpack.c.b16 %v1123, %v1115
          %v1580 = vpack.c.b16 %v1124, %v1116
          %v1581 = vpack.c.b16 %v1125, %v1117
          %v1582 = vpack.c.b16 %v1126, %v1118
          %v1583 = vpack.c.b16 %v1127, %v1119
          %v1584 = vpack.c.b16 %v1128, %v1120
          %v1585 = vpack.c.b16 %v1137, %v1129
          %v1586 = vpack.c.b16 %v1138, %v1130
          %v1587 = vpack.c.b16 %v1139, %v1131
          %v1588 = vpack.c.b16 %v1140, %v1132
          %v1589 = vpack.c.b16 %v1141, %v1133
          %v1590 = vpack.c.b16 %v1142, %v1134
          %v1591 = vpack.c.b16 %v1143, %v1135
          %v1592 = vpack.c.b16 %v1144, %v1136
          %v1593 = vpack.c.b16 %v1153, %v1145
          %v1594 = vpack.c.b16 %v1154, %v1146
          %v1595 = vpack.c.b16 %v1155, %v1147
          %v1596 = vpack.c.b16 %v1156, %v1148
          %v1597 = vpack.c.b16 %v1157, %v1149
          %v1598 = vpack.c.b16 %v1158, %v1150
          %v1599 = vpack.c.b16 %v1159, %v1151
          %v1600 = vpack.c.b16 %v1160, %v1152
          %v1601 = vpack.c.b16 %v1169, %v1161
          %v1602 = vpack.c.b16 %v1170, %v1162
          %v1603 = vpack.c.b16 %v1171, %v1163
          %v1604 = vpack.c.b16 %v1172, %v1164
          %v1605 = vpack.c.b16 %v1173, %v1165
          %v1606 = vpack.c.b16 %v1174, %v1166
          %v1607 = vpack.c.b16 %v1175, %v1167
          %v1608 = vpack.c.b16 %v1176, %v1168
          %v1609 = vpack.c.b16 %v1185, %v1177
          %v1610 = vpack.c.b16 %v1186, %v1178
          %v1611 = vpack.c.b16 %v1187, %v1179
          %v1612 = vpack.c.b16 %v1188, %v1180
          %v1613 = vpack.c.b16 %v1189, %v1181
          %v1614 = vpack.c.b16 %v1190, %v1182
          %v1615 = vpack.c.b16 %v1191, %v1183
          %v1616 = vpack.c.b16 %v1192, %v1184
          %v1617 = vpack.c.b16 %v1201, %v1193
          %v1618 = vpack.c.b16 %v1202, %v1194
          %v1619 = vpack.c.b16 %v1203, %v1195
          %v1620 = vpack.c.b16 %v1204, %v1196
          %v1621 = vpack.c.b16 %v1205, %v1197
          %v1622 = vpack.c.b16 %v1206, %v1198
          %v1623 = vpack.c.b16 %v1207, %v1199
          %v1624 = vpack.c.b16 %v1208, %v1200
          %v1625 = vpack.c.b16 %v1217, %v1209
          %v1626 = vpack.c.b16 %v1218, %v1210
          %v1627 = vpack.c.b16 %v1219, %v1211
          %v1628 = vpack.c.b16 %v1220, %v1212
          %v1629 = vpack.c.b16 %v1221, %v1213
          %v1630 = vpack.c.b16 %v1222, %v1214
          %v1631 = vpack.c.b16 %v1223, %v1215
          %v1632 = vpack.c.b16 %v1224, %v1216
          %v1633 = vpack.c.b16 %v1233, %v1225
          %v1634 = vpack.c.b16 %v1234, %v1226
          %v1635 = vpack.c.b16 %v1235, %v1227
          %v1636 = vpack.c.b16 %v1236, %v1228
          %v1637 = vpack.c.b16 %v1237, %v1229
          %v1638 = vpack.c.b16 %v1238, %v1230
          %v1639 = vpack.c.b16 %v1239, %v1231
          %v1640 = vpack.c.b16 %v1240, %v1232
          %v1641 = vpack.c.b16 %v1249, %v1241
          %v1642 = vpack.c.b16 %v1250, %v1242
          %v1643 = vpack.c.b16 %v1251, %v1243
          %v1644 = vpack.c.b16 %v1252, %v1244
          %v1645 = vpack.c.b16 %v1253, %v1245
          %v1646 = vpack.c.b16 %v1254, %v1246
          %v1647 = vpack.c.b16 %v1255, %v1247
          %v1648 = vpack.c.b16 %v1256, %v1248
          %v1649 = vpack.c.b16 %v1265, %v1257
          %v1650 = vpack.c.b16 %v1266, %v1258
          %v1651 = vpack.c.b16 %v1267, %v1259
          %v1652 = vpack.c.b16 %v1268, %v1260
          %v1653 = vpack.c.b16 %v1269, %v1261
          %v1654 = vpack.c.b16 %v1270, %v1262
          %v1655 = vpack.c.b16 %v1271, %v1263
          %v1656 = vpack.c.b16 %v1272, %v1264
          %v1657 = vpack.c.b16 %v1281, %v1273
          %v1658 = vpack.c.b16 %v1282, %v1274
          %v1659 = vpack.c.b16 %v1283, %v1275
          %v1660 = vpack.c.b16 %v1284, %v1276
          %v1661 = vpack.c.b16 %v1285, %v1277
          %v1662 = vpack.c.b16 %v1286, %v1278
          %v1663 = vpack.c.b16 %v1287, %v1279
          %v1664 = vpack.c.b16 %v1288, %v1280
          %v1665 = vpack.c.b16 %v1297, %v1289
          %v1666 = vpack.c.b16 %v1298, %v1290
          %v1667 = vpack.c.b16 %v1299, %v1291
          %v1668 = vpack.c.b16 %v1300, %v1292
          %v1669 = vpack.c.b16 %v1301, %v1293
          %v1670 = vpack.c.b16 %v1302, %v1294
          %v1671 = vpack.c.b16 %v1303, %v1295
          %v1672 = vpack.c.b16 %v1304, %v1296
          %v1673 = vpack.c.b16 %v1313, %v1305
          %v1674 = vpack.c.b16 %v1314, %v1306
          %v1675 = vpack.c.b16 %v1315, %v1307
          %v1676 = vpack.c.b16 %v1316, %v1308
          %v1677 = vpack.c.b16 %v1317, %v1309
          %v1678 = vpack.c.b16 %v1318, %v1310
          %v1679 = vpack.c.b16 %v1319, %v1311
          %v1680 = vpack.c.b16 %v1320, %v1312
          %v1681 = vpack.c.b16 %v1329, %v1321
          %v1682 = vpack.c.b16 %v1330, %v1322
          %v1683 = vpack.c.b16 %v1331, %v1323
          %v1684 = vpack.c.b16 %v1332, %v1324
          %v1685 = vpack.c.b16 %v1333, %v1325
          %v1686 = vpack.c.b16 %v1334, %v1326
          %v1687 = vpack.c.b16 %v1335, %v1327
          %v1688 = vpack.c.b16 %v1336, %v1328
          %v1689 = vpack.c.b16 %v1345, %v1337
          %v1690 = vpack.c.b16 %v1346, %v1338
          %v1691 = vpack.c.b16 %v1347, %v1339
          %v1692 = vpack.c.b16 %v1348, %v1340
          %v1693 = vpack.c.b16 %v1349, %v1341
          %v1694 = vpack.c.b16 %v1350, %v1342
          %v1695 = vpack.c.b16 %v1351, %v1343
          %v1696 = vpack.c.b16 %v1352, %v1344
          %v1697 = vpack.c.b16 %v1361, %v1353
          %v1698 = vpack.c.b16 %v1362, %v1354
          %v1699 = vpack.c.b16 %v1363, %v1355
          %v1700 = vpack.c.b16 %v1364, %v1356
          %v1701 = vpack.c.b16 %v1365, %v1357
          %v1702 = vpack.c.b16 %v1366, %v1358
          %v1703 = vpack.c.b16 %v1367, %v1359
          %v1704 = vpack.c.b16 %v1368, %v1360
          %v1705 = vpack.c.b16 %v1377, %v1369
          %v1706 = vpack.c.b16 %v1378, %v1370
          %v1707 = vpack.c.b16 %v1379, %v1371
          %v1708 = vpack.c.b16 %v1380, %v1372
          %v1709 = vpack.c.b16 %v1381, %v1373
          %v1710 = vpack.c.b16 %v1382, %v1374
          %v1711 = vpack.c.b16 %v1383, %v1375
          %v1712 = vpack.c.b16 %v1384, %v1376
          %v1713 = vpack.c.b16 %v1393, %v1385
          %v1714 = vpack.c.b16 %v1394, %v1386
          %v1715 = vpack.c.b16 %v1395, %v1387
          %v1716 = vpack.c.b16 %v1396, %v1388
          %v1717 = vpack.c.b16 %v1397, %v1389
          %v1718 = vpack.c.b16 %v1398, %v1390
          %v1719 = vpack.c.b16 %v1399, %v1391
          %v1720 = vpack.c.b16 %v1400, %v1392
          %v1721 = vpack.c.b16 %v1409, %v1401
          %v1722 = vpack.c.b16 %v1410, %v1402
          %v1723 = vpack.c.b16 %v1411, %v1403
          %v1724 = vpack.c.b16 %v1412, %v1404
          %v1725 = vpack.c.b16 %v1413, %v1405
          %v1726 = vpack.c.b16 %v1414, %v1406
          %v1727 = vpack.c.b16 %v1415, %v1407
          %v1728 = vpack.c.b16 %v1416, %v1408
          %v1729 = vpack.c.b16 %v1425, %v1417
          %v1730 = vpack.c.b16 %v1426, %v1418
          %v1731 = vpack.c.b16 %v1427, %v1419
          %v1732 = vpack.c.b16 %v1428, %v1420
          %v1733 = vpack.c.b16 %v1429, %v1421
          %v1734 = vpack.c.b16 %v1430, %v1422
          %v1735 = vpack.c.b16 %v1431, %v1423
          %v1736 = vpack.c.b16 %v1432, %v1424
          %v1737 = vpack.c.b16 %v1441, %v1433
          %v1738 = vpack.c.b16 %v1442, %v1434
          %v1739 = vpack.c.b16 %v1443, %v1435
          %v1740 = vpack.c.b16 %v1444, %v1436
          %v1741 = vpack.c.b16 %v1445, %v1437
          %v1742 = vpack.c.b16 %v1446, %v1438
          %v1743 = vpack.c.b16 %v1447, %v1439
          %v1744 = vpack.c.b16 %v1448, %v1440
          %v1745 = vpack.c.b16 %v1457, %v1449
          %v1746 = vpack.c.b16 %v1458, %v1450
          %v1747 = vpack.c.b16 %v1459, %v1451
          %v1748 = vpack.c.b16 %v1460, %v1452
          %v1749 = vpack.c.b16 %v1461, %v1453
          %v1750 = vpack.c.b16 %v1462, %v1454
          %v1751 = vpack.c.b16 %v1463, %v1455
          %v1752 = vpack.c.b16 %v1464, %v1456
          %v1753 = vpack.c.b16 %v1473, %v1465
          %v1754 = vpack.c.b16 %v1474, %v1466
          %v1755 = vpack.c.b16 %v1475, %v1467
          %v1756 = vpack.c.b16 %v1476, %v1468
          %v1757 = vpack.c.b16 %v1477, %v1469
          %v1758 = vpack.c.b16 %v1478, %v1470
          %v1759 = vpack.c.b16 %v1479, %v1471
          %v1760 = vpack.c.b16 %v1480, %v1472
          %v1761 = vpack.c.b16 %v1489, %v1481
          %v1762 = vpack.c.b16 %v1490, %v1482
          %v1763 = vpack.c.b16 %v1491, %v1483
          %v1764 = vpack.c.b16 %v1492, %v1484
          %v1765 = vpack.c.b16 %v1493, %v1485
          %v1766 = vpack.c.b16 %v1494, %v1486
          %v1767 = vpack.c.b16 %v1495, %v1487
          %v1768 = vpack.c.b16 %v1496, %v1488
          %v1769 = vpack.c.b16 %v1505, %v1497
          %v1770 = vpack.c.b16 %v1506, %v1498
          %v1771 = vpack.c.b16 %v1507, %v1499
          %v1772 = vpack.c.b16 %v1508, %v1500
          %v1773 = vpack.c.b16 %v1509, %v1501
          %v1774 = vpack.c.b16 %v1510, %v1502
          %v1775 = vpack.c.b16 %v1511, %v1503
          %v1776 = vpack.c.b16 %v1512, %v1504
          %v1777 = vpack.c.b16 %v1521, %v1513
          %v1778 = vpack.c.b16 %v1522, %v1514
          %v1779 = vpack.c.b16 %v1523, %v1515
          %v1780 = vpack.c.b16 %v1524, %v1516
          %v1781 = vpack.c.b16 %v1525, %v1517
          %v1782 = vpack.c.b16 %v1526, %v1518
          %v1783 = vpack.c.b16 %v1527, %v1519
          %v1784 = vpack.c.b16 %v1528, %v1520
          %2041 = vmatpush.bf16.msra.mxu0 %v1585
          %2042 = vmatpush.bf16.msra.mxu0 %v1577
          %2043 = vmatpush.bf16.msra.mxu0 %v1569
          %2044 = vmatpush.bf16.msra.mxu0 %v1561
          %2045 = vmatpush.bf16.msra.mxu0 %v1553
          %2046 = vmatpush.bf16.msra.mxu0 %v1545
          %2047 = vmatpush.bf16.msra.mxu0 %v1537
          %2048 = vmatpush.bf16.msra.mxu0 %v1529
          %2049 = vmatmul.bf16.gmra.mxu0 %v753
          %v2050 = vpop.f32.mrf.mxu0
          %v2051 = vadd.f32 0.0, %v2050
          %v2052 = vpop.f32.mrf.mxu0
          %v2053 = vadd.f32 0.0, %v2052
          %2054 = vdwg.mxu0
          %2055 = vmatpush.bf16.msra.mxu0 %v1649
          %2056 = vmatpush.bf16.msra.mxu0 %v1641
          %2057 = vmatpush.bf16.msra.mxu0 %v1633
          %2058 = vmatpush.bf16.msra.mxu0 %v1625
          %2059 = vmatpush.bf16.msra.mxu0 %v1617
          %2060 = vmatpush.bf16.msra.mxu0 %v1609
          %2061 = vmatpush.bf16.msra.mxu0 %v1601
          %2062 = vmatpush.bf16.msra.mxu0 %v1593
          %2063 = vmatmul.bf16.gmra.mxu0 %v754
          %v2064 = vpop.f32.mrf.mxu0
          %v2065 = vadd.f32 %v2051, %v2064
          %v2066 = vpop.f32.mrf.mxu0
          %v2067 = vadd.f32 %v2053, %v2066
          %2068 = vdwg.mxu0
          %2069 = vmatpush.bf16.msra.mxu0 %v1713
          %2070 = vmatpush.bf16.msra.mxu0 %v1705
          %2071 = vmatpush.bf16.msra.mxu0 %v1697
          %2072 = vmatpush.bf16.msra.mxu0 %v1689
          %2073 = vmatpush.bf16.msra.mxu0 %v1681
          %2074 = vmatpush.bf16.msra.mxu0 %v1673
          %2075 = vmatpush.bf16.msra.mxu0 %v1665
          %2076 = vmatpush.bf16.msra.mxu0 %v1657
          %2077 = vmatmul.bf16.gmra.mxu0 %v755
          %v2078 = vpop.f32.mrf.mxu0
          %v2079 = vadd.f32 %v2065, %v2078
          %v2080 = vpop.f32.mrf.mxu0
          %v2081 = vadd.f32 %v2067, %v2080
          %2082 = vdwg.mxu0
          %2083 = vmatpush.bf16.msra.mxu0 %v1777
          %2084 = vmatpush.bf16.msra.mxu0 %v1769
          %2085 = vmatpush.bf16.msra.mxu0 %v1761
          %2086 = vmatpush.bf16.msra.mxu0 %v1753
          %2087 = vmatpush.bf16.msra.mxu0 %v1745
          %2088 = vmatpush.bf16.msra.mxu0 %v1737
          %2089 = vmatpush.bf16.msra.mxu0 %v1729
          %2090 = vmatpush.bf16.msra.mxu0 %v1721
          %2091 = vmatmul.bf16.gmra.mxu0 %v756
          %v2092 = vpop.f32.mrf.mxu0
          %v2093 = vadd.f32 %v2079, %v2092
          %v2094 = vpop.f32.mrf.mxu0
          %v2095 = vadd.f32 %v2081, %v2094
          %2096 = vdwg.mxu0
          %2097 = vmatpush.bf16.msra.mxu0 %v1586
          %2098 = vmatpush.bf16.msra.mxu0 %v1578
          %2099 = vmatpush.bf16.msra.mxu0 %v1570
          %2100 = vmatpush.bf16.msra.mxu0 %v1562
          %2101 = vmatpush.bf16.msra.mxu0 %v1554
          %2102 = vmatpush.bf16.msra.mxu0 %v1546
          %2103 = vmatpush.bf16.msra.mxu0 %v1538
          %2104 = vmatpush.bf16.msra.mxu0 %v1530
          %2105 = vmatmul.bf16.gmra.mxu0 %v753
          %v2106 = vpop.f32.mrf.mxu0
          %v2107 = vadd.f32 0.0, %v2106
          %v2108 = vpop.f32.mrf.mxu0
          %v2109 = vadd.f32 0.0, %v2108
          %2110 = vdwg.mxu0
          %2111 = vmatpush.bf16.msra.mxu0 %v1650
          %2112 = vmatpush.bf16.msra.mxu0 %v1642
          %2113 = vmatpush.bf16.msra.mxu0 %v1634
          %2114 = vmatpush.bf16.msra.mxu0 %v1626
          %2115 = vmatpush.bf16.msra.mxu0 %v1618
          %2116 = vmatpush.bf16.msra.mxu0 %v1610
          %2117 = vmatpush.bf16.msra.mxu0 %v1602
          %2118 = vmatpush.bf16.msra.mxu0 %v1594
          %2119 = vmatmul.bf16.gmra.mxu0 %v754
          %v2120 = vpop.f32.mrf.mxu0
          %v2121 = vadd.f32 %v2107, %v2120
          %v2122 = vpop.f32.mrf.mxu0
          %v2123 = vadd.f32 %v2109, %v2122
          %2124 = vdwg.mxu0
          %2125 = vmatpush.bf16.msra.mxu0 %v1714
          %2126 = vmatpush.bf16.msra.mxu0 %v1706
          %2127 = vmatpush.bf16.msra.mxu0 %v1698
          %2128 = vmatpush.bf16.msra.mxu0 %v1690
          %2129 = vmatpush.bf16.msra.mxu0 %v1682
          %2130 = vmatpush.bf16.msra.mxu0 %v1674
          %2131 = vmatpush.bf16.msra.mxu0 %v1666
          %2132 = vmatpush.bf16.msra.mxu0 %v1658
          %2133 = vmatmul.bf16.gmra.mxu0 %v755
          %v2134 = vpop.f32.mrf.mxu0
          %v2135 = vadd.f32 %v2121, %v2134
          %v2136 = vpop.f32.mrf.mxu0
          %v2137 = vadd.f32 %v2123, %v2136
          %2138 = vdwg.mxu0
          %2139 = vmatpush.bf16.msra.mxu0 %v1778
          %2140 = vmatpush.bf16.msra.mxu0 %v1770
          %2141 = vmatpush.bf16.msra.mxu0 %v1762
          %2142 = vmatpush.bf16.msra.mxu0 %v1754
          %2143 = vmatpush.bf16.msra.mxu0 %v1746
          %2144 = vmatpush.bf16.msra.mxu0 %v1738
          %2145 = vmatpush.bf16.msra.mxu0 %v1730
          %2146 = vmatpush.bf16.msra.mxu0 %v1722
          %2147 = vmatmul.bf16.gmra.mxu0 %v756
          %v2148 = vpop.f32.mrf.mxu0
          %v2149 = vadd.f32 %v2135, %v2148
          %v2150 = vpop.f32.mrf.mxu0
          %v2151 = vadd.f32 %v2137, %v2150
          %2152 = vdwg.mxu0
          %2153 = vmatpush.bf16.msra.mxu0 %v1587
          %2154 = vmatpush.bf16.msra.mxu0 %v1579
          %2155 = vmatpush.bf16.msra.mxu0 %v1571
          %2156 = vmatpush.bf16.msra.mxu0 %v1563
          %2157 = vmatpush.bf16.msra.mxu0 %v1555
          %2158 = vmatpush.bf16.msra.mxu0 %v1547
          %2159 = vmatpush.bf16.msra.mxu0 %v1539
          %2160 = vmatpush.bf16.msra.mxu0 %v1531
          %2161 = vmatmul.bf16.gmra.mxu0 %v753
          %v2162 = vpop.f32.mrf.mxu0
          %v2163 = vadd.f32 0.0, %v2162
          %v2164 = vpop.f32.mrf.mxu0
          %v2165 = vadd.f32 0.0, %v2164
          %2166 = vdwg.mxu0
          %2167 = vmatpush.bf16.msra.mxu0 %v1651
          %2168 = vmatpush.bf16.msra.mxu0 %v1643
          %2169 = vmatpush.bf16.msra.mxu0 %v1635
          %2170 = vmatpush.bf16.msra.mxu0 %v1627
          %2171 = vmatpush.bf16.msra.mxu0 %v1619
          %2172 = vmatpush.bf16.msra.mxu0 %v1611
          %2173 = vmatpush.bf16.msra.mxu0 %v1603
          %2174 = vmatpush.bf16.msra.mxu0 %v1595
          %2175 = vmatmul.bf16.gmra.mxu0 %v754
          %v2176 = vpop.f32.mrf.mxu0
          %v2177 = vadd.f32 %v2163, %v2176
          %v2178 = vpop.f32.mrf.mxu0
          %v2179 = vadd.f32 %v2165, %v2178
          %2180 = vdwg.mxu0
          %2181 = vmatpush.bf16.msra.mxu0 %v1715
          %2182 = vmatpush.bf16.msra.mxu0 %v1707
          %2183 = vmatpush.bf16.msra.mxu0 %v1699
          %2184 = vmatpush.bf16.msra.mxu0 %v1691
          %2185 = vmatpush.bf16.msra.mxu0 %v1683
          %2186 = vmatpush.bf16.msra.mxu0 %v1675
          %2187 = vmatpush.bf16.msra.mxu0 %v1667
          %2188 = vmatpush.bf16.msra.mxu0 %v1659
          %2189 = vmatmul.bf16.gmra.mxu0 %v755
          %v2190 = vpop.f32.mrf.mxu0
          %v2191 = vadd.f32 %v2177, %v2190
          %v2192 = vpop.f32.mrf.mxu0
          %v2193 = vadd.f32 %v2179, %v2192
          %2194 = vdwg.mxu0
          %2195 = vmatpush.bf16.msra.mxu0 %v1779
          %2196 = vmatpush.bf16.msra.mxu0 %v1771
          %2197 = vmatpush.bf16.msra.mxu0 %v1763
          %2198 = vmatpush.bf16.msra.mxu0 %v1755
          %2199 = vmatpush.bf16.msra.mxu0 %v1747
          %2200 = vmatpush.bf16.msra.mxu0 %v1739
          %2201 = vmatpush.bf16.msra.mxu0 %v1731
          %2202 = vmatpush.bf16.msra.mxu0 %v1723
          %2203 = vmatmul.bf16.gmra.mxu0 %v756
          %v2204 = vpop.f32.mrf.mxu0
          %v2205 = vadd.f32 %v2191, %v2204
          %v2206 = vpop.f32.mrf.mxu0
          %v2207 = vadd.f32 %v2193, %v2206
          %2208 = vdwg.mxu0
          %2209 = vmatpush.bf16.msra.mxu0 %v1588
          %2210 = vmatpush.bf16.msra.mxu0 %v1580
          %2211 = vmatpush.bf16.msra.mxu0 %v1572
          %2212 = vmatpush.bf16.msra.mxu0 %v1564
          %2213 = vmatpush.bf16.msra.mxu0 %v1556
          %2214 = vmatpush.bf16.msra.mxu0 %v1548
          %2215 = vmatpush.bf16.msra.mxu0 %v1540
          %2216 = vmatpush.bf16.msra.mxu0 %v1532
          %2217 = vmatmul.bf16.gmra.mxu0 %v753
          %v2218 = vpop.f32.mrf.mxu0
          %v2219 = vadd.f32 0.0, %v2218
          %v2220 = vpop.f32.mrf.mxu0
          %v2221 = vadd.f32 0.0, %v2220
          %2222 = vdwg.mxu0
          %2223 = vmatpush.bf16.msra.mxu0 %v1652
          %2224 = vmatpush.bf16.msra.mxu0 %v1644
          %2225 = vmatpush.bf16.msra.mxu0 %v1636
          %2226 = vmatpush.bf16.msra.mxu0 %v1628
          %2227 = vmatpush.bf16.msra.mxu0 %v1620
          %2228 = vmatpush.bf16.msra.mxu0 %v1612
          %2229 = vmatpush.bf16.msra.mxu0 %v1604
          %2230 = vmatpush.bf16.msra.mxu0 %v1596
          %2231 = vmatmul.bf16.gmra.mxu0 %v754
          %v2232 = vpop.f32.mrf.mxu0
          %v2233 = vadd.f32 %v2219, %v2232
          %v2234 = vpop.f32.mrf.mxu0
          %v2235 = vadd.f32 %v2221, %v2234
          %2236 = vdwg.mxu0
          %2237 = vmatpush.bf16.msra.mxu0 %v1716
          %2238 = vmatpush.bf16.msra.mxu0 %v1708
          %2239 = vmatpush.bf16.msra.mxu0 %v1700
          %2240 = vmatpush.bf16.msra.mxu0 %v1692
          %2241 = vmatpush.bf16.msra.mxu0 %v1684
          %2242 = vmatpush.bf16.msra.mxu0 %v1676
          %2243 = vmatpush.bf16.msra.mxu0 %v1668
          %2244 = vmatpush.bf16.msra.mxu0 %v1660
          %2245 = vmatmul.bf16.gmra.mxu0 %v755
          %v2246 = vpop.f32.mrf.mxu0
          %v2247 = vadd.f32 %v2233, %v2246
          %v2248 = vpop.f32.mrf.mxu0
          %v2249 = vadd.f32 %v2235, %v2248
          %2250 = vdwg.mxu0
          %2251 = vmatpush.bf16.msra.mxu0 %v1780
          %2252 = vmatpush.bf16.msra.mxu0 %v1772
          %2253 = vmatpush.bf16.msra.mxu0 %v1764
          %2254 = vmatpush.bf16.msra.mxu0 %v1756
          %2255 = vmatpush.bf16.msra.mxu0 %v1748
          %2256 = vmatpush.bf16.msra.mxu0 %v1740
          %2257 = vmatpush.bf16.msra.mxu0 %v1732
          %2258 = vmatpush.bf16.msra.mxu0 %v1724
          %2259 = vmatmul.bf16.gmra.mxu0 %v756
          %v2260 = vpop.f32.mrf.mxu0
          %v2261 = vadd.f32 %v2247, %v2260
          %v2262 = vpop.f32.mrf.mxu0
          %v2263 = vadd.f32 %v2249, %v2262
          %2264 = vdwg.mxu0
          %2265 = vmatpush.bf16.msra.mxu0 %v1589
          %2266 = vmatpush.bf16.msra.mxu0 %v1581
          %2267 = vmatpush.bf16.msra.mxu0 %v1573
          %2268 = vmatpush.bf16.msra.mxu0 %v1565
          %2269 = vmatpush.bf16.msra.mxu0 %v1557
          %2270 = vmatpush.bf16.msra.mxu0 %v1549
          %2271 = vmatpush.bf16.msra.mxu0 %v1541
          %2272 = vmatpush.bf16.msra.mxu0 %v1533
          %2273 = vmatmul.bf16.gmra.mxu0 %v753
          %v2274 = vpop.f32.mrf.mxu0
          %v2275 = vadd.f32 0.0, %v2274
          %v2276 = vpop.f32.mrf.mxu0
          %v2277 = vadd.f32 0.0, %v2276
          %2278 = vdwg.mxu0
          %2279 = vmatpush.bf16.msra.mxu0 %v1653
          %2280 = vmatpush.bf16.msra.mxu0 %v1645
          %2281 = vmatpush.bf16.msra.mxu0 %v1637
          %2282 = vmatpush.bf16.msra.mxu0 %v1629
          %2283 = vmatpush.bf16.msra.mxu0 %v1621
          %2284 = vmatpush.bf16.msra.mxu0 %v1613
          %2285 = vmatpush.bf16.msra.mxu0 %v1605
          %2286 = vmatpush.bf16.msra.mxu0 %v1597
          %2287 = vmatmul.bf16.gmra.mxu0 %v754
          %v2288 = vpop.f32.mrf.mxu0
          %v2289 = vadd.f32 %v2275, %v2288
          %v2290 = vpop.f32.mrf.mxu0
          %v2291 = vadd.f32 %v2277, %v2290
          %2292 = vdwg.mxu0
          %2293 = vmatpush.bf16.msra.mxu0 %v1717
          %2294 = vmatpush.bf16.msra.mxu0 %v1709
          %2295 = vmatpush.bf16.msra.mxu0 %v1701
          %2296 = vmatpush.bf16.msra.mxu0 %v1693
          %2297 = vmatpush.bf16.msra.mxu0 %v1685
          %2298 = vmatpush.bf16.msra.mxu0 %v1677
          %2299 = vmatpush.bf16.msra.mxu0 %v1669
          %2300 = vmatpush.bf16.msra.mxu0 %v1661
          %2301 = vmatmul.bf16.gmra.mxu0 %v755
          %v2302 = vpop.f32.mrf.mxu0
          %v2303 = vadd.f32 %v2289, %v2302
          %v2304 = vpop.f32.mrf.mxu0
          %v2305 = vadd.f32 %v2291, %v2304
          %2306 = vdwg.mxu0
          %2307 = vmatpush.bf16.msra.mxu0 %v1781
          %2308 = vmatpush.bf16.msra.mxu0 %v1773
          %2309 = vmatpush.bf16.msra.mxu0 %v1765
          %2310 = vmatpush.bf16.msra.mxu0 %v1757
          %2311 = vmatpush.bf16.msra.mxu0 %v1749
          %2312 = vmatpush.bf16.msra.mxu0 %v1741
          %2313 = vmatpush.bf16.msra.mxu0 %v1733
          %2314 = vmatpush.bf16.msra.mxu0 %v1725
          %2315 = vmatmul.bf16.gmra.mxu0 %v756
          %v2316 = vpop.f32.mrf.mxu0
          %v2317 = vadd.f32 %v2303, %v2316
          %v2318 = vpop.f32.mrf.mxu0
          %v2319 = vadd.f32 %v2305, %v2318
          %2320 = vdwg.mxu0
          %2321 = vmatpush.bf16.msra.mxu0 %v1590
          %2322 = vmatpush.bf16.msra.mxu0 %v1582
          %2323 = vmatpush.bf16.msra.mxu0 %v1574
          %2324 = vmatpush.bf16.msra.mxu0 %v1566
          %2325 = vmatpush.bf16.msra.mxu0 %v1558
          %2326 = vmatpush.bf16.msra.mxu0 %v1550
          %2327 = vmatpush.bf16.msra.mxu0 %v1542
          %2328 = vmatpush.bf16.msra.mxu0 %v1534
          %2329 = vmatmul.bf16.gmra.mxu0 %v753
          %v2330 = vpop.f32.mrf.mxu0
          %v2331 = vadd.f32 0.0, %v2330
          %v2332 = vpop.f32.mrf.mxu0
          %v2333 = vadd.f32 0.0, %v2332
          %2334 = vdwg.mxu0
          %2335 = vmatpush.bf16.msra.mxu0 %v1654
          %2336 = vmatpush.bf16.msra.mxu0 %v1646
          %2337 = vmatpush.bf16.msra.mxu0 %v1638
          %2338 = vmatpush.bf16.msra.mxu0 %v1630
          %2339 = vmatpush.bf16.msra.mxu0 %v1622
          %2340 = vmatpush.bf16.msra.mxu0 %v1614
          %2341 = vmatpush.bf16.msra.mxu0 %v1606
          %2342 = vmatpush.bf16.msra.mxu0 %v1598
          %2343 = vmatmul.bf16.gmra.mxu0 %v754
          %v2344 = vpop.f32.mrf.mxu0
          %v2345 = vadd.f32 %v2331, %v2344
          %v2346 = vpop.f32.mrf.mxu0
          %v2347 = vadd.f32 %v2333, %v2346
          %2348 = vdwg.mxu0
          %2349 = vmatpush.bf16.msra.mxu0 %v1718
          %2350 = vmatpush.bf16.msra.mxu0 %v1710
          %2351 = vmatpush.bf16.msra.mxu0 %v1702
          %2352 = vmatpush.bf16.msra.mxu0 %v1694
          %2353 = vmatpush.bf16.msra.mxu0 %v1686
          %2354 = vmatpush.bf16.msra.mxu0 %v1678
          %2355 = vmatpush.bf16.msra.mxu0 %v1670
          %2356 = vmatpush.bf16.msra.mxu0 %v1662
          %2357 = vmatmul.bf16.gmra.mxu0 %v755
          %v2358 = vpop.f32.mrf.mxu0
          %v2359 = vadd.f32 %v2345, %v2358
          %v2360 = vpop.f32.mrf.mxu0
          %v2361 = vadd.f32 %v2347, %v2360
          %2362 = vdwg.mxu0
          %2363 = vmatpush.bf16.msra.mxu0 %v1782
          %2364 = vmatpush.bf16.msra.mxu0 %v1774
          %2365 = vmatpush.bf16.msra.mxu0 %v1766
          %2366 = vmatpush.bf16.msra.mxu0 %v1758
          %2367 = vmatpush.bf16.msra.mxu0 %v1750
          %2368 = vmatpush.bf16.msra.mxu0 %v1742
          %2369 = vmatpush.bf16.msra.mxu0 %v1734
          %2370 = vmatpush.bf16.msra.mxu0 %v1726
          %2371 = vmatmul.bf16.gmra.mxu0 %v756
          %v2372 = vpop.f32.mrf.mxu0
          %v2373 = vadd.f32 %v2359, %v2372
          %v2374 = vpop.f32.mrf.mxu0
          %v2375 = vadd.f32 %v2361, %v2374
          %2376 = vdwg.mxu0
          %2377 = vmatpush.bf16.msra.mxu0 %v1591
          %2378 = vmatpush.bf16.msra.mxu0 %v1583
          %2379 = vmatpush.bf16.msra.mxu0 %v1575
          %2380 = vmatpush.bf16.msra.mxu0 %v1567
          %2381 = vmatpush.bf16.msra.mxu0 %v1559
          %2382 = vmatpush.bf16.msra.mxu0 %v1551
          %2383 = vmatpush.bf16.msra.mxu0 %v1543
          %2384 = vmatpush.bf16.msra.mxu0 %v1535
          %2385 = vmatmul.bf16.gmra.mxu0 %v753
          %v2386 = vpop.f32.mrf.mxu0
          %v2387 = vadd.f32 0.0, %v2386
          %v2388 = vpop.f32.mrf.mxu0
          %v2389 = vadd.f32 0.0, %v2388
          %2390 = vdwg.mxu0
          %2391 = vmatpush.bf16.msra.mxu0 %v1655
          %2392 = vmatpush.bf16.msra.mxu0 %v1647
          %2393 = vmatpush.bf16.msra.mxu0 %v1639
          %2394 = vmatpush.bf16.msra.mxu0 %v1631
          %2395 = vmatpush.bf16.msra.mxu0 %v1623
          %2396 = vmatpush.bf16.msra.mxu0 %v1615
          %2397 = vmatpush.bf16.msra.mxu0 %v1607
          %2398 = vmatpush.bf16.msra.mxu0 %v1599
          %2399 = vmatmul.bf16.gmra.mxu0 %v754
          %v2400 = vpop.f32.mrf.mxu0
          %v2401 = vadd.f32 %v2387, %v2400
          %v2402 = vpop.f32.mrf.mxu0
          %v2403 = vadd.f32 %v2389, %v2402
          %2404 = vdwg.mxu0
          %2405 = vmatpush.bf16.msra.mxu0 %v1719
          %2406 = vmatpush.bf16.msra.mxu0 %v1711
          %2407 = vmatpush.bf16.msra.mxu0 %v1703
          %2408 = vmatpush.bf16.msra.mxu0 %v1695
          %2409 = vmatpush.bf16.msra.mxu0 %v1687
          %2410 = vmatpush.bf16.msra.mxu0 %v1679
          %2411 = vmatpush.bf16.msra.mxu0 %v1671
          %2412 = vmatpush.bf16.msra.mxu0 %v1663
          %2413 = vmatmul.bf16.gmra.mxu0 %v755
          %v2414 = vpop.f32.mrf.mxu0
          %v2415 = vadd.f32 %v2401, %v2414
          %v2416 = vpop.f32.mrf.mxu0
          %v2417 = vadd.f32 %v2403, %v2416
          %2418 = vdwg.mxu0
          %2419 = vmatpush.bf16.msra.mxu0 %v1783
          %2420 = vmatpush.bf16.msra.mxu0 %v1775
          %2421 = vmatpush.bf16.msra.mxu0 %v1767
          %2422 = vmatpush.bf16.msra.mxu0 %v1759
          %2423 = vmatpush.bf16.msra.mxu0 %v1751
          %2424 = vmatpush.bf16.msra.mxu0 %v1743
          %2425 = vmatpush.bf16.msra.mxu0 %v1735
          %2426 = vmatpush.bf16.msra.mxu0 %v1727
          %2427 = vmatmul.bf16.gmra.mxu0 %v756
          %v2428 = vpop.f32.mrf.mxu0
          %v2429 = vadd.f32 %v2415, %v2428
          %v2430 = vpop.f32.mrf.mxu0
          %v2431 = vadd.f32 %v2417, %v2430
          %2432 = vdwg.mxu0
          %2433 = vmatpush.bf16.msra.mxu0 %v1592
          %2434 = vmatpush.bf16.msra.mxu0 %v1584
          %2435 = vmatpush.bf16.msra.mxu0 %v1576
          %2436 = vmatpush.bf16.msra.mxu0 %v1568
          %2437 = vmatpush.bf16.msra.mxu0 %v1560
          %2438 = vmatpush.bf16.msra.mxu0 %v1552
          %2439 = vmatpush.bf16.msra.mxu0 %v1544
          %2440 = vmatpush.bf16.msra.mxu0 %v1536
          %2441 = vmatmul.bf16.gmra.mxu0 %v753
          %v2442 = vpop.f32.mrf.mxu0
          %v2443 = vadd.f32 0.0, %v2442
          %v2444 = vpop.f32.mrf.mxu0
          %v2445 = vadd.f32 0.0, %v2444
          %2446 = vdwg.mxu0
          %2447 = vmatpush.bf16.msra.mxu0 %v1656
          %2448 = vmatpush.bf16.msra.mxu0 %v1648
          %2449 = vmatpush.bf16.msra.mxu0 %v1640
          %2450 = vmatpush.bf16.msra.mxu0 %v1632
          %2451 = vmatpush.bf16.msra.mxu0 %v1624
          %2452 = vmatpush.bf16.msra.mxu0 %v1616
          %2453 = vmatpush.bf16.msra.mxu0 %v1608
          %2454 = vmatpush.bf16.msra.mxu0 %v1600
          %2455 = vmatmul.bf16.gmra.mxu0 %v754
          %v2456 = vpop.f32.mrf.mxu0
          %v2457 = vadd.f32 %v2443, %v2456
          %v2458 = vpop.f32.mrf.mxu0
          %v2459 = vadd.f32 %v2445, %v2458
          %2460 = vdwg.mxu0
          %2461 = vmatpush.bf16.msra.mxu0 %v1720
          %2462 = vmatpush.bf16.msra.mxu0 %v1712
          %2463 = vmatpush.bf16.msra.mxu0 %v1704
          %2464 = vmatpush.bf16.msra.mxu0 %v1696
          %2465 = vmatpush.bf16.msra.mxu0 %v1688
          %2466 = vmatpush.bf16.msra.mxu0 %v1680
          %2467 = vmatpush.bf16.msra.mxu0 %v1672
          %2468 = vmatpush.bf16.msra.mxu0 %v1664
          %2469 = vmatmul.bf16.gmra.mxu0 %v755
          %v2470 = vpop.f32.mrf.mxu0
          %v2471 = vadd.f32 %v2457, %v2470
          %v2472 = vpop.f32.mrf.mxu0
          %v2473 = vadd.f32 %v2459, %v2472
          %2474 = vdwg.mxu0
          %2475 = vmatpush.bf16.msra.mxu0 %v1784
          %2476 = vmatpush.bf16.msra.mxu0 %v1776
          %2477 = vmatpush.bf16.msra.mxu0 %v1768
          %2478 = vmatpush.bf16.msra.mxu0 %v1760
          %2479 = vmatpush.bf16.msra.mxu0 %v1752
          %2480 = vmatpush.bf16.msra.mxu0 %v1744
          %2481 = vmatpush.bf16.msra.mxu0 %v1736
          %2482 = vmatpush.bf16.msra.mxu0 %v1728
          %2483 = vmatmul.bf16.gmra.mxu0 %v756
          %v2484 = vpop.f32.mrf.mxu0
          %v2485 = vadd.f32 %v2471, %v2484
          %v2486 = vpop.f32.mrf.mxu0
          %v2487 = vadd.f32 %v2473, %v2486
          %2488 = vdwg.mxu0
          %v2489 = vadd.f32 %v465, %v2093
          %v2490 = vadd.f32 %v466, %v2149
          %v2491 = vadd.f32 %v467, %v2205
          %v2492 = vadd.f32 %v468, %v2261
          %v2493 = vadd.f32 %v469, %v2317
          %v2494 = vadd.f32 %v470, %v2373
          %v2495 = vadd.f32 %v471, %v2429
          %v2496 = vadd.f32 %v472, %v2485
          %v2497 = vadd.f32 %v473, %v2095
          %v2498 = vadd.f32 %v474, %v2151
          %v2499 = vadd.f32 %v475, %v2207
          %v2500 = vadd.f32 %v476, %v2263
          %v2501 = vadd.f32 %v477, %v2319
          %v2502 = vadd.f32 %v478, %v2375
          %v2503 = vadd.f32 %v479, %v2431
          %v2504 = vadd.f32 %v480, %v2487
          %2505 = vst [vmem:[#allocation2] sm:$0xff] %v2489
          %2506 = vst [vmem:[#allocation2 + $0x8] sm:$0xff] %v2490
          %2507 = vst [vmem:[#allocation2 + $0x10] sm:$0xff] %v2491
          %2508 = vst [vmem:[#allocation2 + $0x18] sm:$0xff] %v2492
          %2509 = vst [vmem:[#allocation2 + $0x20] sm:$0xff] %v2493
          %2510 = vst [vmem:[#allocation2 + $0x28] sm:$0xff] %v2494
          %2511 = vst [vmem:[#allocation2 + $0x30] sm:$0xff] %v2495
          %2512 = vst [vmem:[#allocation2 + $0x38] sm:$0xff] %v2496
          %2513 = vst [vmem:[#allocation2 + $0x40] sm:$0xff] %v2497
          %2514 = vst [vmem:[#allocation2 + $0x48] sm:$0xff] %v2498
          %2515 = vst [vmem:[#allocation2 + $0x50] sm:$0xff] %v2499
          %2516 = vst [vmem:[#allocation2 + $0x58] sm:$0xff] %v2500
          %2517 = vst [vmem:[#allocation2 + $0x60] sm:$0xff] %v2501
          %2518 = vst [vmem:[#allocation2 + $0x68] sm:$0xff] %v2502
          %2519 = vst [vmem:[#allocation2 + $0x70] sm:$0xff] %v2503
          %2520 = vst [vmem:[#allocation2 + $0x78] sm:$0xff] %v2504
        $region76: #{tpu_custom_call.1} parent=43 // pred_fallthru
          _
        %p2521 = scmp.ge.s32.totalorder %s31, 2
        // Predicated region
        $region77: #{tpu_custom_call.1} parent=43 // pred_check
          %p2522 = pneg %p2521
        $region78: #{tpu_custom_call.1} parent=43 // pred_check_branch
          %2524 = sbr.rel (%p2522) target = $region80
        $region79: #{tpu_custom_call.1} parent=43 // pred_region
          %v2525 = vld [vmem:[#allocation2] sm:$0xff]
          %v2526 = vld [vmem:[#allocation2 + $0x8] sm:$0xff]
          %v2527 = vld [vmem:[#allocation2 + $0x10] sm:$0xff]
          %v2528 = vld [vmem:[#allocation2 + $0x18] sm:$0xff]
          %v2529 = vld [vmem:[#allocation2 + $0x20] sm:$0xff]
          %v2530 = vld [vmem:[#allocation2 + $0x28] sm:$0xff]
          %v2531 = vld [vmem:[#allocation2 + $0x30] sm:$0xff]
          %v2532 = vld [vmem:[#allocation2 + $0x38] sm:$0xff]
          %v2533 = vld [vmem:[#allocation2 + $0x40] sm:$0xff]
          %v2534 = vld [vmem:[#allocation2 + $0x48] sm:$0xff]
          %v2535 = vld [vmem:[#allocation2 + $0x50] sm:$0xff]
          %v2536 = vld [vmem:[#allocation2 + $0x58] sm:$0xff]
          %v2537 = vld [vmem:[#allocation2 + $0x60] sm:$0xff]
          %v2538 = vld [vmem:[#allocation2 + $0x68] sm:$0xff]
          %v2539 = vld [vmem:[#allocation2 + $0x70] sm:$0xff]
          %v2540 = vld [vmem:[#allocation2 + $0x78] sm:$0xff]
          %v2541 = vld [vmem:[%s370] sm:$0xff]
          %v2542 = vld [vmem:[%s370 + $0x8] sm:$0xff]
          %v2543 = vld [vmem:[%s370 + $0x10] sm:$0xff]
          %v2544 = vld [vmem:[%s370 + $0x18] sm:$0xff]
          %v2545 = vld [vmem:[%s380] sm:$0xff]
          %v2546 = vld [vmem:[%s380 + $0x8] sm:$0xff]
          %v2547 = vld [vmem:[%s380 + $0x10] sm:$0xff]
          %v2548 = vld [vmem:[%s380 + $0x18] sm:$0xff]
          %v2549 = vld [vmem:[%s380 + $0x20] sm:$0xff]
          %v2550 = vld [vmem:[%s380 + $0x28] sm:$0xff]
          %v2551 = vld [vmem:[%s380 + $0x30] sm:$0xff]
          %v2552 = vld [vmem:[%s380 + $0x38] sm:$0xff]
          %v2553 = vld [vmem:[%s380 + $0x40] sm:$0xff]
          %v2554 = vld [vmem:[%s380 + $0x48] sm:$0xff]
          %v2555 = vld [vmem:[%s380 + $0x50] sm:$0xff]
          %v2556 = vld [vmem:[%s380 + $0x58] sm:$0xff]
          %v2557 = vld [vmem:[%s380 + $0x60] sm:$0xff]
          %v2558 = vld [vmem:[%s380 + $0x68] sm:$0xff]
          %v2559 = vld [vmem:[%s380 + $0x70] sm:$0xff]
          %v2560 = vld [vmem:[%s380 + $0x78] sm:$0xff]
          %v2561 = vld [vmem:[%s380 + $0x80] sm:$0xff]
          %v2562 = vld [vmem:[%s380 + $0x88] sm:$0xff]
          %v2563 = vld [vmem:[%s380 + $0x90] sm:$0xff]
          %v2564 = vld [vmem:[%s380 + $0x98] sm:$0xff]
          %v2565 = vld [vmem:[%s380 + $0xa0] sm:$0xff]
          %v2566 = vld [vmem:[%s380 + $0xa8] sm:$0xff]
          %v2567 = vld [vmem:[%s380 + $0xb0] sm:$0xff]
          %v2568 = vld [vmem:[%s380 + $0xb8] sm:$0xff]
          %v2569 = vld [vmem:[%s380 + $0xc0] sm:$0xff]
          %v2570 = vld [vmem:[%s380 + $0xc8] sm:$0xff]
          %v2571 = vld [vmem:[%s380 + $0xd0] sm:$0xff]
          %v2572 = vld [vmem:[%s380 + $0xd8] sm:$0xff]
          %v2573 = vld [vmem:[%s380 + $0xe0] sm:$0xff]
          %v2574 = vld [vmem:[%s380 + $0xe8] sm:$0xff]
          %v2575 = vld [vmem:[%s380 + $0xf0] sm:$0xff]
          %v2576 = vld [vmem:[%s380 + $0xf8] sm:$0xff]
          %v2577 = vld [vmem:[%s380 + $0x100] sm:$0xff]
          %v2578 = vld [vmem:[%s380 + $0x108] sm:$0xff]
          %v2579 = vld [vmem:[%s380 + $0x110] sm:$0xff]
          %v2580 = vld [vmem:[%s380 + $0x118] sm:$0xff]
          %v2581 = vld [vmem:[%s380 + $0x120] sm:$0xff]
          %v2582 = vld [vmem:[%s380 + $0x128] sm:$0xff]
          %v2583 = vld [vmem:[%s380 + $0x130] sm:$0xff]
          %v2584 = vld [vmem:[%s380 + $0x138] sm:$0xff]
          %v2585 = vld [vmem:[%s380 + $0x140] sm:$0xff]
          %v2586 = vld [vmem:[%s380 + $0x148] sm:$0xff]
          %v2587 = vld [vmem:[%s380 + $0x150] sm:$0xff]
          %v2588 = vld [vmem:[%s380 + $0x158] sm:$0xff]
          %v2589 = vld [vmem:[%s380 + $0x160] sm:$0xff]
          %v2590 = vld [vmem:[%s380 + $0x168] sm:$0xff]
          %v2591 = vld [vmem:[%s380 + $0x170] sm:$0xff]
          %v2592 = vld [vmem:[%s380 + $0x178] sm:$0xff]
          %v2593 = vld [vmem:[%s380 + $0x180] sm:$0xff]
          %v2594 = vld [vmem:[%s380 + $0x188] sm:$0xff]
          %v2595 = vld [vmem:[%s380 + $0x190] sm:$0xff]
          %v2596 = vld [vmem:[%s380 + $0x198] sm:$0xff]
          %v2597 = vld [vmem:[%s380 + $0x1a0] sm:$0xff]
          %v2598 = vld [vmem:[%s380 + $0x1a8] sm:$0xff]
          %v2599 = vld [vmem:[%s380 + $0x1b0] sm:$0xff]
          %v2600 = vld [vmem:[%s380 + $0x1b8] sm:$0xff]
          %v2601 = vld [vmem:[%s380 + $0x1c0] sm:$0xff]
          %v2602 = vld [vmem:[%s380 + $0x1c8] sm:$0xff]
          %v2603 = vld [vmem:[%s380 + $0x1d0] sm:$0xff]
          %v2604 = vld [vmem:[%s380 + $0x1d8] sm:$0xff]
          %v2605 = vld [vmem:[%s380 + $0x1e0] sm:$0xff]
          %v2606 = vld [vmem:[%s380 + $0x1e8] sm:$0xff]
          %v2607 = vld [vmem:[%s380 + $0x1f0] sm:$0xff]
          %v2608 = vld [vmem:[%s380 + $0x1f8] sm:$0xff]
          %v2609 = vld [vmem:[%s380 + $0x200] sm:$0xff]
          %v2610 = vld [vmem:[%s380 + $0x208] sm:$0xff]
          %v2611 = vld [vmem:[%s380 + $0x210] sm:$0xff]
          %v2612 = vld [vmem:[%s380 + $0x218] sm:$0xff]
          %v2613 = vld [vmem:[%s380 + $0x220] sm:$0xff]
          %v2614 = vld [vmem:[%s380 + $0x228] sm:$0xff]
          %v2615 = vld [vmem:[%s380 + $0x230] sm:$0xff]
          %v2616 = vld [vmem:[%s380 + $0x238] sm:$0xff]
          %v2617 = vld [vmem:[%s380 + $0x240] sm:$0xff]
          %v2618 = vld [vmem:[%s380 + $0x248] sm:$0xff]
          %v2619 = vld [vmem:[%s380 + $0x250] sm:$0xff]
          %v2620 = vld [vmem:[%s380 + $0x258] sm:$0xff]
          %v2621 = vld [vmem:[%s380 + $0x260] sm:$0xff]
          %v2622 = vld [vmem:[%s380 + $0x268] sm:$0xff]
          %v2623 = vld [vmem:[%s380 + $0x270] sm:$0xff]
          %v2624 = vld [vmem:[%s380 + $0x278] sm:$0xff]
          %v2625 = vld [vmem:[%s380 + $0x280] sm:$0xff]
          %v2626 = vld [vmem:[%s380 + $0x288] sm:$0xff]
          %v2627 = vld [vmem:[%s380 + $0x290] sm:$0xff]
          %v2628 = vld [vmem:[%s380 + $0x298] sm:$0xff]
          %v2629 = vld [vmem:[%s380 + $0x2a0] sm:$0xff]
          %v2630 = vld [vmem:[%s380 + $0x2a8] sm:$0xff]
          %v2631 = vld [vmem:[%s380 + $0x2b0] sm:$0xff]
          %v2632 = vld [vmem:[%s380 + $0x2b8] sm:$0xff]
          %v2633 = vld [vmem:[%s380 + $0x2c0] sm:$0xff]
          %v2634 = vld [vmem:[%s380 + $0x2c8] sm:$0xff]
          %v2635 = vld [vmem:[%s380 + $0x2d0] sm:$0xff]
          %v2636 = vld [vmem:[%s380 + $0x2d8] sm:$0xff]
          %v2637 = vld [vmem:[%s380 + $0x2e0] sm:$0xff]
          %v2638 = vld [vmem:[%s380 + $0x2e8] sm:$0xff]
          %v2639 = vld [vmem:[%s380 + $0x2f0] sm:$0xff]
          %v2640 = vld [vmem:[%s380 + $0x2f8] sm:$0xff]
          %v2641 = vld [vmem:[%s380 + $0x300] sm:$0xff]
          %v2642 = vld [vmem:[%s380 + $0x308] sm:$0xff]
          %v2643 = vld [vmem:[%s380 + $0x310] sm:$0xff]
          %v2644 = vld [vmem:[%s380 + $0x318] sm:$0xff]
          %v2645 = vld [vmem:[%s380 + $0x320] sm:$0xff]
          %v2646 = vld [vmem:[%s380 + $0x328] sm:$0xff]
          %v2647 = vld [vmem:[%s380 + $0x330] sm:$0xff]
          %v2648 = vld [vmem:[%s380 + $0x338] sm:$0xff]
          %v2649 = vld [vmem:[%s380 + $0x340] sm:$0xff]
          %v2650 = vld [vmem:[%s380 + $0x348] sm:$0xff]
          %v2651 = vld [vmem:[%s380 + $0x350] sm:$0xff]
          %v2652 = vld [vmem:[%s380 + $0x358] sm:$0xff]
          %v2653 = vld [vmem:[%s380 + $0x360] sm:$0xff]
          %v2654 = vld [vmem:[%s380 + $0x368] sm:$0xff]
          %v2655 = vld [vmem:[%s380 + $0x370] sm:$0xff]
          %v2656 = vld [vmem:[%s380 + $0x378] sm:$0xff]
          %v2657 = vld [vmem:[%s380 + $0x380] sm:$0xff]
          %v2658 = vld [vmem:[%s380 + $0x388] sm:$0xff]
          %v2659 = vld [vmem:[%s380 + $0x390] sm:$0xff]
          %v2660 = vld [vmem:[%s380 + $0x398] sm:$0xff]
          %v2661 = vld [vmem:[%s380 + $0x3a0] sm:$0xff]
          %v2662 = vld [vmem:[%s380 + $0x3a8] sm:$0xff]
          %v2663 = vld [vmem:[%s380 + $0x3b0] sm:$0xff]
          %v2664 = vld [vmem:[%s380 + $0x3b8] sm:$0xff]
          %v2665 = vld [vmem:[%s380 + $0x3c0] sm:$0xff]
          %v2666 = vld [vmem:[%s380 + $0x3c8] sm:$0xff]
          %v2667 = vld [vmem:[%s380 + $0x3d0] sm:$0xff]
          %v2668 = vld [vmem:[%s380 + $0x3d8] sm:$0xff]
          %v2669 = vld [vmem:[%s380 + $0x3e0] sm:$0xff]
          %v2670 = vld [vmem:[%s380 + $0x3e8] sm:$0xff]
          %v2671 = vld [vmem:[%s380 + $0x3f0] sm:$0xff]
          %v2672 = vld [vmem:[%s380 + $0x3f8] sm:$0xff]
          %v2673 = vld [vmem:[%s380 + $0x400] sm:$0xff]
          %v2674 = vld [vmem:[%s380 + $0x408] sm:$0xff]
          %v2675 = vld [vmem:[%s380 + $0x410] sm:$0xff]
          %v2676 = vld [vmem:[%s380 + $0x418] sm:$0xff]
          %v2677 = vld [vmem:[%s380 + $0x420] sm:$0xff]
          %v2678 = vld [vmem:[%s380 + $0x428] sm:$0xff]
          %v2679 = vld [vmem:[%s380 + $0x430] sm:$0xff]
          %v2680 = vld [vmem:[%s380 + $0x438] sm:$0xff]
          %v2681 = vld [vmem:[%s380 + $0x440] sm:$0xff]
          %v2682 = vld [vmem:[%s380 + $0x448] sm:$0xff]
          %v2683 = vld [vmem:[%s380 + $0x450] sm:$0xff]
          %v2684 = vld [vmem:[%s380 + $0x458] sm:$0xff]
          %v2685 = vld [vmem:[%s380 + $0x460] sm:$0xff]
          %v2686 = vld [vmem:[%s380 + $0x468] sm:$0xff]
          %v2687 = vld [vmem:[%s380 + $0x470] sm:$0xff]
          %v2688 = vld [vmem:[%s380 + $0x478] sm:$0xff]
          %v2689 = vld [vmem:[%s380 + $0x480] sm:$0xff]
          %v2690 = vld [vmem:[%s380 + $0x488] sm:$0xff]
          %v2691 = vld [vmem:[%s380 + $0x490] sm:$0xff]
          %v2692 = vld [vmem:[%s380 + $0x498] sm:$0xff]
          %v2693 = vld [vmem:[%s380 + $0x4a0] sm:$0xff]
          %v2694 = vld [vmem:[%s380 + $0x4a8] sm:$0xff]
          %v2695 = vld [vmem:[%s380 + $0x4b0] sm:$0xff]
          %v2696 = vld [vmem:[%s380 + $0x4b8] sm:$0xff]
          %v2697 = vld [vmem:[%s380 + $0x4c0] sm:$0xff]
          %v2698 = vld [vmem:[%s380 + $0x4c8] sm:$0xff]
          %v2699 = vld [vmem:[%s380 + $0x4d0] sm:$0xff]
          %v2700 = vld [vmem:[%s380 + $0x4d8] sm:$0xff]
          %v2701 = vld [vmem:[%s380 + $0x4e0] sm:$0xff]
          %v2702 = vld [vmem:[%s380 + $0x4e8] sm:$0xff]
          %v2703 = vld [vmem:[%s380 + $0x4f0] sm:$0xff]
          %v2704 = vld [vmem:[%s380 + $0x4f8] sm:$0xff]
          %v2705 = vld [vmem:[%s380 + $0x500] sm:$0xff]
          %v2706 = vld [vmem:[%s380 + $0x508] sm:$0xff]
          %v2707 = vld [vmem:[%s380 + $0x510] sm:$0xff]
          %v2708 = vld [vmem:[%s380 + $0x518] sm:$0xff]
          %v2709 = vld [vmem:[%s380 + $0x520] sm:$0xff]
          %v2710 = vld [vmem:[%s380 + $0x528] sm:$0xff]
          %v2711 = vld [vmem:[%s380 + $0x530] sm:$0xff]
          %v2712 = vld [vmem:[%s380 + $0x538] sm:$0xff]
          %v2713 = vld [vmem:[%s380 + $0x540] sm:$0xff]
          %v2714 = vld [vmem:[%s380 + $0x548] sm:$0xff]
          %v2715 = vld [vmem:[%s380 + $0x550] sm:$0xff]
          %v2716 = vld [vmem:[%s380 + $0x558] sm:$0xff]
          %v2717 = vld [vmem:[%s380 + $0x560] sm:$0xff]
          %v2718 = vld [vmem:[%s380 + $0x568] sm:$0xff]
          %v2719 = vld [vmem:[%s380 + $0x570] sm:$0xff]
          %v2720 = vld [vmem:[%s380 + $0x578] sm:$0xff]
          %v2721 = vld [vmem:[%s380 + $0x580] sm:$0xff]
          %v2722 = vld [vmem:[%s380 + $0x588] sm:$0xff]
          %v2723 = vld [vmem:[%s380 + $0x590] sm:$0xff]
          %v2724 = vld [vmem:[%s380 + $0x598] sm:$0xff]
          %v2725 = vld [vmem:[%s380 + $0x5a0] sm:$0xff]
          %v2726 = vld [vmem:[%s380 + $0x5a8] sm:$0xff]
          %v2727 = vld [vmem:[%s380 + $0x5b0] sm:$0xff]
          %v2728 = vld [vmem:[%s380 + $0x5b8] sm:$0xff]
          %v2729 = vld [vmem:[%s380 + $0x5c0] sm:$0xff]
          %v2730 = vld [vmem:[%s380 + $0x5c8] sm:$0xff]
          %v2731 = vld [vmem:[%s380 + $0x5d0] sm:$0xff]
          %v2732 = vld [vmem:[%s380 + $0x5d8] sm:$0xff]
          %v2733 = vld [vmem:[%s380 + $0x5e0] sm:$0xff]
          %v2734 = vld [vmem:[%s380 + $0x5e8] sm:$0xff]
          %v2735 = vld [vmem:[%s380 + $0x5f0] sm:$0xff]
          %v2736 = vld [vmem:[%s380 + $0x5f8] sm:$0xff]
          %v2737 = vld [vmem:[%s380 + $0x600] sm:$0xff]
          %v2738 = vld [vmem:[%s380 + $0x608] sm:$0xff]
          %v2739 = vld [vmem:[%s380 + $0x610] sm:$0xff]
          %v2740 = vld [vmem:[%s380 + $0x618] sm:$0xff]
          %v2741 = vld [vmem:[%s380 + $0x620] sm:$0xff]
          %v2742 = vld [vmem:[%s380 + $0x628] sm:$0xff]
          %v2743 = vld [vmem:[%s380 + $0x630] sm:$0xff]
          %v2744 = vld [vmem:[%s380 + $0x638] sm:$0xff]
          %v2745 = vld [vmem:[%s380 + $0x640] sm:$0xff]
          %v2746 = vld [vmem:[%s380 + $0x648] sm:$0xff]
          %v2747 = vld [vmem:[%s380 + $0x650] sm:$0xff]
          %v2748 = vld [vmem:[%s380 + $0x658] sm:$0xff]
          %v2749 = vld [vmem:[%s380 + $0x660] sm:$0xff]
          %v2750 = vld [vmem:[%s380 + $0x668] sm:$0xff]
          %v2751 = vld [vmem:[%s380 + $0x670] sm:$0xff]
          %v2752 = vld [vmem:[%s380 + $0x678] sm:$0xff]
          %v2753 = vld [vmem:[%s380 + $0x680] sm:$0xff]
          %v2754 = vld [vmem:[%s380 + $0x688] sm:$0xff]
          %v2755 = vld [vmem:[%s380 + $0x690] sm:$0xff]
          %v2756 = vld [vmem:[%s380 + $0x698] sm:$0xff]
          %v2757 = vld [vmem:[%s380 + $0x6a0] sm:$0xff]
          %v2758 = vld [vmem:[%s380 + $0x6a8] sm:$0xff]
          %v2759 = vld [vmem:[%s380 + $0x6b0] sm:$0xff]
          %v2760 = vld [vmem:[%s380 + $0x6b8] sm:$0xff]
          %v2761 = vld [vmem:[%s380 + $0x6c0] sm:$0xff]
          %v2762 = vld [vmem:[%s380 + $0x6c8] sm:$0xff]
          %v2763 = vld [vmem:[%s380 + $0x6d0] sm:$0xff]
          %v2764 = vld [vmem:[%s380 + $0x6d8] sm:$0xff]
          %v2765 = vld [vmem:[%s380 + $0x6e0] sm:$0xff]
          %v2766 = vld [vmem:[%s380 + $0x6e8] sm:$0xff]
          %v2767 = vld [vmem:[%s380 + $0x6f0] sm:$0xff]
          %v2768 = vld [vmem:[%s380 + $0x6f8] sm:$0xff]
          %v2769 = vld [vmem:[%s380 + $0x700] sm:$0xff]
          %v2770 = vld [vmem:[%s380 + $0x708] sm:$0xff]
          %v2771 = vld [vmem:[%s380 + $0x710] sm:$0xff]
          %v2772 = vld [vmem:[%s380 + $0x718] sm:$0xff]
          %v2773 = vld [vmem:[%s380 + $0x720] sm:$0xff]
          %v2774 = vld [vmem:[%s380 + $0x728] sm:$0xff]
          %v2775 = vld [vmem:[%s380 + $0x730] sm:$0xff]
          %v2776 = vld [vmem:[%s380 + $0x738] sm:$0xff]
          %v2777 = vld [vmem:[%s380 + $0x740] sm:$0xff]
          %v2778 = vld [vmem:[%s380 + $0x748] sm:$0xff]
          %v2779 = vld [vmem:[%s380 + $0x750] sm:$0xff]
          %v2780 = vld [vmem:[%s380 + $0x758] sm:$0xff]
          %v2781 = vld [vmem:[%s380 + $0x760] sm:$0xff]
          %v2782 = vld [vmem:[%s380 + $0x768] sm:$0xff]
          %v2783 = vld [vmem:[%s380 + $0x770] sm:$0xff]
          %v2784 = vld [vmem:[%s380 + $0x778] sm:$0xff]
          %v2785 = vld [vmem:[%s380 + $0x780] sm:$0xff]
          %v2786 = vld [vmem:[%s380 + $0x788] sm:$0xff]
          %v2787 = vld [vmem:[%s380 + $0x790] sm:$0xff]
          %v2788 = vld [vmem:[%s380 + $0x798] sm:$0xff]
          %v2789 = vld [vmem:[%s380 + $0x7a0] sm:$0xff]
          %v2790 = vld [vmem:[%s380 + $0x7a8] sm:$0xff]
          %v2791 = vld [vmem:[%s380 + $0x7b0] sm:$0xff]
          %v2792 = vld [vmem:[%s380 + $0x7b8] sm:$0xff]
          %v2793 = vld [vmem:[%s380 + $0x7c0] sm:$0xff]
          %v2794 = vld [vmem:[%s380 + $0x7c8] sm:$0xff]
          %v2795 = vld [vmem:[%s380 + $0x7d0] sm:$0xff]
          %v2796 = vld [vmem:[%s380 + $0x7d8] sm:$0xff]
          %v2797 = vld [vmem:[%s380 + $0x7e0] sm:$0xff]
          %v2798 = vld [vmem:[%s380 + $0x7e8] sm:$0xff]
          %v2799 = vld [vmem:[%s380 + $0x7f0] sm:$0xff]
          %v2800 = vld [vmem:[%s380 + $0x7f8] sm:$0xff]
          %v2805 = vunpack.c.l.b16 %v2541
          %v2806 = vunpack.c.h.b16 %v2541
          %v2807 = vunpack.c.l.b16 %v2542
          %v2808 = vunpack.c.h.b16 %v2542
          %v2809 = vunpack.c.l.b16 %v2543
          %v2810 = vunpack.c.h.b16 %v2543
          %v2811 = vunpack.c.l.b16 %v2544
          %v2812 = vunpack.c.h.b16 %v2544
          %v2813 = vpack.c.b16 %v2809, %v2805
          %v2814 = vpack.c.b16 %v2810, %v2806
          %v2815 = vpack.c.b16 %v2811, %v2807
          %v2816 = vpack.c.b16 %v2812, %v2808
          %v3077 = vunpack.c.l.b16 %v2545
          %v3078 = vunpack.c.h.b16 %v2545
          %v3079 = vunpack.c.l.b16 %v2546
          %v3080 = vunpack.c.h.b16 %v2546
          %v3081 = vunpack.c.l.b16 %v2547
          %v3082 = vunpack.c.h.b16 %v2547
          %v3083 = vunpack.c.l.b16 %v2548
          %v3084 = vunpack.c.h.b16 %v2548
          %v3085 = vunpack.c.l.b16 %v2549
          %v3086 = vunpack.c.h.b16 %v2549
          %v3087 = vunpack.c.l.b16 %v2550
          %v3088 = vunpack.c.h.b16 %v2550
          %v3089 = vunpack.c.l.b16 %v2551
          %v3090 = vunpack.c.h.b16 %v2551
          %v3091 = vunpack.c.l.b16 %v2552
          %v3092 = vunpack.c.h.b16 %v2552
          %v3093 = vunpack.c.l.b16 %v2553
          %v3094 = vunpack.c.h.b16 %v2553
          %v3095 = vunpack.c.l.b16 %v2554
          %v3096 = vunpack.c.h.b16 %v2554
          %v3097 = vunpack.c.l.b16 %v2555
          %v3098 = vunpack.c.h.b16 %v2555
          %v3099 = vunpack.c.l.b16 %v2556
          %v3100 = vunpack.c.h.b16 %v2556
          %v3101 = vunpack.c.l.b16 %v2557
          %v3102 = vunpack.c.h.b16 %v2557
          %v3103 = vunpack.c.l.b16 %v2558
          %v3104 = vunpack.c.h.b16 %v2558
          %v3105 = vunpack.c.l.b16 %v2559
          %v3106 = vunpack.c.h.b16 %v2559
          %v3107 = vunpack.c.l.b16 %v2560
          %v3108 = vunpack.c.h.b16 %v2560
          %v3109 = vunpack.c.l.b16 %v2561
          %v3110 = vunpack.c.h.b16 %v2561
          %v3111 = vunpack.c.l.b16 %v2562
          %v3112 = vunpack.c.h.b16 %v2562
          %v3113 = vunpack.c.l.b16 %v2563
          %v3114 = vunpack.c.h.b16 %v2563
          %v3115 = vunpack.c.l.b16 %v2564
          %v3116 = vunpack.c.h.b16 %v2564
          %v3117 = vunpack.c.l.b16 %v2565
          %v3118 = vunpack.c.h.b16 %v2565
          %v3119 = vunpack.c.l.b16 %v2566
          %v3120 = vunpack.c.h.b16 %v2566
          %v3121 = vunpack.c.l.b16 %v2567
          %v3122 = vunpack.c.h.b16 %v2567
          %v3123 = vunpack.c.l.b16 %v2568
          %v3124 = vunpack.c.h.b16 %v2568
          %v3125 = vunpack.c.l.b16 %v2569
          %v3126 = vunpack.c.h.b16 %v2569
          %v3127 = vunpack.c.l.b16 %v2570
          %v3128 = vunpack.c.h.b16 %v2570
          %v3129 = vunpack.c.l.b16 %v2571
          %v3130 = vunpack.c.h.b16 %v2571
          %v3131 = vunpack.c.l.b16 %v2572
          %v3132 = vunpack.c.h.b16 %v2572
          %v3133 = vunpack.c.l.b16 %v2573
          %v3134 = vunpack.c.h.b16 %v2573
          %v3135 = vunpack.c.l.b16 %v2574
          %v3136 = vunpack.c.h.b16 %v2574
          %v3137 = vunpack.c.l.b16 %v2575
          %v3138 = vunpack.c.h.b16 %v2575
          %v3139 = vunpack.c.l.b16 %v2576
          %v3140 = vunpack.c.h.b16 %v2576
          %v3141 = vunpack.c.l.b16 %v2577
          %v3142 = vunpack.c.h.b16 %v2577
          %v3143 = vunpack.c.l.b16 %v2578
          %v3144 = vunpack.c.h.b16 %v2578
          %v3145 = vunpack.c.l.b16 %v2579
          %v3146 = vunpack.c.h.b16 %v2579
          %v3147 = vunpack.c.l.b16 %v2580
          %v3148 = vunpack.c.h.b16 %v2580
          %v3149 = vunpack.c.l.b16 %v2581
          %v3150 = vunpack.c.h.b16 %v2581
          %v3151 = vunpack.c.l.b16 %v2582
          %v3152 = vunpack.c.h.b16 %v2582
          %v3153 = vunpack.c.l.b16 %v2583
          %v3154 = vunpack.c.h.b16 %v2583
          %v3155 = vunpack.c.l.b16 %v2584
          %v3156 = vunpack.c.h.b16 %v2584
          %v3157 = vunpack.c.l.b16 %v2585
          %v3158 = vunpack.c.h.b16 %v2585
          %v3159 = vunpack.c.l.b16 %v2586
          %v3160 = vunpack.c.h.b16 %v2586
          %v3161 = vunpack.c.l.b16 %v2587
          %v3162 = vunpack.c.h.b16 %v2587
          %v3163 = vunpack.c.l.b16 %v2588
          %v3164 = vunpack.c.h.b16 %v2588
          %v3165 = vunpack.c.l.b16 %v2589
          %v3166 = vunpack.c.h.b16 %v2589
          %v3167 = vunpack.c.l.b16 %v2590
          %v3168 = vunpack.c.h.b16 %v2590
          %v3169 = vunpack.c.l.b16 %v2591
          %v3170 = vunpack.c.h.b16 %v2591
          %v3171 = vunpack.c.l.b16 %v2592
          %v3172 = vunpack.c.h.b16 %v2592
          %v3173 = vunpack.c.l.b16 %v2593
          %v3174 = vunpack.c.h.b16 %v2593
          %v3175 = vunpack.c.l.b16 %v2594
          %v3176 = vunpack.c.h.b16 %v2594
          %v3177 = vunpack.c.l.b16 %v2595
          %v3178 = vunpack.c.h.b16 %v2595
          %v3179 = vunpack.c.l.b16 %v2596
          %v3180 = vunpack.c.h.b16 %v2596
          %v3181 = vunpack.c.l.b16 %v2597
          %v3182 = vunpack.c.h.b16 %v2597
          %v3183 = vunpack.c.l.b16 %v2598
          %v3184 = vunpack.c.h.b16 %v2598
          %v3185 = vunpack.c.l.b16 %v2599
          %v3186 = vunpack.c.h.b16 %v2599
          %v3187 = vunpack.c.l.b16 %v2600
          %v3188 = vunpack.c.h.b16 %v2600
          %v3189 = vunpack.c.l.b16 %v2601
          %v3190 = vunpack.c.h.b16 %v2601
          %v3191 = vunpack.c.l.b16 %v2602
          %v3192 = vunpack.c.h.b16 %v2602
          %v3193 = vunpack.c.l.b16 %v2603
          %v3194 = vunpack.c.h.b16 %v2603
          %v3195 = vunpack.c.l.b16 %v2604
          %v3196 = vunpack.c.h.b16 %v2604
          %v3197 = vunpack.c.l.b16 %v2605
          %v3198 = vunpack.c.h.b16 %v2605
          %v3199 = vunpack.c.l.b16 %v2606
          %v3200 = vunpack.c.h.b16 %v2606
          %v3201 = vunpack.c.l.b16 %v2607
          %v3202 = vunpack.c.h.b16 %v2607
          %v3203 = vunpack.c.l.b16 %v2608
          %v3204 = vunpack.c.h.b16 %v2608
          %v3205 = vunpack.c.l.b16 %v2609
          %v3206 = vunpack.c.h.b16 %v2609
          %v3207 = vunpack.c.l.b16 %v2610
          %v3208 = vunpack.c.h.b16 %v2610
          %v3209 = vunpack.c.l.b16 %v2611
          %v3210 = vunpack.c.h.b16 %v2611
          %v3211 = vunpack.c.l.b16 %v2612
          %v3212 = vunpack.c.h.b16 %v2612
          %v3213 = vunpack.c.l.b16 %v2613
          %v3214 = vunpack.c.h.b16 %v2613
          %v3215 = vunpack.c.l.b16 %v2614
          %v3216 = vunpack.c.h.b16 %v2614
          %v3217 = vunpack.c.l.b16 %v2615
          %v3218 = vunpack.c.h.b16 %v2615
          %v3219 = vunpack.c.l.b16 %v2616
          %v3220 = vunpack.c.h.b16 %v2616
          %v3221 = vunpack.c.l.b16 %v2617
          %v3222 = vunpack.c.h.b16 %v2617
          %v3223 = vunpack.c.l.b16 %v2618
          %v3224 = vunpack.c.h.b16 %v2618
          %v3225 = vunpack.c.l.b16 %v2619
          %v3226 = vunpack.c.h.b16 %v2619
          %v3227 = vunpack.c.l.b16 %v2620
          %v3228 = vunpack.c.h.b16 %v2620
          %v3229 = vunpack.c.l.b16 %v2621
          %v3230 = vunpack.c.h.b16 %v2621
          %v3231 = vunpack.c.l.b16 %v2622
          %v3232 = vunpack.c.h.b16 %v2622
          %v3233 = vunpack.c.l.b16 %v2623
          %v3234 = vunpack.c.h.b16 %v2623
          %v3235 = vunpack.c.l.b16 %v2624
          %v3236 = vunpack.c.h.b16 %v2624
          %v3237 = vunpack.c.l.b16 %v2625
          %v3238 = vunpack.c.h.b16 %v2625
          %v3239 = vunpack.c.l.b16 %v2626
          %v3240 = vunpack.c.h.b16 %v2626
          %v3241 = vunpack.c.l.b16 %v2627
          %v3242 = vunpack.c.h.b16 %v2627
          %v3243 = vunpack.c.l.b16 %v2628
          %v3244 = vunpack.c.h.b16 %v2628
          %v3245 = vunpack.c.l.b16 %v2629
          %v3246 = vunpack.c.h.b16 %v2629
          %v3247 = vunpack.c.l.b16 %v2630
          %v3248 = vunpack.c.h.b16 %v2630
          %v3249 = vunpack.c.l.b16 %v2631
          %v3250 = vunpack.c.h.b16 %v2631
          %v3251 = vunpack.c.l.b16 %v2632
          %v3252 = vunpack.c.h.b16 %v2632
          %v3253 = vunpack.c.l.b16 %v2633
          %v3254 = vunpack.c.h.b16 %v2633
          %v3255 = vunpack.c.l.b16 %v2634
          %v3256 = vunpack.c.h.b16 %v2634
          %v3257 = vunpack.c.l.b16 %v2635
          %v3258 = vunpack.c.h.b16 %v2635
          %v3259 = vunpack.c.l.b16 %v2636
          %v3260 = vunpack.c.h.b16 %v2636
          %v3261 = vunpack.c.l.b16 %v2637
          %v3262 = vunpack.c.h.b16 %v2637
          %v3263 = vunpack.c.l.b16 %v2638
          %v3264 = vunpack.c.h.b16 %v2638
          %v3265 = vunpack.c.l.b16 %v2639
          %v3266 = vunpack.c.h.b16 %v2639
          %v3267 = vunpack.c.l.b16 %v2640
          %v3268 = vunpack.c.h.b16 %v2640
          %v3269 = vunpack.c.l.b16 %v2641
          %v3270 = vunpack.c.h.b16 %v2641
          %v3271 = vunpack.c.l.b16 %v2642
          %v3272 = vunpack.c.h.b16 %v2642
          %v3273 = vunpack.c.l.b16 %v2643
          %v3274 = vunpack.c.h.b16 %v2643
          %v3275 = vunpack.c.l.b16 %v2644
          %v3276 = vunpack.c.h.b16 %v2644
          %v3277 = vunpack.c.l.b16 %v2645
          %v3278 = vunpack.c.h.b16 %v2645
          %v3279 = vunpack.c.l.b16 %v2646
          %v3280 = vunpack.c.h.b16 %v2646
          %v3281 = vunpack.c.l.b16 %v2647
          %v3282 = vunpack.c.h.b16 %v2647
          %v3283 = vunpack.c.l.b16 %v2648
          %v3284 = vunpack.c.h.b16 %v2648
          %v3285 = vunpack.c.l.b16 %v2649
          %v3286 = vunpack.c.h.b16 %v2649
          %v3287 = vunpack.c.l.b16 %v2650
          %v3288 = vunpack.c.h.b16 %v2650
          %v3289 = vunpack.c.l.b16 %v2651
          %v3290 = vunpack.c.h.b16 %v2651
          %v3291 = vunpack.c.l.b16 %v2652
          %v3292 = vunpack.c.h.b16 %v2652
          %v3293 = vunpack.c.l.b16 %v2653
          %v3294 = vunpack.c.h.b16 %v2653
          %v3295 = vunpack.c.l.b16 %v2654
          %v3296 = vunpack.c.h.b16 %v2654
          %v3297 = vunpack.c.l.b16 %v2655
          %v3298 = vunpack.c.h.b16 %v2655
          %v3299 = vunpack.c.l.b16 %v2656
          %v3300 = vunpack.c.h.b16 %v2656
          %v3301 = vunpack.c.l.b16 %v2657
          %v3302 = vunpack.c.h.b16 %v2657
          %v3303 = vunpack.c.l.b16 %v2658
          %v3304 = vunpack.c.h.b16 %v2658
          %v3305 = vunpack.c.l.b16 %v2659
          %v3306 = vunpack.c.h.b16 %v2659
          %v3307 = vunpack.c.l.b16 %v2660
          %v3308 = vunpack.c.h.b16 %v2660
          %v3309 = vunpack.c.l.b16 %v2661
          %v3310 = vunpack.c.h.b16 %v2661
          %v3311 = vunpack.c.l.b16 %v2662
          %v3312 = vunpack.c.h.b16 %v2662
          %v3313 = vunpack.c.l.b16 %v2663
          %v3314 = vunpack.c.h.b16 %v2663
          %v3315 = vunpack.c.l.b16 %v2664
          %v3316 = vunpack.c.h.b16 %v2664
          %v3317 = vunpack.c.l.b16 %v2665
          %v3318 = vunpack.c.h.b16 %v2665
          %v3319 = vunpack.c.l.b16 %v2666
          %v3320 = vunpack.c.h.b16 %v2666
          %v3321 = vunpack.c.l.b16 %v2667
          %v3322 = vunpack.c.h.b16 %v2667
          %v3323 = vunpack.c.l.b16 %v2668
          %v3324 = vunpack.c.h.b16 %v2668
          %v3325 = vunpack.c.l.b16 %v2669
          %v3326 = vunpack.c.h.b16 %v2669
          %v3327 = vunpack.c.l.b16 %v2670
          %v3328 = vunpack.c.h.b16 %v2670
          %v3329 = vunpack.c.l.b16 %v2671
          %v3330 = vunpack.c.h.b16 %v2671
          %v3331 = vunpack.c.l.b16 %v2672
          %v3332 = vunpack.c.h.b16 %v2672
          %v3333 = vunpack.c.l.b16 %v2673
          %v3334 = vunpack.c.h.b16 %v2673
          %v3335 = vunpack.c.l.b16 %v2674
          %v3336 = vunpack.c.h.b16 %v2674
          %v3337 = vunpack.c.l.b16 %v2675
          %v3338 = vunpack.c.h.b16 %v2675
          %v3339 = vunpack.c.l.b16 %v2676
          %v3340 = vunpack.c.h.b16 %v2676
          %v3341 = vunpack.c.l.b16 %v2677
          %v3342 = vunpack.c.h.b16 %v2677
          %v3343 = vunpack.c.l.b16 %v2678
          %v3344 = vunpack.c.h.b16 %v2678
          %v3345 = vunpack.c.l.b16 %v2679
          %v3346 = vunpack.c.h.b16 %v2679
          %v3347 = vunpack.c.l.b16 %v2680
          %v3348 = vunpack.c.h.b16 %v2680
          %v3349 = vunpack.c.l.b16 %v2681
          %v3350 = vunpack.c.h.b16 %v2681
          %v3351 = vunpack.c.l.b16 %v2682
          %v3352 = vunpack.c.h.b16 %v2682
          %v3353 = vunpack.c.l.b16 %v2683
          %v3354 = vunpack.c.h.b16 %v2683
          %v3355 = vunpack.c.l.b16 %v2684
          %v3356 = vunpack.c.h.b16 %v2684
          %v3357 = vunpack.c.l.b16 %v2685
          %v3358 = vunpack.c.h.b16 %v2685
          %v3359 = vunpack.c.l.b16 %v2686
          %v3360 = vunpack.c.h.b16 %v2686
          %v3361 = vunpack.c.l.b16 %v2687
          %v3362 = vunpack.c.h.b16 %v2687
          %v3363 = vunpack.c.l.b16 %v2688
          %v3364 = vunpack.c.h.b16 %v2688
          %v3365 = vunpack.c.l.b16 %v2689
          %v3366 = vunpack.c.h.b16 %v2689
          %v3367 = vunpack.c.l.b16 %v2690
          %v3368 = vunpack.c.h.b16 %v2690
          %v3369 = vunpack.c.l.b16 %v2691
          %v3370 = vunpack.c.h.b16 %v2691
          %v3371 = vunpack.c.l.b16 %v2692
          %v3372 = vunpack.c.h.b16 %v2692
          %v3373 = vunpack.c.l.b16 %v2693
          %v3374 = vunpack.c.h.b16 %v2693
          %v3375 = vunpack.c.l.b16 %v2694
          %v3376 = vunpack.c.h.b16 %v2694
          %v3377 = vunpack.c.l.b16 %v2695
          %v3378 = vunpack.c.h.b16 %v2695
          %v3379 = vunpack.c.l.b16 %v2696
          %v3380 = vunpack.c.h.b16 %v2696
          %v3381 = vunpack.c.l.b16 %v2697
          %v3382 = vunpack.c.h.b16 %v2697
          %v3383 = vunpack.c.l.b16 %v2698
          %v3384 = vunpack.c.h.b16 %v2698
          %v3385 = vunpack.c.l.b16 %v2699
          %v3386 = vunpack.c.h.b16 %v2699
          %v3387 = vunpack.c.l.b16 %v2700
          %v3388 = vunpack.c.h.b16 %v2700
          %v3389 = vunpack.c.l.b16 %v2701
          %v3390 = vunpack.c.h.b16 %v2701
          %v3391 = vunpack.c.l.b16 %v2702
          %v3392 = vunpack.c.h.b16 %v2702
          %v3393 = vunpack.c.l.b16 %v2703
          %v3394 = vunpack.c.h.b16 %v2703
          %v3395 = vunpack.c.l.b16 %v2704
          %v3396 = vunpack.c.h.b16 %v2704
          %v3397 = vunpack.c.l.b16 %v2705
          %v3398 = vunpack.c.h.b16 %v2705
          %v3399 = vunpack.c.l.b16 %v2706
          %v3400 = vunpack.c.h.b16 %v2706
          %v3401 = vunpack.c.l.b16 %v2707
          %v3402 = vunpack.c.h.b16 %v2707
          %v3403 = vunpack.c.l.b16 %v2708
          %v3404 = vunpack.c.h.b16 %v2708
          %v3405 = vunpack.c.l.b16 %v2709
          %v3406 = vunpack.c.h.b16 %v2709
          %v3407 = vunpack.c.l.b16 %v2710
          %v3408 = vunpack.c.h.b16 %v2710
          %v3409 = vunpack.c.l.b16 %v2711
          %v3410 = vunpack.c.h.b16 %v2711
          %v3411 = vunpack.c.l.b16 %v2712
          %v3412 = vunpack.c.h.b16 %v2712
          %v3413 = vunpack.c.l.b16 %v2713
          %v3414 = vunpack.c.h.b16 %v2713
          %v3415 = vunpack.c.l.b16 %v2714
          %v3416 = vunpack.c.h.b16 %v2714
          %v3417 = vunpack.c.l.b16 %v2715
          %v3418 = vunpack.c.h.b16 %v2715
          %v3419 = vunpack.c.l.b16 %v2716
          %v3420 = vunpack.c.h.b16 %v2716
          %v3421 = vunpack.c.l.b16 %v2717
          %v3422 = vunpack.c.h.b16 %v2717
          %v3423 = vunpack.c.l.b16 %v2718
          %v3424 = vunpack.c.h.b16 %v2718
          %v3425 = vunpack.c.l.b16 %v2719
          %v3426 = vunpack.c.h.b16 %v2719
          %v3427 = vunpack.c.l.b16 %v2720
          %v3428 = vunpack.c.h.b16 %v2720
          %v3429 = vunpack.c.l.b16 %v2721
          %v3430 = vunpack.c.h.b16 %v2721
          %v3431 = vunpack.c.l.b16 %v2722
          %v3432 = vunpack.c.h.b16 %v2722
          %v3433 = vunpack.c.l.b16 %v2723
          %v3434 = vunpack.c.h.b16 %v2723
          %v3435 = vunpack.c.l.b16 %v2724
          %v3436 = vunpack.c.h.b16 %v2724
          %v3437 = vunpack.c.l.b16 %v2725
          %v3438 = vunpack.c.h.b16 %v2725
          %v3439 = vunpack.c.l.b16 %v2726
          %v3440 = vunpack.c.h.b16 %v2726
          %v3441 = vunpack.c.l.b16 %v2727
          %v3442 = vunpack.c.h.b16 %v2727
          %v3443 = vunpack.c.l.b16 %v2728
          %v3444 = vunpack.c.h.b16 %v2728
          %v3445 = vunpack.c.l.b16 %v2729
          %v3446 = vunpack.c.h.b16 %v2729
          %v3447 = vunpack.c.l.b16 %v2730
          %v3448 = vunpack.c.h.b16 %v2730
          %v3449 = vunpack.c.l.b16 %v2731
          %v3450 = vunpack.c.h.b16 %v2731
          %v3451 = vunpack.c.l.b16 %v2732
          %v3452 = vunpack.c.h.b16 %v2732
          %v3453 = vunpack.c.l.b16 %v2733
          %v3454 = vunpack.c.h.b16 %v2733
          %v3455 = vunpack.c.l.b16 %v2734
          %v3456 = vunpack.c.h.b16 %v2734
          %v3457 = vunpack.c.l.b16 %v2735
          %v3458 = vunpack.c.h.b16 %v2735
          %v3459 = vunpack.c.l.b16 %v2736
          %v3460 = vunpack.c.h.b16 %v2736
          %v3461 = vunpack.c.l.b16 %v2737
          %v3462 = vunpack.c.h.b16 %v2737
          %v3463 = vunpack.c.l.b16 %v2738
          %v3464 = vunpack.c.h.b16 %v2738
          %v3465 = vunpack.c.l.b16 %v2739
          %v3466 = vunpack.c.h.b16 %v2739
          %v3467 = vunpack.c.l.b16 %v2740
          %v3468 = vunpack.c.h.b16 %v2740
          %v3469 = vunpack.c.l.b16 %v2741
          %v3470 = vunpack.c.h.b16 %v2741
          %v3471 = vunpack.c.l.b16 %v2742
          %v3472 = vunpack.c.h.b16 %v2742
          %v3473 = vunpack.c.l.b16 %v2743
          %v3474 = vunpack.c.h.b16 %v2743
          %v3475 = vunpack.c.l.b16 %v2744
          %v3476 = vunpack.c.h.b16 %v2744
          %v3477 = vunpack.c.l.b16 %v2745
          %v3478 = vunpack.c.h.b16 %v2745
          %v3479 = vunpack.c.l.b16 %v2746
          %v3480 = vunpack.c.h.b16 %v2746
          %v3481 = vunpack.c.l.b16 %v2747
          %v3482 = vunpack.c.h.b16 %v2747
          %v3483 = vunpack.c.l.b16 %v2748
          %v3484 = vunpack.c.h.b16 %v2748
          %v3485 = vunpack.c.l.b16 %v2749
          %v3486 = vunpack.c.h.b16 %v2749
          %v3487 = vunpack.c.l.b16 %v2750
          %v3488 = vunpack.c.h.b16 %v2750
          %v3489 = vunpack.c.l.b16 %v2751
          %v3490 = vunpack.c.h.b16 %v2751
          %v3491 = vunpack.c.l.b16 %v2752
          %v3492 = vunpack.c.h.b16 %v2752
          %v3493 = vunpack.c.l.b16 %v2753
          %v3494 = vunpack.c.h.b16 %v2753
          %v3495 = vunpack.c.l.b16 %v2754
          %v3496 = vunpack.c.h.b16 %v2754
          %v3497 = vunpack.c.l.b16 %v2755
          %v3498 = vunpack.c.h.b16 %v2755
          %v3499 = vunpack.c.l.b16 %v2756
          %v3500 = vunpack.c.h.b16 %v2756
          %v3501 = vunpack.c.l.b16 %v2757
          %v3502 = vunpack.c.h.b16 %v2757
          %v3503 = vunpack.c.l.b16 %v2758
          %v3504 = vunpack.c.h.b16 %v2758
          %v3505 = vunpack.c.l.b16 %v2759
          %v3506 = vunpack.c.h.b16 %v2759
          %v3507 = vunpack.c.l.b16 %v2760
          %v3508 = vunpack.c.h.b16 %v2760
          %v3509 = vunpack.c.l.b16 %v2761
          %v3510 = vunpack.c.h.b16 %v2761
          %v3511 = vunpack.c.l.b16 %v2762
          %v3512 = vunpack.c.h.b16 %v2762
          %v3513 = vunpack.c.l.b16 %v2763
          %v3514 = vunpack.c.h.b16 %v2763
          %v3515 = vunpack.c.l.b16 %v2764
          %v3516 = vunpack.c.h.b16 %v2764
          %v3517 = vunpack.c.l.b16 %v2765
          %v3518 = vunpack.c.h.b16 %v2765
          %v3519 = vunpack.c.l.b16 %v2766
          %v3520 = vunpack.c.h.b16 %v2766
          %v3521 = vunpack.c.l.b16 %v2767
          %v3522 = vunpack.c.h.b16 %v2767
          %v3523 = vunpack.c.l.b16 %v2768
          %v3524 = vunpack.c.h.b16 %v2768
          %v3525 = vunpack.c.l.b16 %v2769
          %v3526 = vunpack.c.h.b16 %v2769
          %v3527 = vunpack.c.l.b16 %v2770
          %v3528 = vunpack.c.h.b16 %v2770
          %v3529 = vunpack.c.l.b16 %v2771
          %v3530 = vunpack.c.h.b16 %v2771
          %v3531 = vunpack.c.l.b16 %v2772
          %v3532 = vunpack.c.h.b16 %v2772
          %v3533 = vunpack.c.l.b16 %v2773
          %v3534 = vunpack.c.h.b16 %v2773
          %v3535 = vunpack.c.l.b16 %v2774
          %v3536 = vunpack.c.h.b16 %v2774
          %v3537 = vunpack.c.l.b16 %v2775
          %v3538 = vunpack.c.h.b16 %v2775
          %v3539 = vunpack.c.l.b16 %v2776
          %v3540 = vunpack.c.h.b16 %v2776
          %v3541 = vunpack.c.l.b16 %v2777
          %v3542 = vunpack.c.h.b16 %v2777
          %v3543 = vunpack.c.l.b16 %v2778
          %v3544 = vunpack.c.h.b16 %v2778
          %v3545 = vunpack.c.l.b16 %v2779
          %v3546 = vunpack.c.h.b16 %v2779
          %v3547 = vunpack.c.l.b16 %v2780
          %v3548 = vunpack.c.h.b16 %v2780
          %v3549 = vunpack.c.l.b16 %v2781
          %v3550 = vunpack.c.h.b16 %v2781
          %v3551 = vunpack.c.l.b16 %v2782
          %v3552 = vunpack.c.h.b16 %v2782
          %v3553 = vunpack.c.l.b16 %v2783
          %v3554 = vunpack.c.h.b16 %v2783
          %v3555 = vunpack.c.l.b16 %v2784
          %v3556 = vunpack.c.h.b16 %v2784
          %v3557 = vunpack.c.l.b16 %v2785
          %v3558 = vunpack.c.h.b16 %v2785
          %v3559 = vunpack.c.l.b16 %v2786
          %v3560 = vunpack.c.h.b16 %v2786
          %v3561 = vunpack.c.l.b16 %v2787
          %v3562 = vunpack.c.h.b16 %v2787
          %v3563 = vunpack.c.l.b16 %v2788
          %v3564 = vunpack.c.h.b16 %v2788
          %v3565 = vunpack.c.l.b16 %v2789
          %v3566 = vunpack.c.h.b16 %v2789
          %v3567 = vunpack.c.l.b16 %v2790
          %v3568 = vunpack.c.h.b16 %v2790
          %v3569 = vunpack.c.l.b16 %v2791
          %v3570 = vunpack.c.h.b16 %v2791
          %v3571 = vunpack.c.l.b16 %v2792
          %v3572 = vunpack.c.h.b16 %v2792
          %v3573 = vunpack.c.l.b16 %v2793
          %v3574 = vunpack.c.h.b16 %v2793
          %v3575 = vunpack.c.l.b16 %v2794
          %v3576 = vunpack.c.h.b16 %v2794
          %v3577 = vunpack.c.l.b16 %v2795
          %v3578 = vunpack.c.h.b16 %v2795
          %v3579 = vunpack.c.l.b16 %v2796
          %v3580 = vunpack.c.h.b16 %v2796
          %v3581 = vunpack.c.l.b16 %v2797
          %v3582 = vunpack.c.h.b16 %v2797
          %v3583 = vunpack.c.l.b16 %v2798
          %v3584 = vunpack.c.h.b16 %v2798
          %v3585 = vunpack.c.l.b16 %v2799
          %v3586 = vunpack.c.h.b16 %v2799
          %v3587 = vunpack.c.l.b16 %v2800
          %v3588 = vunpack.c.h.b16 %v2800
          %v3589 = vpack.c.b16 %v3085, %v3077
          %v3590 = vpack.c.b16 %v3086, %v3078
          %v3591 = vpack.c.b16 %v3087, %v3079
          %v3592 = vpack.c.b16 %v3088, %v3080
          %v3593 = vpack.c.b16 %v3089, %v3081
          %v3594 = vpack.c.b16 %v3090, %v3082
          %v3595 = vpack.c.b16 %v3091, %v3083
          %v3596 = vpack.c.b16 %v3092, %v3084
          %v3597 = vpack.c.b16 %v3101, %v3093
          %v3598 = vpack.c.b16 %v3102, %v3094
          %v3599 = vpack.c.b16 %v3103, %v3095
          %v3600 = vpack.c.b16 %v3104, %v3096
          %v3601 = vpack.c.b16 %v3105, %v3097
          %v3602 = vpack.c.b16 %v3106, %v3098
          %v3603 = vpack.c.b16 %v3107, %v3099
          %v3604 = vpack.c.b16 %v3108, %v3100
          %v3605 = vpack.c.b16 %v3117, %v3109
          %v3606 = vpack.c.b16 %v3118, %v3110
          %v3607 = vpack.c.b16 %v3119, %v3111
          %v3608 = vpack.c.b16 %v3120, %v3112
          %v3609 = vpack.c.b16 %v3121, %v3113
          %v3610 = vpack.c.b16 %v3122, %v3114
          %v3611 = vpack.c.b16 %v3123, %v3115
          %v3612 = vpack.c.b16 %v3124, %v3116
          %v3613 = vpack.c.b16 %v3133, %v3125
          %v3614 = vpack.c.b16 %v3134, %v3126
          %v3615 = vpack.c.b16 %v3135, %v3127
          %v3616 = vpack.c.b16 %v3136, %v3128
          %v3617 = vpack.c.b16 %v3137, %v3129
          %v3618 = vpack.c.b16 %v3138, %v3130
          %v3619 = vpack.c.b16 %v3139, %v3131
          %v3620 = vpack.c.b16 %v3140, %v3132
          %v3621 = vpack.c.b16 %v3149, %v3141
          %v3622 = vpack.c.b16 %v3150, %v3142
          %v3623 = vpack.c.b16 %v3151, %v3143
          %v3624 = vpack.c.b16 %v3152, %v3144
          %v3625 = vpack.c.b16 %v3153, %v3145
          %v3626 = vpack.c.b16 %v3154, %v3146
          %v3627 = vpack.c.b16 %v3155, %v3147
          %v3628 = vpack.c.b16 %v3156, %v3148
          %v3629 = vpack.c.b16 %v3165, %v3157
          %v3630 = vpack.c.b16 %v3166, %v3158
          %v3631 = vpack.c.b16 %v3167, %v3159
          %v3632 = vpack.c.b16 %v3168, %v3160
          %v3633 = vpack.c.b16 %v3169, %v3161
          %v3634 = vpack.c.b16 %v3170, %v3162
          %v3635 = vpack.c.b16 %v3171, %v3163
          %v3636 = vpack.c.b16 %v3172, %v3164
          %v3637 = vpack.c.b16 %v3181, %v3173
          %v3638 = vpack.c.b16 %v3182, %v3174
          %v3639 = vpack.c.b16 %v3183, %v3175
          %v3640 = vpack.c.b16 %v3184, %v3176
          %v3641 = vpack.c.b16 %v3185, %v3177
          %v3642 = vpack.c.b16 %v3186, %v3178
          %v3643 = vpack.c.b16 %v3187, %v3179
          %v3644 = vpack.c.b16 %v3188, %v3180
          %v3645 = vpack.c.b16 %v3197, %v3189
          %v3646 = vpack.c.b16 %v3198, %v3190
          %v3647 = vpack.c.b16 %v3199, %v3191
          %v3648 = vpack.c.b16 %v3200, %v3192
          %v3649 = vpack.c.b16 %v3201, %v3193
          %v3650 = vpack.c.b16 %v3202, %v3194
          %v3651 = vpack.c.b16 %v3203, %v3195
          %v3652 = vpack.c.b16 %v3204, %v3196
          %v3653 = vpack.c.b16 %v3213, %v3205
          %v3654 = vpack.c.b16 %v3214, %v3206
          %v3655 = vpack.c.b16 %v3215, %v3207
          %v3656 = vpack.c.b16 %v3216, %v3208
          %v3657 = vpack.c.b16 %v3217, %v3209
          %v3658 = vpack.c.b16 %v3218, %v3210
          %v3659 = vpack.c.b16 %v3219, %v3211
          %v3660 = vpack.c.b16 %v3220, %v3212
          %v3661 = vpack.c.b16 %v3229, %v3221
          %v3662 = vpack.c.b16 %v3230, %v3222
          %v3663 = vpack.c.b16 %v3231, %v3223
          %v3664 = vpack.c.b16 %v3232, %v3224
          %v3665 = vpack.c.b16 %v3233, %v3225
          %v3666 = vpack.c.b16 %v3234, %v3226
          %v3667 = vpack.c.b16 %v3235, %v3227
          %v3668 = vpack.c.b16 %v3236, %v3228
          %v3669 = vpack.c.b16 %v3245, %v3237
          %v3670 = vpack.c.b16 %v3246, %v3238
          %v3671 = vpack.c.b16 %v3247, %v3239
          %v3672 = vpack.c.b16 %v3248, %v3240
          %v3673 = vpack.c.b16 %v3249, %v3241
          %v3674 = vpack.c.b16 %v3250, %v3242
          %v3675 = vpack.c.b16 %v3251, %v3243
          %v3676 = vpack.c.b16 %v3252, %v3244
          %v3677 = vpack.c.b16 %v3261, %v3253
          %v3678 = vpack.c.b16 %v3262, %v3254
          %v3679 = vpack.c.b16 %v3263, %v3255
          %v3680 = vpack.c.b16 %v3264, %v3256
          %v3681 = vpack.c.b16 %v3265, %v3257
          %v3682 = vpack.c.b16 %v3266, %v3258
          %v3683 = vpack.c.b16 %v3267, %v3259
          %v3684 = vpack.c.b16 %v3268, %v3260
          %v3685 = vpack.c.b16 %v3277, %v3269
          %v3686 = vpack.c.b16 %v3278, %v3270
          %v3687 = vpack.c.b16 %v3279, %v3271
          %v3688 = vpack.c.b16 %v3280, %v3272
          %v3689 = vpack.c.b16 %v3281, %v3273
          %v3690 = vpack.c.b16 %v3282, %v3274
          %v3691 = vpack.c.b16 %v3283, %v3275
          %v3692 = vpack.c.b16 %v3284, %v3276
          %v3693 = vpack.c.b16 %v3293, %v3285
          %v3694 = vpack.c.b16 %v3294, %v3286
          %v3695 = vpack.c.b16 %v3295, %v3287
          %v3696 = vpack.c.b16 %v3296, %v3288
          %v3697 = vpack.c.b16 %v3297, %v3289
          %v3698 = vpack.c.b16 %v3298, %v3290
          %v3699 = vpack.c.b16 %v3299, %v3291
          %v3700 = vpack.c.b16 %v3300, %v3292
          %v3701 = vpack.c.b16 %v3309, %v3301
          %v3702 = vpack.c.b16 %v3310, %v3302
          %v3703 = vpack.c.b16 %v3311, %v3303
          %v3704 = vpack.c.b16 %v3312, %v3304
          %v3705 = vpack.c.b16 %v3313, %v3305
          %v3706 = vpack.c.b16 %v3314, %v3306
          %v3707 = vpack.c.b16 %v3315, %v3307
          %v3708 = vpack.c.b16 %v3316, %v3308
          %v3709 = vpack.c.b16 %v3325, %v3317
          %v3710 = vpack.c.b16 %v3326, %v3318
          %v3711 = vpack.c.b16 %v3327, %v3319
          %v3712 = vpack.c.b16 %v3328, %v3320
          %v3713 = vpack.c.b16 %v3329, %v3321
          %v3714 = vpack.c.b16 %v3330, %v3322
          %v3715 = vpack.c.b16 %v3331, %v3323
          %v3716 = vpack.c.b16 %v3332, %v3324
          %v3717 = vpack.c.b16 %v3341, %v3333
          %v3718 = vpack.c.b16 %v3342, %v3334
          %v3719 = vpack.c.b16 %v3343, %v3335
          %v3720 = vpack.c.b16 %v3344, %v3336
          %v3721 = vpack.c.b16 %v3345, %v3337
          %v3722 = vpack.c.b16 %v3346, %v3338
          %v3723 = vpack.c.b16 %v3347, %v3339
          %v3724 = vpack.c.b16 %v3348, %v3340
          %v3725 = vpack.c.b16 %v3357, %v3349
          %v3726 = vpack.c.b16 %v3358, %v3350
          %v3727 = vpack.c.b16 %v3359, %v3351
          %v3728 = vpack.c.b16 %v3360, %v3352
          %v3729 = vpack.c.b16 %v3361, %v3353
          %v3730 = vpack.c.b16 %v3362, %v3354
          %v3731 = vpack.c.b16 %v3363, %v3355
          %v3732 = vpack.c.b16 %v3364, %v3356
          %v3733 = vpack.c.b16 %v3373, %v3365
          %v3734 = vpack.c.b16 %v3374, %v3366
          %v3735 = vpack.c.b16 %v3375, %v3367
          %v3736 = vpack.c.b16 %v3376, %v3368
          %v3737 = vpack.c.b16 %v3377, %v3369
          %v3738 = vpack.c.b16 %v3378, %v3370
          %v3739 = vpack.c.b16 %v3379, %v3371
          %v3740 = vpack.c.b16 %v3380, %v3372
          %v3741 = vpack.c.b16 %v3389, %v3381
          %v3742 = vpack.c.b16 %v3390, %v3382
          %v3743 = vpack.c.b16 %v3391, %v3383
          %v3744 = vpack.c.b16 %v3392, %v3384
          %v3745 = vpack.c.b16 %v3393, %v3385
          %v3746 = vpack.c.b16 %v3394, %v3386
          %v3747 = vpack.c.b16 %v3395, %v3387
          %v3748 = vpack.c.b16 %v3396, %v3388
          %v3749 = vpack.c.b16 %v3405, %v3397
          %v3750 = vpack.c.b16 %v3406, %v3398
          %v3751 = vpack.c.b16 %v3407, %v3399
          %v3752 = vpack.c.b16 %v3408, %v3400
          %v3753 = vpack.c.b16 %v3409, %v3401
          %v3754 = vpack.c.b16 %v3410, %v3402
          %v3755 = vpack.c.b16 %v3411, %v3403
          %v3756 = vpack.c.b16 %v3412, %v3404
          %v3757 = vpack.c.b16 %v3421, %v3413
          %v3758 = vpack.c.b16 %v3422, %v3414
          %v3759 = vpack.c.b16 %v3423, %v3415
          %v3760 = vpack.c.b16 %v3424, %v3416
          %v3761 = vpack.c.b16 %v3425, %v3417
          %v3762 = vpack.c.b16 %v3426, %v3418
          %v3763 = vpack.c.b16 %v3427, %v3419
          %v3764 = vpack.c.b16 %v3428, %v3420
          %v3765 = vpack.c.b16 %v3437, %v3429
          %v3766 = vpack.c.b16 %v3438, %v3430
          %v3767 = vpack.c.b16 %v3439, %v3431
          %v3768 = vpack.c.b16 %v3440, %v3432
          %v3769 = vpack.c.b16 %v3441, %v3433
          %v3770 = vpack.c.b16 %v3442, %v3434
          %v3771 = vpack.c.b16 %v3443, %v3435
          %v3772 = vpack.c.b16 %v3444, %v3436
          %v3773 = vpack.c.b16 %v3453, %v3445
          %v3774 = vpack.c.b16 %v3454, %v3446
          %v3775 = vpack.c.b16 %v3455, %v3447
          %v3776 = vpack.c.b16 %v3456, %v3448
          %v3777 = vpack.c.b16 %v3457, %v3449
          %v3778 = vpack.c.b16 %v3458, %v3450
          %v3779 = vpack.c.b16 %v3459, %v3451
          %v3780 = vpack.c.b16 %v3460, %v3452
          %v3781 = vpack.c.b16 %v3469, %v3461
          %v3782 = vpack.c.b16 %v3470, %v3462
          %v3783 = vpack.c.b16 %v3471, %v3463
          %v3784 = vpack.c.b16 %v3472, %v3464
          %v3785 = vpack.c.b16 %v3473, %v3465
          %v3786 = vpack.c.b16 %v3474, %v3466
          %v3787 = vpack.c.b16 %v3475, %v3467
          %v3788 = vpack.c.b16 %v3476, %v3468
          %v3789 = vpack.c.b16 %v3485, %v3477
          %v3790 = vpack.c.b16 %v3486, %v3478
          %v3791 = vpack.c.b16 %v3487, %v3479
          %v3792 = vpack.c.b16 %v3488, %v3480
          %v3793 = vpack.c.b16 %v3489, %v3481
          %v3794 = vpack.c.b16 %v3490, %v3482
          %v3795 = vpack.c.b16 %v3491, %v3483
          %v3796 = vpack.c.b16 %v3492, %v3484
          %v3797 = vpack.c.b16 %v3501, %v3493
          %v3798 = vpack.c.b16 %v3502, %v3494
          %v3799 = vpack.c.b16 %v3503, %v3495
          %v3800 = vpack.c.b16 %v3504, %v3496
          %v3801 = vpack.c.b16 %v3505, %v3497
          %v3802 = vpack.c.b16 %v3506, %v3498
          %v3803 = vpack.c.b16 %v3507, %v3499
          %v3804 = vpack.c.b16 %v3508, %v3500
          %v3805 = vpack.c.b16 %v3517, %v3509
          %v3806 = vpack.c.b16 %v3518, %v3510
          %v3807 = vpack.c.b16 %v3519, %v3511
          %v3808 = vpack.c.b16 %v3520, %v3512
          %v3809 = vpack.c.b16 %v3521, %v3513
          %v3810 = vpack.c.b16 %v3522, %v3514
          %v3811 = vpack.c.b16 %v3523, %v3515
          %v3812 = vpack.c.b16 %v3524, %v3516
          %v3813 = vpack.c.b16 %v3533, %v3525
          %v3814 = vpack.c.b16 %v3534, %v3526
          %v3815 = vpack.c.b16 %v3535, %v3527
          %v3816 = vpack.c.b16 %v3536, %v3528
          %v3817 = vpack.c.b16 %v3537, %v3529
          %v3818 = vpack.c.b16 %v3538, %v3530
          %v3819 = vpack.c.b16 %v3539, %v3531
          %v3820 = vpack.c.b16 %v3540, %v3532
          %v3821 = vpack.c.b16 %v3549, %v3541
          %v3822 = vpack.c.b16 %v3550, %v3542
          %v3823 = vpack.c.b16 %v3551, %v3543
          %v3824 = vpack.c.b16 %v3552, %v3544
          %v3825 = vpack.c.b16 %v3553, %v3545
          %v3826 = vpack.c.b16 %v3554, %v3546
          %v3827 = vpack.c.b16 %v3555, %v3547
          %v3828 = vpack.c.b16 %v3556, %v3548
          %v3829 = vpack.c.b16 %v3565, %v3557
          %v3830 = vpack.c.b16 %v3566, %v3558
          %v3831 = vpack.c.b16 %v3567, %v3559
          %v3832 = vpack.c.b16 %v3568, %v3560
          %v3833 = vpack.c.b16 %v3569, %v3561
          %v3834 = vpack.c.b16 %v3570, %v3562
          %v3835 = vpack.c.b16 %v3571, %v3563
          %v3836 = vpack.c.b16 %v3572, %v3564
          %v3837 = vpack.c.b16 %v3581, %v3573
          %v3838 = vpack.c.b16 %v3582, %v3574
          %v3839 = vpack.c.b16 %v3583, %v3575
          %v3840 = vpack.c.b16 %v3584, %v3576
          %v3841 = vpack.c.b16 %v3585, %v3577
          %v3842 = vpack.c.b16 %v3586, %v3578
          %v3843 = vpack.c.b16 %v3587, %v3579
          %v3844 = vpack.c.b16 %v3588, %v3580
          %4101 = vmatpush.bf16.msra.mxu0 %v3645
          %4102 = vmatpush.bf16.msra.mxu0 %v3637
          %4103 = vmatpush.bf16.msra.mxu0 %v3629
          %4104 = vmatpush.bf16.msra.mxu0 %v3621
          %4105 = vmatpush.bf16.msra.mxu0 %v3613
          %4106 = vmatpush.bf16.msra.mxu0 %v3605
          %4107 = vmatpush.bf16.msra.mxu0 %v3597
          %4108 = vmatpush.bf16.msra.mxu0 %v3589
          %4109 = vmatmul.bf16.gmra.mxu0 %v2813
          %v4110 = vpop.f32.mrf.mxu0
          %v4111 = vadd.f32 0.0, %v4110
          %v4112 = vpop.f32.mrf.mxu0
          %v4113 = vadd.f32 0.0, %v4112
          %4114 = vdwg.mxu0
          %4115 = vmatpush.bf16.msra.mxu0 %v3709
          %4116 = vmatpush.bf16.msra.mxu0 %v3701
          %4117 = vmatpush.bf16.msra.mxu0 %v3693
          %4118 = vmatpush.bf16.msra.mxu0 %v3685
          %4119 = vmatpush.bf16.msra.mxu0 %v3677
          %4120 = vmatpush.bf16.msra.mxu0 %v3669
          %4121 = vmatpush.bf16.msra.mxu0 %v3661
          %4122 = vmatpush.bf16.msra.mxu0 %v3653
          %4123 = vmatmul.bf16.gmra.mxu0 %v2814
          %v4124 = vpop.f32.mrf.mxu0
          %v4125 = vadd.f32 %v4111, %v4124
          %v4126 = vpop.f32.mrf.mxu0
          %v4127 = vadd.f32 %v4113, %v4126
          %4128 = vdwg.mxu0
          %4129 = vmatpush.bf16.msra.mxu0 %v3773
          %4130 = vmatpush.bf16.msra.mxu0 %v3765
          %4131 = vmatpush.bf16.msra.mxu0 %v3757
          %4132 = vmatpush.bf16.msra.mxu0 %v3749
          %4133 = vmatpush.bf16.msra.mxu0 %v3741
          %4134 = vmatpush.bf16.msra.mxu0 %v3733
          %4135 = vmatpush.bf16.msra.mxu0 %v3725
          %4136 = vmatpush.bf16.msra.mxu0 %v3717
          %4137 = vmatmul.bf16.gmra.mxu0 %v2815
          %v4138 = vpop.f32.mrf.mxu0
          %v4139 = vadd.f32 %v4125, %v4138
          %v4140 = vpop.f32.mrf.mxu0
          %v4141 = vadd.f32 %v4127, %v4140
          %4142 = vdwg.mxu0
          %4143 = vmatpush.bf16.msra.mxu0 %v3837
          %4144 = vmatpush.bf16.msra.mxu0 %v3829
          %4145 = vmatpush.bf16.msra.mxu0 %v3821
          %4146 = vmatpush.bf16.msra.mxu0 %v3813
          %4147 = vmatpush.bf16.msra.mxu0 %v3805
          %4148 = vmatpush.bf16.msra.mxu0 %v3797
          %4149 = vmatpush.bf16.msra.mxu0 %v3789
          %4150 = vmatpush.bf16.msra.mxu0 %v3781
          %4151 = vmatmul.bf16.gmra.mxu0 %v2816
          %v4152 = vpop.f32.mrf.mxu0
          %v4153 = vadd.f32 %v4139, %v4152
          %v4154 = vpop.f32.mrf.mxu0
          %v4155 = vadd.f32 %v4141, %v4154
          %4156 = vdwg.mxu0
          %4157 = vmatpush.bf16.msra.mxu0 %v3646
          %4158 = vmatpush.bf16.msra.mxu0 %v3638
          %4159 = vmatpush.bf16.msra.mxu0 %v3630
          %4160 = vmatpush.bf16.msra.mxu0 %v3622
          %4161 = vmatpush.bf16.msra.mxu0 %v3614
          %4162 = vmatpush.bf16.msra.mxu0 %v3606
          %4163 = vmatpush.bf16.msra.mxu0 %v3598
          %4164 = vmatpush.bf16.msra.mxu0 %v3590
          %4165 = vmatmul.bf16.gmra.mxu0 %v2813
          %v4166 = vpop.f32.mrf.mxu0
          %v4167 = vadd.f32 0.0, %v4166
          %v4168 = vpop.f32.mrf.mxu0
          %v4169 = vadd.f32 0.0, %v4168
          %4170 = vdwg.mxu0
          %4171 = vmatpush.bf16.msra.mxu0 %v3710
          %4172 = vmatpush.bf16.msra.mxu0 %v3702
          %4173 = vmatpush.bf16.msra.mxu0 %v3694
          %4174 = vmatpush.bf16.msra.mxu0 %v3686
          %4175 = vmatpush.bf16.msra.mxu0 %v3678
          %4176 = vmatpush.bf16.msra.mxu0 %v3670
          %4177 = vmatpush.bf16.msra.mxu0 %v3662
          %4178 = vmatpush.bf16.msra.mxu0 %v3654
          %4179 = vmatmul.bf16.gmra.mxu0 %v2814
          %v4180 = vpop.f32.mrf.mxu0
          %v4181 = vadd.f32 %v4167, %v4180
          %v4182 = vpop.f32.mrf.mxu0
          %v4183 = vadd.f32 %v4169, %v4182
          %4184 = vdwg.mxu0
          %4185 = vmatpush.bf16.msra.mxu0 %v3774
          %4186 = vmatpush.bf16.msra.mxu0 %v3766
          %4187 = vmatpush.bf16.msra.mxu0 %v3758
          %4188 = vmatpush.bf16.msra.mxu0 %v3750
          %4189 = vmatpush.bf16.msra.mxu0 %v3742
          %4190 = vmatpush.bf16.msra.mxu0 %v3734
          %4191 = vmatpush.bf16.msra.mxu0 %v3726
          %4192 = vmatpush.bf16.msra.mxu0 %v3718
          %4193 = vmatmul.bf16.gmra.mxu0 %v2815
          %v4194 = vpop.f32.mrf.mxu0
          %v4195 = vadd.f32 %v4181, %v4194
          %v4196 = vpop.f32.mrf.mxu0
          %v4197 = vadd.f32 %v4183, %v4196
          %4198 = vdwg.mxu0
          %4199 = vmatpush.bf16.msra.mxu0 %v3838
          %4200 = vmatpush.bf16.msra.mxu0 %v3830
          %4201 = vmatpush.bf16.msra.mxu0 %v3822
          %4202 = vmatpush.bf16.msra.mxu0 %v3814
          %4203 = vmatpush.bf16.msra.mxu0 %v3806
          %4204 = vmatpush.bf16.msra.mxu0 %v3798
          %4205 = vmatpush.bf16.msra.mxu0 %v3790
          %4206 = vmatpush.bf16.msra.mxu0 %v3782
          %4207 = vmatmul.bf16.gmra.mxu0 %v2816
          %v4208 = vpop.f32.mrf.mxu0
          %v4209 = vadd.f32 %v4195, %v4208
          %v4210 = vpop.f32.mrf.mxu0
          %v4211 = vadd.f32 %v4197, %v4210
          %4212 = vdwg.mxu0
          %4213 = vmatpush.bf16.msra.mxu0 %v3647
          %4214 = vmatpush.bf16.msra.mxu0 %v3639
          %4215 = vmatpush.bf16.msra.mxu0 %v3631
          %4216 = vmatpush.bf16.msra.mxu0 %v3623
          %4217 = vmatpush.bf16.msra.mxu0 %v3615
          %4218 = vmatpush.bf16.msra.mxu0 %v3607
          %4219 = vmatpush.bf16.msra.mxu0 %v3599
          %4220 = vmatpush.bf16.msra.mxu0 %v3591
          %4221 = vmatmul.bf16.gmra.mxu0 %v2813
          %v4222 = vpop.f32.mrf.mxu0
          %v4223 = vadd.f32 0.0, %v4222
          %v4224 = vpop.f32.mrf.mxu0
          %v4225 = vadd.f32 0.0, %v4224
          %4226 = vdwg.mxu0
          %4227 = vmatpush.bf16.msra.mxu0 %v3711
          %4228 = vmatpush.bf16.msra.mxu0 %v3703
          %4229 = vmatpush.bf16.msra.mxu0 %v3695
          %4230 = vmatpush.bf16.msra.mxu0 %v3687
          %4231 = vmatpush.bf16.msra.mxu0 %v3679
          %4232 = vmatpush.bf16.msra.mxu0 %v3671
          %4233 = vmatpush.bf16.msra.mxu0 %v3663
          %4234 = vmatpush.bf16.msra.mxu0 %v3655
          %4235 = vmatmul.bf16.gmra.mxu0 %v2814
          %v4236 = vpop.f32.mrf.mxu0
          %v4237 = vadd.f32 %v4223, %v4236
          %v4238 = vpop.f32.mrf.mxu0
          %v4239 = vadd.f32 %v4225, %v4238
          %4240 = vdwg.mxu0
          %4241 = vmatpush.bf16.msra.mxu0 %v3775
          %4242 = vmatpush.bf16.msra.mxu0 %v3767
          %4243 = vmatpush.bf16.msra.mxu0 %v3759
          %4244 = vmatpush.bf16.msra.mxu0 %v3751
          %4245 = vmatpush.bf16.msra.mxu0 %v3743
          %4246 = vmatpush.bf16.msra.mxu0 %v3735
          %4247 = vmatpush.bf16.msra.mxu0 %v3727
          %4248 = vmatpush.bf16.msra.mxu0 %v3719
          %4249 = vmatmul.bf16.gmra.mxu0 %v2815
          %v4250 = vpop.f32.mrf.mxu0
          %v4251 = vadd.f32 %v4237, %v4250
          %v4252 = vpop.f32.mrf.mxu0
          %v4253 = vadd.f32 %v4239, %v4252
          %4254 = vdwg.mxu0
          %4255 = vmatpush.bf16.msra.mxu0 %v3839
          %4256 = vmatpush.bf16.msra.mxu0 %v3831
          %4257 = vmatpush.bf16.msra.mxu0 %v3823
          %4258 = vmatpush.bf16.msra.mxu0 %v3815
          %4259 = vmatpush.bf16.msra.mxu0 %v3807
          %4260 = vmatpush.bf16.msra.mxu0 %v3799
          %4261 = vmatpush.bf16.msra.mxu0 %v3791
          %4262 = vmatpush.bf16.msra.mxu0 %v3783
          %4263 = vmatmul.bf16.gmra.mxu0 %v2816
          %v4264 = vpop.f32.mrf.mxu0
          %v4265 = vadd.f32 %v4251, %v4264
          %v4266 = vpop.f32.mrf.mxu0
          %v4267 = vadd.f32 %v4253, %v4266
          %4268 = vdwg.mxu0
          %4269 = vmatpush.bf16.msra.mxu0 %v3648
          %4270 = vmatpush.bf16.msra.mxu0 %v3640
          %4271 = vmatpush.bf16.msra.mxu0 %v3632
          %4272 = vmatpush.bf16.msra.mxu0 %v3624
          %4273 = vmatpush.bf16.msra.mxu0 %v3616
          %4274 = vmatpush.bf16.msra.mxu0 %v3608
          %4275 = vmatpush.bf16.msra.mxu0 %v3600
          %4276 = vmatpush.bf16.msra.mxu0 %v3592
          %4277 = vmatmul.bf16.gmra.mxu0 %v2813
          %v4278 = vpop.f32.mrf.mxu0
          %v4279 = vadd.f32 0.0, %v4278
          %v4280 = vpop.f32.mrf.mxu0
          %v4281 = vadd.f32 0.0, %v4280
          %4282 = vdwg.mxu0
          %4283 = vmatpush.bf16.msra.mxu0 %v3712
          %4284 = vmatpush.bf16.msra.mxu0 %v3704
          %4285 = vmatpush.bf16.msra.mxu0 %v3696
          %4286 = vmatpush.bf16.msra.mxu0 %v3688
          %4287 = vmatpush.bf16.msra.mxu0 %v3680
          %4288 = vmatpush.bf16.msra.mxu0 %v3672
          %4289 = vmatpush.bf16.msra.mxu0 %v3664
          %4290 = vmatpush.bf16.msra.mxu0 %v3656
          %4291 = vmatmul.bf16.gmra.mxu0 %v2814
          %v4292 = vpop.f32.mrf.mxu0
          %v4293 = vadd.f32 %v4279, %v4292
          %v4294 = vpop.f32.mrf.mxu0
          %v4295 = vadd.f32 %v4281, %v4294
          %4296 = vdwg.mxu0
          %4297 = vmatpush.bf16.msra.mxu0 %v3776
          %4298 = vmatpush.bf16.msra.mxu0 %v3768
          %4299 = vmatpush.bf16.msra.mxu0 %v3760
          %4300 = vmatpush.bf16.msra.mxu0 %v3752
          %4301 = vmatpush.bf16.msra.mxu0 %v3744
          %4302 = vmatpush.bf16.msra.mxu0 %v3736
          %4303 = vmatpush.bf16.msra.mxu0 %v3728
          %4304 = vmatpush.bf16.msra.mxu0 %v3720
          %4305 = vmatmul.bf16.gmra.mxu0 %v2815
          %v4306 = vpop.f32.mrf.mxu0
          %v4307 = vadd.f32 %v4293, %v4306
          %v4308 = vpop.f32.mrf.mxu0
          %v4309 = vadd.f32 %v4295, %v4308
          %4310 = vdwg.mxu0
          %4311 = vmatpush.bf16.msra.mxu0 %v3840
          %4312 = vmatpush.bf16.msra.mxu0 %v3832
          %4313 = vmatpush.bf16.msra.mxu0 %v3824
          %4314 = vmatpush.bf16.msra.mxu0 %v3816
          %4315 = vmatpush.bf16.msra.mxu0 %v3808
          %4316 = vmatpush.bf16.msra.mxu0 %v3800
          %4317 = vmatpush.bf16.msra.mxu0 %v3792
          %4318 = vmatpush.bf16.msra.mxu0 %v3784
          %4319 = vmatmul.bf16.gmra.mxu0 %v2816
          %v4320 = vpop.f32.mrf.mxu0
          %v4321 = vadd.f32 %v4307, %v4320
          %v4322 = vpop.f32.mrf.mxu0
          %v4323 = vadd.f32 %v4309, %v4322
          %4324 = vdwg.mxu0
          %4325 = vmatpush.bf16.msra.mxu0 %v3649
          %4326 = vmatpush.bf16.msra.mxu0 %v3641
          %4327 = vmatpush.bf16.msra.mxu0 %v3633
          %4328 = vmatpush.bf16.msra.mxu0 %v3625
          %4329 = vmatpush.bf16.msra.mxu0 %v3617
          %4330 = vmatpush.bf16.msra.mxu0 %v3609
          %4331 = vmatpush.bf16.msra.mxu0 %v3601
          %4332 = vmatpush.bf16.msra.mxu0 %v3593
          %4333 = vmatmul.bf16.gmra.mxu0 %v2813
          %v4334 = vpop.f32.mrf.mxu0
          %v4335 = vadd.f32 0.0, %v4334
          %v4336 = vpop.f32.mrf.mxu0
          %v4337 = vadd.f32 0.0, %v4336
          %4338 = vdwg.mxu0
          %4339 = vmatpush.bf16.msra.mxu0 %v3713
          %4340 = vmatpush.bf16.msra.mxu0 %v3705
          %4341 = vmatpush.bf16.msra.mxu0 %v3697
          %4342 = vmatpush.bf16.msra.mxu0 %v3689
          %4343 = vmatpush.bf16.msra.mxu0 %v3681
          %4344 = vmatpush.bf16.msra.mxu0 %v3673
          %4345 = vmatpush.bf16.msra.mxu0 %v3665
          %4346 = vmatpush.bf16.msra.mxu0 %v3657
          %4347 = vmatmul.bf16.gmra.mxu0 %v2814
          %v4348 = vpop.f32.mrf.mxu0
          %v4349 = vadd.f32 %v4335, %v4348
          %v4350 = vpop.f32.mrf.mxu0
          %v4351 = vadd.f32 %v4337, %v4350
          %4352 = vdwg.mxu0
          %4353 = vmatpush.bf16.msra.mxu0 %v3777
          %4354 = vmatpush.bf16.msra.mxu0 %v3769
          %4355 = vmatpush.bf16.msra.mxu0 %v3761
          %4356 = vmatpush.bf16.msra.mxu0 %v3753
          %4357 = vmatpush.bf16.msra.mxu0 %v3745
          %4358 = vmatpush.bf16.msra.mxu0 %v3737
          %4359 = vmatpush.bf16.msra.mxu0 %v3729
          %4360 = vmatpush.bf16.msra.mxu0 %v3721
          %4361 = vmatmul.bf16.gmra.mxu0 %v2815
          %v4362 = vpop.f32.mrf.mxu0
          %v4363 = vadd.f32 %v4349, %v4362
          %v4364 = vpop.f32.mrf.mxu0
          %v4365 = vadd.f32 %v4351, %v4364
          %4366 = vdwg.mxu0
          %4367 = vmatpush.bf16.msra.mxu0 %v3841
          %4368 = vmatpush.bf16.msra.mxu0 %v3833
          %4369 = vmatpush.bf16.msra.mxu0 %v3825
          %4370 = vmatpush.bf16.msra.mxu0 %v3817
          %4371 = vmatpush.bf16.msra.mxu0 %v3809
          %4372 = vmatpush.bf16.msra.mxu0 %v3801
          %4373 = vmatpush.bf16.msra.mxu0 %v3793
          %4374 = vmatpush.bf16.msra.mxu0 %v3785
          %4375 = vmatmul.bf16.gmra.mxu0 %v2816
          %v4376 = vpop.f32.mrf.mxu0
          %v4377 = vadd.f32 %v4363, %v4376
          %v4378 = vpop.f32.mrf.mxu0
          %v4379 = vadd.f32 %v4365, %v4378
          %4380 = vdwg.mxu0
          %4381 = vmatpush.bf16.msra.mxu0 %v3650
          %4382 = vmatpush.bf16.msra.mxu0 %v3642
          %4383 = vmatpush.bf16.msra.mxu0 %v3634
          %4384 = vmatpush.bf16.msra.mxu0 %v3626
          %4385 = vmatpush.bf16.msra.mxu0 %v3618
          %4386 = vmatpush.bf16.msra.mxu0 %v3610
          %4387 = vmatpush.bf16.msra.mxu0 %v3602
          %4388 = vmatpush.bf16.msra.mxu0 %v3594
          %4389 = vmatmul.bf16.gmra.mxu0 %v2813
          %v4390 = vpop.f32.mrf.mxu0
          %v4391 = vadd.f32 0.0, %v4390
          %v4392 = vpop.f32.mrf.mxu0
          %v4393 = vadd.f32 0.0, %v4392
          %4394 = vdwg.mxu0
          %4395 = vmatpush.bf16.msra.mxu0 %v3714
          %4396 = vmatpush.bf16.msra.mxu0 %v3706
          %4397 = vmatpush.bf16.msra.mxu0 %v3698
          %4398 = vmatpush.bf16.msra.mxu0 %v3690
          %4399 = vmatpush.bf16.msra.mxu0 %v3682
          %4400 = vmatpush.bf16.msra.mxu0 %v3674
          %4401 = vmatpush.bf16.msra.mxu0 %v3666
          %4402 = vmatpush.bf16.msra.mxu0 %v3658
          %4403 = vmatmul.bf16.gmra.mxu0 %v2814
          %v4404 = vpop.f32.mrf.mxu0
          %v4405 = vadd.f32 %v4391, %v4404
          %v4406 = vpop.f32.mrf.mxu0
          %v4407 = vadd.f32 %v4393, %v4406
          %4408 = vdwg.mxu0
          %4409 = vmatpush.bf16.msra.mxu0 %v3778
          %4410 = vmatpush.bf16.msra.mxu0 %v3770
          %4411 = vmatpush.bf16.msra.mxu0 %v3762
          %4412 = vmatpush.bf16.msra.mxu0 %v3754
          %4413 = vmatpush.bf16.msra.mxu0 %v3746
          %4414 = vmatpush.bf16.msra.mxu0 %v3738
          %4415 = vmatpush.bf16.msra.mxu0 %v3730
          %4416 = vmatpush.bf16.msra.mxu0 %v3722
          %4417 = vmatmul.bf16.gmra.mxu0 %v2815
          %v4418 = vpop.f32.mrf.mxu0
          %v4419 = vadd.f32 %v4405, %v4418
          %v4420 = vpop.f32.mrf.mxu0
          %v4421 = vadd.f32 %v4407, %v4420
          %4422 = vdwg.mxu0
          %4423 = vmatpush.bf16.msra.mxu0 %v3842
          %4424 = vmatpush.bf16.msra.mxu0 %v3834
          %4425 = vmatpush.bf16.msra.mxu0 %v3826
          %4426 = vmatpush.bf16.msra.mxu0 %v3818
          %4427 = vmatpush.bf16.msra.mxu0 %v3810
          %4428 = vmatpush.bf16.msra.mxu0 %v3802
          %4429 = vmatpush.bf16.msra.mxu0 %v3794
          %4430 = vmatpush.bf16.msra.mxu0 %v3786
          %4431 = vmatmul.bf16.gmra.mxu0 %v2816
          %v4432 = vpop.f32.mrf.mxu0
          %v4433 = vadd.f32 %v4419, %v4432
          %v4434 = vpop.f32.mrf.mxu0
          %v4435 = vadd.f32 %v4421, %v4434
          %4436 = vdwg.mxu0
          %4437 = vmatpush.bf16.msra.mxu0 %v3651
          %4438 = vmatpush.bf16.msra.mxu0 %v3643
          %4439 = vmatpush.bf16.msra.mxu0 %v3635
          %4440 = vmatpush.bf16.msra.mxu0 %v3627
          %4441 = vmatpush.bf16.msra.mxu0 %v3619
          %4442 = vmatpush.bf16.msra.mxu0 %v3611
          %4443 = vmatpush.bf16.msra.mxu0 %v3603
          %4444 = vmatpush.bf16.msra.mxu0 %v3595
          %4445 = vmatmul.bf16.gmra.mxu0 %v2813
          %v4446 = vpop.f32.mrf.mxu0
          %v4447 = vadd.f32 0.0, %v4446
          %v4448 = vpop.f32.mrf.mxu0
          %v4449 = vadd.f32 0.0, %v4448
          %4450 = vdwg.mxu0
          %4451 = vmatpush.bf16.msra.mxu0 %v3715
          %4452 = vmatpush.bf16.msra.mxu0 %v3707
          %4453 = vmatpush.bf16.msra.mxu0 %v3699
          %4454 = vmatpush.bf16.msra.mxu0 %v3691
          %4455 = vmatpush.bf16.msra.mxu0 %v3683
          %4456 = vmatpush.bf16.msra.mxu0 %v3675
          %4457 = vmatpush.bf16.msra.mxu0 %v3667
          %4458 = vmatpush.bf16.msra.mxu0 %v3659
          %4459 = vmatmul.bf16.gmra.mxu0 %v2814
          %v4460 = vpop.f32.mrf.mxu0
          %v4461 = vadd.f32 %v4447, %v4460
          %v4462 = vpop.f32.mrf.mxu0
          %v4463 = vadd.f32 %v4449, %v4462
          %4464 = vdwg.mxu0
          %4465 = vmatpush.bf16.msra.mxu0 %v3779
          %4466 = vmatpush.bf16.msra.mxu0 %v3771
          %4467 = vmatpush.bf16.msra.mxu0 %v3763
          %4468 = vmatpush.bf16.msra.mxu0 %v3755
          %4469 = vmatpush.bf16.msra.mxu0 %v3747
          %4470 = vmatpush.bf16.msra.mxu0 %v3739
          %4471 = vmatpush.bf16.msra.mxu0 %v3731
          %4472 = vmatpush.bf16.msra.mxu0 %v3723
          %4473 = vmatmul.bf16.gmra.mxu0 %v2815
          %v4474 = vpop.f32.mrf.mxu0
          %v4475 = vadd.f32 %v4461, %v4474
          %v4476 = vpop.f32.mrf.mxu0
          %v4477 = vadd.f32 %v4463, %v4476
          %4478 = vdwg.mxu0
          %4479 = vmatpush.bf16.msra.mxu0 %v3843
          %4480 = vmatpush.bf16.msra.mxu0 %v3835
          %4481 = vmatpush.bf16.msra.mxu0 %v3827
          %4482 = vmatpush.bf16.msra.mxu0 %v3819
          %4483 = vmatpush.bf16.msra.mxu0 %v3811
          %4484 = vmatpush.bf16.msra.mxu0 %v3803
          %4485 = vmatpush.bf16.msra.mxu0 %v3795
          %4486 = vmatpush.bf16.msra.mxu0 %v3787
          %4487 = vmatmul.bf16.gmra.mxu0 %v2816
          %v4488 = vpop.f32.mrf.mxu0
          %v4489 = vadd.f32 %v4475, %v4488
          %v4490 = vpop.f32.mrf.mxu0
          %v4491 = vadd.f32 %v4477, %v4490
          %4492 = vdwg.mxu0
          %4493 = vmatpush.bf16.msra.mxu0 %v3652
          %4494 = vmatpush.bf16.msra.mxu0 %v3644
          %4495 = vmatpush.bf16.msra.mxu0 %v3636
          %4496 = vmatpush.bf16.msra.mxu0 %v3628
          %4497 = vmatpush.bf16.msra.mxu0 %v3620
          %4498 = vmatpush.bf16.msra.mxu0 %v3612
          %4499 = vmatpush.bf16.msra.mxu0 %v3604
          %4500 = vmatpush.bf16.msra.mxu0 %v3596
          %4501 = vmatmul.bf16.gmra.mxu0 %v2813
          %v4502 = vpop.f32.mrf.mxu0
          %v4503 = vadd.f32 0.0, %v4502
          %v4504 = vpop.f32.mrf.mxu0
          %v4505 = vadd.f32 0.0, %v4504
          %4506 = vdwg.mxu0
          %4507 = vmatpush.bf16.msra.mxu0 %v3716
          %4508 = vmatpush.bf16.msra.mxu0 %v3708
          %4509 = vmatpush.bf16.msra.mxu0 %v3700
          %4510 = vmatpush.bf16.msra.mxu0 %v3692
          %4511 = vmatpush.bf16.msra.mxu0 %v3684
          %4512 = vmatpush.bf16.msra.mxu0 %v3676
          %4513 = vmatpush.bf16.msra.mxu0 %v3668
          %4514 = vmatpush.bf16.msra.mxu0 %v3660
          %4515 = vmatmul.bf16.gmra.mxu0 %v2814
          %v4516 = vpop.f32.mrf.mxu0
          %v4517 = vadd.f32 %v4503, %v4516
          %v4518 = vpop.f32.mrf.mxu0
          %v4519 = vadd.f32 %v4505, %v4518
          %4520 = vdwg.mxu0
          %4521 = vmatpush.bf16.msra.mxu0 %v3780
          %4522 = vmatpush.bf16.msra.mxu0 %v3772
          %4523 = vmatpush.bf16.msra.mxu0 %v3764
          %4524 = vmatpush.bf16.msra.mxu0 %v3756
          %4525 = vmatpush.bf16.msra.mxu0 %v3748
          %4526 = vmatpush.bf16.msra.mxu0 %v3740
          %4527 = vmatpush.bf16.msra.mxu0 %v3732
          %4528 = vmatpush.bf16.msra.mxu0 %v3724
          %4529 = vmatmul.bf16.gmra.mxu0 %v2815
          %v4530 = vpop.f32.mrf.mxu0
          %v4531 = vadd.f32 %v4517, %v4530
          %v4532 = vpop.f32.mrf.mxu0
          %v4533 = vadd.f32 %v4519, %v4532
          %4534 = vdwg.mxu0
          %4535 = vmatpush.bf16.msra.mxu0 %v3844
          %4536 = vmatpush.bf16.msra.mxu0 %v3836
          %4537 = vmatpush.bf16.msra.mxu0 %v3828
          %4538 = vmatpush.bf16.msra.mxu0 %v3820
          %4539 = vmatpush.bf16.msra.mxu0 %v3812
          %4540 = vmatpush.bf16.msra.mxu0 %v3804
          %4541 = vmatpush.bf16.msra.mxu0 %v3796
          %4542 = vmatpush.bf16.msra.mxu0 %v3788
          %4543 = vmatmul.bf16.gmra.mxu0 %v2816
          %v4544 = vpop.f32.mrf.mxu0
          %v4545 = vadd.f32 %v4531, %v4544
          %v4546 = vpop.f32.mrf.mxu0
          %v4547 = vadd.f32 %v4533, %v4546
          %4548 = vdwg.mxu0
          %v4549 = vadd.f32 %v2525, %v4153
          %v4550 = vadd.f32 %v2526, %v4209
          %v4551 = vadd.f32 %v2527, %v4265
          %v4552 = vadd.f32 %v2528, %v4321
          %v4553 = vadd.f32 %v2529, %v4377
          %v4554 = vadd.f32 %v2530, %v4433
          %v4555 = vadd.f32 %v2531, %v4489
          %v4556 = vadd.f32 %v2532, %v4545
          %v4557 = vadd.f32 %v2533, %v4155
          %v4558 = vadd.f32 %v2534, %v4211
          %v4559 = vadd.f32 %v2535, %v4267
          %v4560 = vadd.f32 %v2536, %v4323
          %v4561 = vadd.f32 %v2537, %v4379
          %v4562 = vadd.f32 %v2538, %v4435
          %v4563 = vadd.f32 %v2539, %v4491
          %v4564 = vadd.f32 %v2540, %v4547
          %4565 = vst [vmem:[#allocation2] sm:$0xff] %v4549
          %4566 = vst [vmem:[#allocation2 + $0x8] sm:$0xff] %v4550
          %4567 = vst [vmem:[#allocation2 + $0x10] sm:$0xff] %v4551
          %4568 = vst [vmem:[#allocation2 + $0x18] sm:$0xff] %v4552
          %4569 = vst [vmem:[#allocation2 + $0x20] sm:$0xff] %v4553
          %4570 = vst [vmem:[#allocation2 + $0x28] sm:$0xff] %v4554
          %4571 = vst [vmem:[#allocation2 + $0x30] sm:$0xff] %v4555
          %4572 = vst [vmem:[#allocation2 + $0x38] sm:$0xff] %v4556
          %4573 = vst [vmem:[#allocation2 + $0x40] sm:$0xff] %v4557
          %4574 = vst [vmem:[#allocation2 + $0x48] sm:$0xff] %v4558
          %4575 = vst [vmem:[#allocation2 + $0x50] sm:$0xff] %v4559
          %4576 = vst [vmem:[#allocation2 + $0x58] sm:$0xff] %v4560
          %4577 = vst [vmem:[#allocation2 + $0x60] sm:$0xff] %v4561
          %4578 = vst [vmem:[#allocation2 + $0x68] sm:$0xff] %v4562
          %4579 = vst [vmem:[#allocation2 + $0x70] sm:$0xff] %v4563
          %4580 = vst [vmem:[#allocation2 + $0x78] sm:$0xff] %v4564
        $region80: #{tpu_custom_call.1} parent=43 // pred_fallthru
          _
        %p4581 = scmp.eq.s32.totalorder %s31, 3
        // Predicated region
        $region81: #{tpu_custom_call.1} parent=43 // pred_check
          %p4582 = pneg %p4581
        $region82: #{tpu_custom_call.1} parent=43 // pred_check_branch
          %4584 = sbr.rel (%p4582) target = $region84
        $region83: #{tpu_custom_call.1} parent=43 // pred_region
          %v4585 = vld [vmem:[#allocation2] sm:$0xff]
          %v4586 = vld [vmem:[#allocation2 + $0x8] sm:$0xff]
          %v4587 = vld [vmem:[#allocation2 + $0x10] sm:$0xff]
          %v4588 = vld [vmem:[#allocation2 + $0x18] sm:$0xff]
          %v4589 = vld [vmem:[#allocation2 + $0x20] sm:$0xff]
          %v4590 = vld [vmem:[#allocation2 + $0x28] sm:$0xff]
          %v4591 = vld [vmem:[#allocation2 + $0x30] sm:$0xff]
          %v4592 = vld [vmem:[#allocation2 + $0x38] sm:$0xff]
          %v4593 = vld [vmem:[#allocation2 + $0x40] sm:$0xff]
          %v4594 = vld [vmem:[#allocation2 + $0x48] sm:$0xff]
          %v4595 = vld [vmem:[#allocation2 + $0x50] sm:$0xff]
          %v4596 = vld [vmem:[#allocation2 + $0x58] sm:$0xff]
          %v4597 = vld [vmem:[#allocation2 + $0x60] sm:$0xff]
          %v4598 = vld [vmem:[#allocation2 + $0x68] sm:$0xff]
          %v4599 = vld [vmem:[#allocation2 + $0x70] sm:$0xff]
          %v4600 = vld [vmem:[#allocation2 + $0x78] sm:$0xff]
          %v4601 = vld [vmem:[#allocation9] sm:$0xff]
          %v4603 = vperm.slane %v4601, 0
          %v4604 = vperm.slane %v4601, 1
          %v4605 = vperm.slane %v4601, 2
          %v4606 = vperm.slane %v4601, 3
          %v4607 = vperm.slane %v4601, 4
          %v4608 = vperm.slane %v4601, 5
          %v4609 = vperm.slane %v4601, 6
          %v4610 = vperm.slane %v4601, 7
          %v4619 = vadd.f32 %v4585, %v4603
          %v4620 = vadd.f32 %v4586, %v4604
          %v4621 = vadd.f32 %v4587, %v4605
          %v4622 = vadd.f32 %v4588, %v4606
          %v4623 = vadd.f32 %v4589, %v4607
          %v4624 = vadd.f32 %v4590, %v4608
          %v4625 = vadd.f32 %v4591, %v4609
          %v4626 = vadd.f32 %v4592, %v4610
          %v4627 = vadd.f32 %v4593, %v4603
          %v4628 = vadd.f32 %v4594, %v4604
          %v4629 = vadd.f32 %v4595, %v4605
          %v4630 = vadd.f32 %v4596, %v4606
          %v4631 = vadd.f32 %v4597, %v4607
          %v4632 = vadd.f32 %v4598, %v4608
          %v4633 = vadd.f32 %v4599, %v4609
          %v4634 = vadd.f32 %v4600, %v4610
          %v4635 = vmax.f32 %v4619, 0.0
          %v4636 = vmax.f32 %v4620, 0.0
          %v4637 = vmax.f32 %v4621, 0.0
          %v4638 = vmax.f32 %v4622, 0.0
          %v4639 = vmax.f32 %v4623, 0.0
          %v4640 = vmax.f32 %v4624, 0.0
          %v4641 = vmax.f32 %v4625, 0.0
          %v4642 = vmax.f32 %v4626, 0.0
          %v4643 = vmax.f32 %v4627, 0.0
          %v4644 = vmax.f32 %v4628, 0.0
          %v4645 = vmax.f32 %v4629, 0.0
          %v4646 = vmax.f32 %v4630, 0.0
          %v4647 = vmax.f32 %v4631, 0.0
          %v4648 = vmax.f32 %v4632, 0.0
          %v4649 = vmax.f32 %v4633, 0.0
          %v4650 = vmax.f32 %v4634, 0.0
          %v4651 = vpack.c.bf16 %v4643, %v4635
          %v4652 = vpack.c.bf16 %v4644, %v4636
          %v4653 = vpack.c.bf16 %v4645, %v4637
          %v4654 = vpack.c.bf16 %v4646, %v4638
          %v4655 = vpack.c.bf16 %v4647, %v4639
          %v4656 = vpack.c.bf16 %v4648, %v4640
          %v4657 = vpack.c.bf16 %v4649, %v4641
          %v4658 = vpack.c.bf16 %v4650, %v4642
          %v4659 = vld [vmem:[#allocation11] sm:$0xf]
          %v4660 = vld [vmem:[#allocation11 + $0x4] sm:$0xf]
          %v4661 = vld [vmem:[#allocation11 + $0x8] sm:$0xf]
          %v4662 = vld [vmem:[#allocation11 + $0xc] sm:$0xf]
          %v4663 = vld [vmem:[#allocation11 + $0x10] sm:$0xf]
          %v4664 = vld [vmem:[#allocation11 + $0x14] sm:$0xf]
          %v4665 = vld [vmem:[#allocation11 + $0x18] sm:$0xf]
          %v4666 = vld [vmem:[#allocation11 + $0x1c] sm:$0xf]
          %v4667 = vld [vmem:[#allocation11 + $0x20] sm:$0xf]
          %v4668 = vld [vmem:[#allocation11 + $0x24] sm:$0xf]
          %v4669 = vld [vmem:[#allocation11 + $0x28] sm:$0xf]
          %v4670 = vld [vmem:[#allocation11 + $0x2c] sm:$0xf]
          %v4671 = vld [vmem:[#allocation11 + $0x30] sm:$0xf]
          %v4672 = vld [vmem:[#allocation11 + $0x34] sm:$0xf]
          %v4673 = vld [vmem:[#allocation11 + $0x38] sm:$0xf]
          %v4674 = vld [vmem:[#allocation11 + $0x3c] sm:$0xf]
          %v4675 = vld [vmem:[#allocation11 + $0x40] sm:$0xf]
          %v4676 = vld [vmem:[#allocation11 + $0x44] sm:$0xf]
          %v4677 = vld [vmem:[#allocation11 + $0x48] sm:$0xf]
          %v4678 = vld [vmem:[#allocation11 + $0x4c] sm:$0xf]
          %v4679 = vld [vmem:[#allocation11 + $0x50] sm:$0xf]
          %v4680 = vld [vmem:[#allocation11 + $0x54] sm:$0xf]
          %v4681 = vld [vmem:[#allocation11 + $0x58] sm:$0xf]
          %v4682 = vld [vmem:[#allocation11 + $0x5c] sm:$0xf]
          %v4683 = vld [vmem:[#allocation11 + $0x60] sm:$0xf]
          %v4684 = vld [vmem:[#allocation11 + $0x64] sm:$0xf]
          %v4685 = vld [vmem:[#allocation11 + $0x68] sm:$0xf]
          %v4686 = vld [vmem:[#allocation11 + $0x6c] sm:$0xf]
          %v4687 = vld [vmem:[#allocation11 + $0x70] sm:$0xf]
          %v4688 = vld [vmem:[#allocation11 + $0x74] sm:$0xf]
          %v4689 = vld [vmem:[#allocation11 + $0x78] sm:$0xf]
          %v4690 = vld [vmem:[#allocation11 + $0x7c] sm:$0xf]
          %v4691 = vld [vmem:[#allocation11 + $0x80] sm:$0xf]
          %v4692 = vld [vmem:[#allocation11 + $0x84] sm:$0xf]
          %v4693 = vld [vmem:[#allocation11 + $0x88] sm:$0xf]
          %v4694 = vld [vmem:[#allocation11 + $0x8c] sm:$0xf]
          %v4695 = vld [vmem:[#allocation11 + $0x90] sm:$0xf]
          %v4696 = vld [vmem:[#allocation11 + $0x94] sm:$0xf]
          %v4697 = vld [vmem:[#allocation11 + $0x98] sm:$0xf]
          %v4698 = vld [vmem:[#allocation11 + $0x9c] sm:$0xf]
          %v4699 = vld [vmem:[#allocation11 + $0xa0] sm:$0xf]
          %v4700 = vld [vmem:[#allocation11 + $0xa4] sm:$0xf]
          %v4701 = vld [vmem:[#allocation11 + $0xa8] sm:$0xf]
          %v4702 = vld [vmem:[#allocation11 + $0xac] sm:$0xf]
          %v4703 = vld [vmem:[#allocation11 + $0xb0] sm:$0xf]
          %v4704 = vld [vmem:[#allocation11 + $0xb4] sm:$0xf]
          %v4705 = vld [vmem:[#allocation11 + $0xb8] sm:$0xf]
          %v4706 = vld [vmem:[#allocation11 + $0xbc] sm:$0xf]
          %v4707 = vld [vmem:[#allocation11 + $0xc0] sm:$0xf]
          %v4708 = vld [vmem:[#allocation11 + $0xc4] sm:$0xf]
          %v4709 = vld [vmem:[#allocation11 + $0xc8] sm:$0xf]
          %v4710 = vld [vmem:[#allocation11 + $0xcc] sm:$0xf]
          %v4711 = vld [vmem:[#allocation11 + $0xd0] sm:$0xf]
          %v4712 = vld [vmem:[#allocation11 + $0xd4] sm:$0xf]
          %v4713 = vld [vmem:[#allocation11 + $0xd8] sm:$0xf]
          %v4714 = vld [vmem:[#allocation11 + $0xdc] sm:$0xf]
          %v4715 = vld [vmem:[#allocation11 + $0xe0] sm:$0xf]
          %v4716 = vld [vmem:[#allocation11 + $0xe4] sm:$0xf]
          %v4717 = vld [vmem:[#allocation11 + $0xe8] sm:$0xf]
          %v4718 = vld [vmem:[#allocation11 + $0xec] sm:$0xf]
          %v4719 = vld [vmem:[#allocation11 + $0xf0] sm:$0xf]
          %v4720 = vld [vmem:[#allocation11 + $0xf4] sm:$0xf]
          %v4721 = vld [vmem:[#allocation11 + $0xf8] sm:$0xf]
          %v4722 = vld [vmem:[#allocation11 + $0xfc] sm:$0xf]
          %v4723 = vld [vmem:[#allocation11 + $0x100] sm:$0xf]
          %v4724 = vld [vmem:[#allocation11 + $0x104] sm:$0xf]
          %v4725 = vld [vmem:[#allocation11 + $0x108] sm:$0xf]
          %v4726 = vld [vmem:[#allocation11 + $0x10c] sm:$0xf]
          %v4727 = vld [vmem:[#allocation11 + $0x110] sm:$0xf]
          %v4728 = vld [vmem:[#allocation11 + $0x114] sm:$0xf]
          %v4729 = vld [vmem:[#allocation11 + $0x118] sm:$0xf]
          %v4730 = vld [vmem:[#allocation11 + $0x11c] sm:$0xf]
          %v4731 = vld [vmem:[#allocation11 + $0x120] sm:$0xf]
          %v4732 = vld [vmem:[#allocation11 + $0x124] sm:$0xf]
          %v4733 = vld [vmem:[#allocation11 + $0x128] sm:$0xf]
          %v4734 = vld [vmem:[#allocation11 + $0x12c] sm:$0xf]
          %v4735 = vld [vmem:[#allocation11 + $0x130] sm:$0xf]
          %v4736 = vld [vmem:[#allocation11 + $0x134] sm:$0xf]
          %v4737 = vld [vmem:[#allocation11 + $0x138] sm:$0xf]
          %v4738 = vld [vmem:[#allocation11 + $0x13c] sm:$0xf]
          %v4739 = vld [vmem:[#allocation11 + $0x140] sm:$0xf]
          %v4740 = vld [vmem:[#allocation11 + $0x144] sm:$0xf]
          %v4741 = vld [vmem:[#allocation11 + $0x148] sm:$0xf]
          %v4742 = vld [vmem:[#allocation11 + $0x14c] sm:$0xf]
          %v4743 = vld [vmem:[#allocation11 + $0x150] sm:$0xf]
          %v4744 = vld [vmem:[#allocation11 + $0x154] sm:$0xf]
          %v4745 = vld [vmem:[#allocation11 + $0x158] sm:$0xf]
          %v4746 = vld [vmem:[#allocation11 + $0x15c] sm:$0xf]
          %v4747 = vld [vmem:[#allocation11 + $0x160] sm:$0xf]
          %v4748 = vld [vmem:[#allocation11 + $0x164] sm:$0xf]
          %v4749 = vld [vmem:[#allocation11 + $0x168] sm:$0xf]
          %v4750 = vld [vmem:[#allocation11 + $0x16c] sm:$0xf]
          %v4751 = vld [vmem:[#allocation11 + $0x170] sm:$0xf]
          %v4752 = vld [vmem:[#allocation11 + $0x174] sm:$0xf]
          %v4753 = vld [vmem:[#allocation11 + $0x178] sm:$0xf]
          %v4754 = vld [vmem:[#allocation11 + $0x17c] sm:$0xf]
          %v4755 = vld [vmem:[#allocation11 + $0x180] sm:$0xf]
          %v4756 = vld [vmem:[#allocation11 + $0x184] sm:$0xf]
          %v4757 = vld [vmem:[#allocation11 + $0x188] sm:$0xf]
          %v4758 = vld [vmem:[#allocation11 + $0x18c] sm:$0xf]
          %v4759 = vld [vmem:[#allocation11 + $0x190] sm:$0xf]
          %v4760 = vld [vmem:[#allocation11 + $0x194] sm:$0xf]
          %v4761 = vld [vmem:[#allocation11 + $0x198] sm:$0xf]
          %v4762 = vld [vmem:[#allocation11 + $0x19c] sm:$0xf]
          %v4763 = vld [vmem:[#allocation11 + $0x1a0] sm:$0xf]
          %v4764 = vld [vmem:[#allocation11 + $0x1a4] sm:$0xf]
          %v4765 = vld [vmem:[#allocation11 + $0x1a8] sm:$0xf]
          %v4766 = vld [vmem:[#allocation11 + $0x1ac] sm:$0xf]
          %v4767 = vld [vmem:[#allocation11 + $0x1b0] sm:$0xf]
          %v4768 = vld [vmem:[#allocation11 + $0x1b4] sm:$0xf]
          %v4769 = vld [vmem:[#allocation11 + $0x1b8] sm:$0xf]
          %v4770 = vld [vmem:[#allocation11 + $0x1bc] sm:$0xf]
          %v4771 = vld [vmem:[#allocation11 + $0x1c0] sm:$0xf]
          %v4772 = vld [vmem:[#allocation11 + $0x1c4] sm:$0xf]
          %v4773 = vld [vmem:[#allocation11 + $0x1c8] sm:$0xf]
          %v4774 = vld [vmem:[#allocation11 + $0x1cc] sm:$0xf]
          %v4775 = vld [vmem:[#allocation11 + $0x1d0] sm:$0xf]
          %v4776 = vld [vmem:[#allocation11 + $0x1d4] sm:$0xf]
          %v4777 = vld [vmem:[#allocation11 + $0x1d8] sm:$0xf]
          %v4778 = vld [vmem:[#allocation11 + $0x1dc] sm:$0xf]
          %v4779 = vld [vmem:[#allocation11 + $0x1e0] sm:$0xf]
          %v4780 = vld [vmem:[#allocation11 + $0x1e4] sm:$0xf]
          %v4781 = vld [vmem:[#allocation11 + $0x1e8] sm:$0xf]
          %v4782 = vld [vmem:[#allocation11 + $0x1ec] sm:$0xf]
          %v4783 = vld [vmem:[#allocation11 + $0x1f0] sm:$0xf]
          %v4784 = vld [vmem:[#allocation11 + $0x1f4] sm:$0xf]
          %v4785 = vld [vmem:[#allocation11 + $0x1f8] sm:$0xf]
          %v4786 = vld [vmem:[#allocation11 + $0x1fc] sm:$0xf]
          %v4787 = vld [vmem:[#allocation12] sm:$0x1]
          %v4789 = vperm.slane %v4787, 0
          %v4919 = vunpack.c.l.b16 %v4659
          %v4920 = vunpack.c.l.b16 %v4660
          %v4921 = vunpack.c.l.b16 %v4661
          %v4922 = vunpack.c.l.b16 %v4662
          %v4923 = vunpack.c.l.b16 %v4663
          %v4924 = vunpack.c.l.b16 %v4664
          %v4925 = vunpack.c.l.b16 %v4665
          %v4926 = vunpack.c.l.b16 %v4666
          %v4927 = vunpack.c.l.b16 %v4667
          %v4928 = vunpack.c.l.b16 %v4668
          %v4929 = vunpack.c.l.b16 %v4669
          %v4930 = vunpack.c.l.b16 %v4670
          %v4931 = vunpack.c.l.b16 %v4671
          %v4932 = vunpack.c.l.b16 %v4672
          %v4933 = vunpack.c.l.b16 %v4673
          %v4934 = vunpack.c.l.b16 %v4674
          %v4935 = vunpack.c.l.b16 %v4675
          %v4936 = vunpack.c.l.b16 %v4676
          %v4937 = vunpack.c.l.b16 %v4677
          %v4938 = vunpack.c.l.b16 %v4678
          %v4939 = vunpack.c.l.b16 %v4679
          %v4940 = vunpack.c.l.b16 %v4680
          %v4941 = vunpack.c.l.b16 %v4681
          %v4942 = vunpack.c.l.b16 %v4682
          %v4943 = vunpack.c.l.b16 %v4683
          %v4944 = vunpack.c.l.b16 %v4684
          %v4945 = vunpack.c.l.b16 %v4685
          %v4946 = vunpack.c.l.b16 %v4686
          %v4947 = vunpack.c.l.b16 %v4687
          %v4948 = vunpack.c.l.b16 %v4688
          %v4949 = vunpack.c.l.b16 %v4689
          %v4950 = vunpack.c.l.b16 %v4690
          %v4951 = vunpack.c.l.b16 %v4691
          %v4952 = vunpack.c.l.b16 %v4692
          %v4953 = vunpack.c.l.b16 %v4693
          %v4954 = vunpack.c.l.b16 %v4694
          %v4955 = vunpack.c.l.b16 %v4695
          %v4956 = vunpack.c.l.b16 %v4696
          %v4957 = vunpack.c.l.b16 %v4697
          %v4958 = vunpack.c.l.b16 %v4698
          %v4959 = vunpack.c.l.b16 %v4699
          %v4960 = vunpack.c.l.b16 %v4700
          %v4961 = vunpack.c.l.b16 %v4701
          %v4962 = vunpack.c.l.b16 %v4702
          %v4963 = vunpack.c.l.b16 %v4703
          %v4964 = vunpack.c.l.b16 %v4704
          %v4965 = vunpack.c.l.b16 %v4705
          %v4966 = vunpack.c.l.b16 %v4706
          %v4967 = vunpack.c.l.b16 %v4707
          %v4968 = vunpack.c.l.b16 %v4708
          %v4969 = vunpack.c.l.b16 %v4709
          %v4970 = vunpack.c.l.b16 %v4710
          %v4971 = vunpack.c.l.b16 %v4711
          %v4972 = vunpack.c.l.b16 %v4712
          %v4973 = vunpack.c.l.b16 %v4713
          %v4974 = vunpack.c.l.b16 %v4714
          %v4975 = vunpack.c.l.b16 %v4715
          %v4976 = vunpack.c.l.b16 %v4716
          %v4977 = vunpack.c.l.b16 %v4717
          %v4978 = vunpack.c.l.b16 %v4718
          %v4979 = vunpack.c.l.b16 %v4719
          %v4980 = vunpack.c.l.b16 %v4720
          %v4981 = vunpack.c.l.b16 %v4721
          %v4982 = vunpack.c.l.b16 %v4722
          %v4983 = vunpack.c.l.b16 %v4723
          %v4984 = vunpack.c.l.b16 %v4724
          %v4985 = vunpack.c.l.b16 %v4725
          %v4986 = vunpack.c.l.b16 %v4726
          %v4987 = vunpack.c.l.b16 %v4727
          %v4988 = vunpack.c.l.b16 %v4728
          %v4989 = vunpack.c.l.b16 %v4729
          %v4990 = vunpack.c.l.b16 %v4730
          %v4991 = vunpack.c.l.b16 %v4731
          %v4992 = vunpack.c.l.b16 %v4732
          %v4993 = vunpack.c.l.b16 %v4733
          %v4994 = vunpack.c.l.b16 %v4734
          %v4995 = vunpack.c.l.b16 %v4735
          %v4996 = vunpack.c.l.b16 %v4736
          %v4997 = vunpack.c.l.b16 %v4737
          %v4998 = vunpack.c.l.b16 %v4738
          %v4999 = vunpack.c.l.b16 %v4739
          %v5000 = vunpack.c.l.b16 %v4740
          %v5001 = vunpack.c.l.b16 %v4741
          %v5002 = vunpack.c.l.b16 %v4742
          %v5003 = vunpack.c.l.b16 %v4743
          %v5004 = vunpack.c.l.b16 %v4744
          %v5005 = vunpack.c.l.b16 %v4745
          %v5006 = vunpack.c.l.b16 %v4746
          %v5007 = vunpack.c.l.b16 %v4747
          %v5008 = vunpack.c.l.b16 %v4748
          %v5009 = vunpack.c.l.b16 %v4749
          %v5010 = vunpack.c.l.b16 %v4750
          %v5011 = vunpack.c.l.b16 %v4751
          %v5012 = vunpack.c.l.b16 %v4752
          %v5013 = vunpack.c.l.b16 %v4753
          %v5014 = vunpack.c.l.b16 %v4754
          %v5015 = vunpack.c.l.b16 %v4755
          %v5016 = vunpack.c.l.b16 %v4756
          %v5017 = vunpack.c.l.b16 %v4757
          %v5018 = vunpack.c.l.b16 %v4758
          %v5019 = vunpack.c.l.b16 %v4759
          %v5020 = vunpack.c.l.b16 %v4760
          %v5021 = vunpack.c.l.b16 %v4761
          %v5022 = vunpack.c.l.b16 %v4762
          %v5023 = vunpack.c.l.b16 %v4763
          %v5024 = vunpack.c.l.b16 %v4764
          %v5025 = vunpack.c.l.b16 %v4765
          %v5026 = vunpack.c.l.b16 %v4766
          %v5027 = vunpack.c.l.b16 %v4767
          %v5028 = vunpack.c.l.b16 %v4768
          %v5029 = vunpack.c.l.b16 %v4769
          %v5030 = vunpack.c.l.b16 %v4770
          %v5031 = vunpack.c.l.b16 %v4771
          %v5032 = vunpack.c.l.b16 %v4772
          %v5033 = vunpack.c.l.b16 %v4773
          %v5034 = vunpack.c.l.b16 %v4774
          %v5035 = vunpack.c.l.b16 %v4775
          %v5036 = vunpack.c.l.b16 %v4776
          %v5037 = vunpack.c.l.b16 %v4777
          %v5038 = vunpack.c.l.b16 %v4778
          %v5039 = vunpack.c.l.b16 %v4779
          %v5040 = vunpack.c.l.b16 %v4780
          %v5041 = vunpack.c.l.b16 %v4781
          %v5042 = vunpack.c.l.b16 %v4782
          %v5043 = vunpack.c.l.b16 %v4783
          %v5044 = vunpack.c.l.b16 %v4784
          %v5045 = vunpack.c.l.b16 %v4785
          %v5046 = vunpack.c.l.b16 %v4786
          %v5047 = vpack.c.b16 %v4920, %v4919
          %v5048 = vpack.c.b16 %v4922, %v4921
          %v5049 = vpack.c.b16 %v4924, %v4923
          %v5050 = vpack.c.b16 %v4926, %v4925
          %v5051 = vpack.c.b16 %v4928, %v4927
          %v5052 = vpack.c.b16 %v4930, %v4929
          %v5053 = vpack.c.b16 %v4932, %v4931
          %v5054 = vpack.c.b16 %v4934, %v4933
          %v5055 = vpack.c.b16 %v4936, %v4935
          %v5056 = vpack.c.b16 %v4938, %v4937
          %v5057 = vpack.c.b16 %v4940, %v4939
          %v5058 = vpack.c.b16 %v4942, %v4941
          %v5059 = vpack.c.b16 %v4944, %v4943
          %v5060 = vpack.c.b16 %v4946, %v4945
          %v5061 = vpack.c.b16 %v4948, %v4947
          %v5062 = vpack.c.b16 %v4950, %v4949
          %v5063 = vpack.c.b16 %v4952, %v4951
          %v5064 = vpack.c.b16 %v4954, %v4953
          %v5065 = vpack.c.b16 %v4956, %v4955
          %v5066 = vpack.c.b16 %v4958, %v4957
          %v5067 = vpack.c.b16 %v4960, %v4959
          %v5068 = vpack.c.b16 %v4962, %v4961
          %v5069 = vpack.c.b16 %v4964, %v4963
          %v5070 = vpack.c.b16 %v4966, %v4965
          %v5071 = vpack.c.b16 %v4968, %v4967
          %v5072 = vpack.c.b16 %v4970, %v4969
          %v5073 = vpack.c.b16 %v4972, %v4971
          %v5074 = vpack.c.b16 %v4974, %v4973
          %v5075 = vpack.c.b16 %v4976, %v4975
          %v5076 = vpack.c.b16 %v4978, %v4977
          %v5077 = vpack.c.b16 %v4980, %v4979
          %v5078 = vpack.c.b16 %v4982, %v4981
          %v5079 = vpack.c.b16 %v4984, %v4983
          %v5080 = vpack.c.b16 %v4986, %v4985
          %v5081 = vpack.c.b16 %v4988, %v4987
          %v5082 = vpack.c.b16 %v4990, %v4989
          %v5083 = vpack.c.b16 %v4992, %v4991
          %v5084 = vpack.c.b16 %v4994, %v4993
          %v5085 = vpack.c.b16 %v4996, %v4995
          %v5086 = vpack.c.b16 %v4998, %v4997
          %v5087 = vpack.c.b16 %v5000, %v4999
          %v5088 = vpack.c.b16 %v5002, %v5001
          %v5089 = vpack.c.b16 %v5004, %v5003
          %v5090 = vpack.c.b16 %v5006, %v5005
          %v5091 = vpack.c.b16 %v5008, %v5007
          %v5092 = vpack.c.b16 %v5010, %v5009
          %v5093 = vpack.c.b16 %v5012, %v5011
          %v5094 = vpack.c.b16 %v5014, %v5013
          %v5095 = vpack.c.b16 %v5016, %v5015
          %v5096 = vpack.c.b16 %v5018, %v5017
          %v5097 = vpack.c.b16 %v5020, %v5019
          %v5098 = vpack.c.b16 %v5022, %v5021
          %v5099 = vpack.c.b16 %v5024, %v5023
          %v5100 = vpack.c.b16 %v5026, %v5025
          %v5101 = vpack.c.b16 %v5028, %v5027
          %v5102 = vpack.c.b16 %v5030, %v5029
          %v5103 = vpack.c.b16 %v5032, %v5031
          %v5104 = vpack.c.b16 %v5034, %v5033
          %v5105 = vpack.c.b16 %v5036, %v5035
          %v5106 = vpack.c.b16 %v5038, %v5037
          %v5107 = vpack.c.b16 %v5040, %v5039
          %v5108 = vpack.c.b16 %v5042, %v5041
          %v5109 = vpack.c.b16 %v5044, %v5043
          %v5110 = vpack.c.b16 %v5046, %v5045
          %5175 = vmatpush.bf16.msra.mxu0 %v5054
          %5176 = vmatpush.bf16.msra.mxu0 %v5053
          %5177 = vmatpush.bf16.msra.mxu0 %v5052
          %5178 = vmatpush.bf16.msra.mxu0 %v5051
          %5179 = vmatpush.bf16.msra.mxu0 %v5050
          %5180 = vmatpush.bf16.msra.mxu0 %v5049
          %5181 = vmatpush.bf16.msra.mxu0 %v5048
          %5182 = vmatpush.bf16.msra.mxu0 %v5047
          %5183 = vmatmul.bf16.gmra.mxu0 %v4651
          %v5184 = vpop.f32.mrf.mxu0
          %v5185 = vadd.f32 %v4789, %v5184
          %v5186 = vpop.f32.mrf.mxu0
          %v5187 = vadd.f32 %v4789, %v5186
          %5188 = vdwg.mxu0
          %5189 = vmatpush.bf16.msra.mxu0 %v5062
          %5190 = vmatpush.bf16.msra.mxu0 %v5061
          %5191 = vmatpush.bf16.msra.mxu0 %v5060
          %5192 = vmatpush.bf16.msra.mxu0 %v5059
          %5193 = vmatpush.bf16.msra.mxu0 %v5058
          %5194 = vmatpush.bf16.msra.mxu0 %v5057
          %5195 = vmatpush.bf16.msra.mxu0 %v5056
          %5196 = vmatpush.bf16.msra.mxu0 %v5055
          %5197 = vmatmul.bf16.gmra.mxu0 %v4652
          %v5198 = vpop.f32.mrf.mxu0
          %v5199 = vadd.f32 %v5185, %v5198
          %v5200 = vpop.f32.mrf.mxu0
          %v5201 = vadd.f32 %v5187, %v5200
          %5202 = vdwg.mxu0
          %5203 = vmatpush.bf16.msra.mxu0 %v5070
          %5204 = vmatpush.bf16.msra.mxu0 %v5069
          %5205 = vmatpush.bf16.msra.mxu0 %v5068
          %5206 = vmatpush.bf16.msra.mxu0 %v5067
          %5207 = vmatpush.bf16.msra.mxu0 %v5066
          %5208 = vmatpush.bf16.msra.mxu0 %v5065
          %5209 = vmatpush.bf16.msra.mxu0 %v5064
          %5210 = vmatpush.bf16.msra.mxu0 %v5063
          %5211 = vmatmul.bf16.gmra.mxu0 %v4653
          %v5212 = vpop.f32.mrf.mxu0
          %v5213 = vadd.f32 %v5199, %v5212
          %v5214 = vpop.f32.mrf.mxu0
          %v5215 = vadd.f32 %v5201, %v5214
          %5216 = vdwg.mxu0
          %5217 = vmatpush.bf16.msra.mxu0 %v5078
          %5218 = vmatpush.bf16.msra.mxu0 %v5077
          %5219 = vmatpush.bf16.msra.mxu0 %v5076
          %5220 = vmatpush.bf16.msra.mxu0 %v5075
          %5221 = vmatpush.bf16.msra.mxu0 %v5074
          %5222 = vmatpush.bf16.msra.mxu0 %v5073
          %5223 = vmatpush.bf16.msra.mxu0 %v5072
          %5224 = vmatpush.bf16.msra.mxu0 %v5071
          %5225 = vmatmul.bf16.gmra.mxu0 %v4654
          %v5226 = vpop.f32.mrf.mxu0
          %v5227 = vadd.f32 %v5213, %v5226
          %v5228 = vpop.f32.mrf.mxu0
          %v5229 = vadd.f32 %v5215, %v5228
          %5230 = vdwg.mxu0
          %5231 = vmatpush.bf16.msra.mxu0 %v5086
          %5232 = vmatpush.bf16.msra.mxu0 %v5085
          %5233 = vmatpush.bf16.msra.mxu0 %v5084
          %5234 = vmatpush.bf16.msra.mxu0 %v5083
          %5235 = vmatpush.bf16.msra.mxu0 %v5082
          %5236 = vmatpush.bf16.msra.mxu0 %v5081
          %5237 = vmatpush.bf16.msra.mxu0 %v5080
          %5238 = vmatpush.bf16.msra.mxu0 %v5079
          %5239 = vmatmul.bf16.gmra.mxu0 %v4655
          %v5240 = vpop.f32.mrf.mxu0
          %v5241 = vadd.f32 %v5227, %v5240
          %v5242 = vpop.f32.mrf.mxu0
          %v5243 = vadd.f32 %v5229, %v5242
          %5244 = vdwg.mxu0
          %5245 = vmatpush.bf16.msra.mxu0 %v5094
          %5246 = vmatpush.bf16.msra.mxu0 %v5093
          %5247 = vmatpush.bf16.msra.mxu0 %v5092
          %5248 = vmatpush.bf16.msra.mxu0 %v5091
          %5249 = vmatpush.bf16.msra.mxu0 %v5090
          %5250 = vmatpush.bf16.msra.mxu0 %v5089
          %5251 = vmatpush.bf16.msra.mxu0 %v5088
          %5252 = vmatpush.bf16.msra.mxu0 %v5087
          %5253 = vmatmul.bf16.gmra.mxu0 %v4656
          %v5254 = vpop.f32.mrf.mxu0
          %v5255 = vadd.f32 %v5241, %v5254
          %v5256 = vpop.f32.mrf.mxu0
          %v5257 = vadd.f32 %v5243, %v5256
          %5258 = vdwg.mxu0
          %5259 = vmatpush.bf16.msra.mxu0 %v5102
          %5260 = vmatpush.bf16.msra.mxu0 %v5101
          %5261 = vmatpush.bf16.msra.mxu0 %v5100
          %5262 = vmatpush.bf16.msra.mxu0 %v5099
          %5263 = vmatpush.bf16.msra.mxu0 %v5098
          %5264 = vmatpush.bf16.msra.mxu0 %v5097
          %5265 = vmatpush.bf16.msra.mxu0 %v5096
          %5266 = vmatpush.bf16.msra.mxu0 %v5095
          %5267 = vmatmul.bf16.gmra.mxu0 %v4657
          %v5268 = vpop.f32.mrf.mxu0
          %v5269 = vadd.f32 %v5255, %v5268
          %v5270 = vpop.f32.mrf.mxu0
          %v5271 = vadd.f32 %v5257, %v5270
          %5272 = vdwg.mxu0
          %5273 = vmatpush.bf16.msra.mxu0 %v5110
          %5274 = vmatpush.bf16.msra.mxu0 %v5109
          %5275 = vmatpush.bf16.msra.mxu0 %v5108
          %5276 = vmatpush.bf16.msra.mxu0 %v5107
          %5277 = vmatpush.bf16.msra.mxu0 %v5106
          %5278 = vmatpush.bf16.msra.mxu0 %v5105
          %5279 = vmatpush.bf16.msra.mxu0 %v5104
          %5280 = vmatpush.bf16.msra.mxu0 %v5103
          %5281 = vmatmul.bf16.gmra.mxu0 %v4658
          %v5282 = vpop.f32.mrf.mxu0
          %v5283 = vadd.f32 %v5269, %v5282
          %v5284 = vpop.f32.mrf.mxu0
          %v5285 = vadd.f32 %v5271, %v5284
          %5286 = vdwg.mxu0
          %5287 = vst [vmem:[#allocation14] sm:$0xff] %v5283
          %5288 = vst [vmem:[#allocation14 + $0x8] sm:$0xff] %v5285
        $region84: #{tpu_custom_call.1} parent=43 // pred_fallthru
          _
        // Predicated region
        $region85: #{tpu_custom_call.1} parent=43 // pred_check
          %p5289 = pneg %p211
        $region86: #{tpu_custom_call.1} parent=43 // pred_check_branch
          %5291 = sbr.rel (%p5289) target = $region88
        $region87: #{tpu_custom_call.1} parent=43 // pred_region
          %s5292 = smul.u32 2, %s30
          %5294 = vsyncadd [#allocation5], 0
          %s5295 = smul.addr %s5292, 8
          %s5296 = scalar_lea.hbm %s6, %s5295
          %s5297 = sshll.u32 [#allocation14], 4
          %s5298 = int_to_ptr.vmem [resolvable:$true] %s5297
          %s5299 = sshll.u32 %s5296, 4
          %s5300 = int_to_ptr.hbm [resolvable:$true] %s5299
          %5305 = dma.vmem_to_hbm [thread:$0]  %s5298, 256, %s5300, [#allocation5], 128, 128, 8
        $region88: #{tpu_custom_call.1} parent=43 // pred_fallthru
          _
        // Predicated region
        $region89: #{tpu_custom_call.1} parent=43 // pred_check
          %p5306 = pneg %p211
        $region90: #{tpu_custom_call.1} parent=43 // pred_check_branch
          %5308 = sbr.rel (%p5306) target = $region92
        $region91: #{tpu_custom_call.1} parent=43 // pred_region
          %5310 = dma.done [#allocation5], 256
        $region92: #{tpu_custom_call.1} parent=43 // pred_fallthru
          _
      $region44: #{tpu_custom_call.1} parent=5 // pred_fallthru
        _
      %p5311 = scmp.le.s32.totalorder 2, %s21
      // Predicated region
      $region93: #{tpu_custom_call.1} parent=5 // pred_check
        %p5312 = pneg %p5311
      $region94: #{tpu_custom_call.1} parent=5 // pred_check_branch
        %5314 = sbr.rel (%p5312) target = $region96
      $region95: #{tpu_custom_call.1} parent=5 // pred_region
        %s5315 = ssub.s32 %s21, 2
      $region96: #{tpu_custom_call.1} parent=5 // pred_fallthru
        _
    $region6: #{tpu_custom_call.1} parent=1 // loop_footer
      %s25 = sadd.s32 1, %s21
    $region7: #{tpu_custom_call.1} parent=1 // loop_footer_branch
      %20 = sbr.rel target = $region3
    $region8: #{tpu_custom_call.1} parent=1 // loop_exit
      _
    %5316 = vsyncpa [#allocation4], 1
    %s5317 = scalar_lea.sflag [#allocation4], 1
    %5318 = vsyncpa %s5317, 1
    %5319 = vsyncpa [#allocation7], 1
    %s5320 = scalar_lea.sflag [#allocation7], 1
    %5321 = vsyncpa %s5320, 1
    %5322 = vsyncpa [#allocation10], 1
    %5323 = vsyncpa [#allocation13], 1
    %5324 = vsyncpa [#allocation5], 1
    %s5325 = scalar_lea.sflag [#allocation5], 1
    %5326 = vsyncpa %s5325, 1

</llo_original>
